<compile_context>
chip_gen: v6e
topology: v6e:2x2x1
jax: 0.10.0
libtpu: 0.0.40
codegen_flags: <defaults>
</compile_context>

<pallas_src>
import jax
import jax.numpy as jnp
from jax import lax
from jax.experimental import pallas as pl
from jax.experimental.pallas import tpu as pltpu


# ------------------------------ Problem sizes ------------------------------ #
C_IN, C1, C2 = 3, 12, 6        # channels: input, conv1 out, conv2 out
K1, S1 = 3, 2                  # conv1 kernel / stride
K2, S2 = 2, 2                  # conv2 kernel / stride
H_IN = W_IN = 81               # forced by fc1 = 6*20*20
H2O = W2O = 20                 # conv2 output spatial size
M2 = H2O * W2O                 # 400 : spatial length of conv2 output
KP = C_IN * K1 * K1            # 27  : conv1 patch length


# ------------------------------ Pallas kernel ------------------------------ #

def _qnet_kernel(p_ref, w1_ref, b1_ref, w2_ref, b2_ref, wfc_ref, bfc_ref, o_ref):
    """Fused QNetwork forward for one batch element.

    p_ref  : (1, 4, 27, 400) conv1 patch matrices, one per conv2 tap (a, b)
             p[ab, ci*9+kh*3+kw, h2*20+w2] = x[ci, 4*h2 + 2a + kh, 4*w2 + 2b + kw]
    w1_ref : (12, 27)   conv1 weight as a matrix (ci, kh, kw)-major columns
    b1_ref : (12, 1)
    w2_ref : (4, 6, 12) conv2 weight, tap-major: w2[2a+b] = W2[:, :, a, b]
    b2_ref : (6, 1)
    wfc_ref: (6, 400, A) fc1 weight permuted so it consumes y2 as (6, 400)
    bfc_ref: (1, A)
    o_ref  : (1, 1, A)
    """
    w1 = w1_ref[...]                       # (12, 27)
    b1 = b1_ref[...]                       # (12, 1)
    w2 = w2_ref[...]                       # (4, 6, 12)
    b2 = b2_ref[...]                       # (6, 1)

    patches = p_ref[0]                     # (4, 27, 400) value, VMEM resident

    # conv1 (+ReLU) and conv2 accumulation, one conv2 tap (a, b) at a time.
    # Everything is (channels, spatial) -> the long 400 axis is lane-dense.
    y2 = b2                                # broadcasts to (6, 400) on first add
    for ab in range(K2 * K2):
        y1 = jnp.dot(w1, patches[ab], preferred_element_type=jnp.float32) + b1
        y1 = jnp.maximum(y1, 0.0)          # (12, 400)  = conv1+ReLU, tap (a,b)
        y2 = y2 + jnp.dot(w2[ab], y1, preferred_element_type=jnp.float32)
    y2 = jnp.maximum(y2, 0.0)              # (6, 400)  row-major == torch flatten

    # fc1: the NCHW flatten is folded into the weight layout, so just contract
    # each channel row of y2 with its (400, A) weight slab.
    out = bfc_ref[...]                     # (1, A)
    for c in range(C2):
        out = out + jnp.dot(y2[c:c + 1, :], wfc_ref[c],
                            preferred_element_type=jnp.float32)
    o_ref[0] = out


# ----------------------------- Host-side prep ------------------------------ #

def prepare_params(params):
    """One-time weight reorganisation (outside the hot path).

    - conv weights become small GEMM matrices,
    - fc1 weight columns are permuted once so the kernel's (6, 400) activation
      layout is consumed directly (kills the runtime NCHW flatten transpose
      and the fc1_w.T of the previous version).
    """
    a_sz = params["fc1_w"].shape[0]
    return {
        "w1": params["cv1_w"].reshape(C1, KP).astype(jnp.float32),
        "b1": params["cv1_b"].reshape(C1, 1).astype(jnp.float32),
        "w2": jnp.transpose(params["cv2_w"], (2, 3, 0, 1))
                 .reshape(K2 * K2, C2, C1).astype(jnp.float32),
        "b2": params["cv2_b"].reshape(C2, 1).astype(jnp.float32),
        "wfc": jnp.transpose(params["fc1_w"].reshape(a_sz, C2, M2),
                             (1, 2, 0)).astype(jnp.float32),
        "bfc": params["fc1_b"].reshape(1, a_sz).astype(jnp.float32),
    }


def _conv1_patches(x_nchw):
    """im2col for conv1, grouped by conv2 tap parity -> (N, 4, 27, 400).

    Grouping by (a, b) = (h1 % 2, w1 % 2) means conv2 (2x2, stride 2) needs no
    strided gathers in-kernel: tap (a, b) of conv2 is exactly slab `2a+b`.
    """
    # TODO(synk): the stride-2/-4 patch gather itself stays as XLA prep; there is
    # no clean lane-aligned way to express it inside the kernel without relayouts.
    nb = x_nchw.shape[0]
    phases = []
    for a in range(S2):
        for b in range(S2):
            taps = []
            for kh in range(K1):
                for kw in range(K1):
                    hs = S1 * a + kh
                    ws = S1 * b + kw
                    taps.append(x_nchw[:, :, hs:hs + 4 * H2O:4, ws:ws + 4 * W2O:4])
            t = jnp.stack(taps, axis=2)              # (N, 3, 9, 20, 20)
            phases.append(t.reshape(nb, KP, M2))     # (N, 27, 400)
    return jnp.stack(phases, axis=1)                 # (N, 4, 27, 400)


@jax.jit
def qnetwork_forward(x_nchw, prep):
    """Forward pass matching QNetwork.forward.  x_nchw: (N, 3, 81, 81) f32."""
    nb = x_nchw.shape[0]
    a_sz = prep["bfc"].shape[1]
    p_all = _conv1_patches(x_nchw.astype(jnp.float32))

    out = pl.pallas_call(
        _qnet_kernel,
        out_shape=jax.ShapeDtypeStruct((nb, 1, a_sz), jnp.float32),
        grid_spec=pltpu.PrefetchScalarGridSpec(
            num_scalar_prefetch=0,
            grid=(nb,),
            in_specs=[
                pl.BlockSpec((1, K2 * K2, KP, M2), lambda n: (n, 0, 0, 0)),
                pl.BlockSpec((C1, KP), lambda n: (0, 0)),
                pl.BlockSpec((C1, 1), lambda n: (0, 0)),
                pl.BlockSpec((K2 * K2, C2, C1), lambda n: (0, 0, 0)),
                pl.BlockSpec((C2, 1), lambda n: (0, 0)),
                pl.BlockSpec((C2, M2, a_sz), lambda n: (0, 0, 0)),
                pl.BlockSpec((1, a_sz), lambda n: (0, 0)),
            ],
            out_specs=pl.BlockSpec((1, 1, a_sz), lambda n: (n, 0, 0)),
        ),
        compiler_params=pltpu.CompilerParams(
            dimension_semantics=("parallel",),   # shard batch across TCs (v7x)
        ),
    )(p_all, prep["w1"], prep["b1"], prep["w2"], prep["b2"],
      prep["wfc"], prep["bfc"])
    return out.reshape(nb, a_sz)


# ------------------------- Pure-JAX reference check ------------------------ #

def qnetwork_reference(x_nchw, params):
    dn = ("NCHW", "OIHW", "NCHW")
    y = lax.conv_general_dilated(x_nchw, params["cv1_w"], (2, 2), "VALID",
                                 dimension_numbers=dn)
    y = jnp.maximum(y + params["cv1_b"][None, :, None, None], 0.0)
    y = lax.conv_general_dilated(y, params["cv2_w"], (2, 2), "VALID",
                                 dimension_numbers=dn)
    y = jnp.maximum(y + params["cv2_b"][None, :, None, None], 0.0)
    y = y.reshape(y.shape[0], -1)
    return y @ params["fc1_w"].T + params["fc1_b"]


# --------------------------------- Main ------------------------------------ #

if __name__ == "__main__":
    action_size = 4
    batch = 2

    key = jax.random.PRNGKey(0)
    ks = jax.random.split(key, 8)
    scale = 0.05
    params = {
        "cv1_w": scale * jax.random.normal(ks[0], (C1, C_IN, K1, K1), jnp.float32),
        "cv1_b": scale * jax.random.normal(ks[1], (C1,), jnp.float32),
        "cv2_w": scale * jax.random.normal(ks[2], (C2, C1, K2, K2), jnp.float32),
        "cv2_b": scale * jax.random.normal(ks[3], (C2,), jnp.float32),
        "fc1_w": scale * jax.random.normal(ks[4], (action_size, C2 * H2O * W2O),
                                           jnp.float32),
        "fc1_b": scale * jax.random.normal(ks[5], (action_size,), jnp.float32),
    }
    x = jax.random.normal(ks[6], (batch, C_IN, H_IN, W_IN), jnp.float32)

    prep = prepare_params(params)          # one-time weight reorganisation

    out = jax.block_until_ready(qnetwork_forward(x, prep))
    ref = jax.block_until_ready(qnetwork_reference(x, params))

    assert out.shape == (batch, action_size), out.shape
    if not jnp.allclose(out, ref, atol=1e-3, rtol=1e-3):
        raise AssertionError("Pallas QNetwork output mismatch vs reference")
    print("KERNEL_OK")
</pallas_src>

<mosaic_0001>
module attributes {stable_mosaic.version = 11 : i64} {
  func.func @_qnet_kernel(%arg0: i32, %arg1: memref<1x4x27x400xf32, #tpu.memory_space<vmem>>, %arg2: memref<12x27xf32, #tpu.memory_space<vmem>>, %arg3: memref<12x1xf32, #tpu.memory_space<vmem>>, %arg4: memref<4x6x12xf32, #tpu.memory_space<vmem>>, %arg5: memref<6x1xf32, #tpu.memory_space<vmem>>, %arg6: memref<6x400x4xf32, #tpu.memory_space<vmem>>, %arg7: memref<1x4xf32, #tpu.memory_space<vmem>>, %arg8: memref<1x1x4xf32, #tpu.memory_space<vmem>>) attributes {dimension_semantics = [#tpu.dimension_semantics<parallel>], iteration_bounds = array<i64: 2>, scalar_prefetch = 0 : i64, scratch_operands = 0 : i64, tpu.core_type = #tpu.core_type<tc>, window_params = [{transform_indices = @transform_0, window_bounds = array<i64: 1, 4, 27, 400>}, {pipeline_mode = #tpu.pipeline_mode<synchronous>, transform_indices = @transform_1, window_bounds = array<i64: 12, 27>}, {pipeline_mode = #tpu.pipeline_mode<synchronous>, transform_indices = @transform_2, window_bounds = array<i64: 12, 1>}, {pipeline_mode = #tpu.pipeline_mode<synchronous>, transform_indices = @transform_3, window_bounds = array<i64: 4, 6, 12>}, {pipeline_mode = #tpu.pipeline_mode<synchronous>, transform_indices = @transform_4, window_bounds = array<i64: 6, 1>}, {pipeline_mode = #tpu.pipeline_mode<synchronous>, transform_indices = @transform_5, window_bounds = array<i64: 6, 400, 4>}, {pipeline_mode = #tpu.pipeline_mode<synchronous>, transform_indices = @transform_6, window_bounds = array<i64: 1, 4>}, {transform_indices = @transform_7, window_bounds = array<i64: 1, 1, 4>}]} {
    %c0 = arith.constant 0 : index
    %c0_0 = arith.constant 0 : index
    %0 = vector.load %arg2[%c0, %c0_0] : memref<12x27xf32, #tpu.memory_space<vmem>>, vector<12x27xf32>
    %c0_1 = arith.constant 0 : index
    %c0_2 = arith.constant 0 : index
    %1 = vector.load %arg3[%c0_1, %c0_2] : memref<12x1xf32, #tpu.memory_space<vmem>>, vector<12x1xf32>
    %c0_3 = arith.constant 0 : index
    %c0_4 = arith.constant 0 : index
    %c0_5 = arith.constant 0 : index
    %2 = vector.load %arg4[%c0_3, %c0_4, %c0_5] : memref<4x6x12xf32, #tpu.memory_space<vmem>>, vector<4x6x12xf32>
    %c0_6 = arith.constant 0 : index
    %c0_7 = arith.constant 0 : index
    %3 = vector.load %arg5[%c0_6, %c0_7] : memref<6x1xf32, #tpu.memory_space<vmem>>, vector<6x1xf32>
    %c0_8 = arith.constant 0 : index
    %c0_9 = arith.constant 0 : index
    %c0_10 = arith.constant 0 : index
    %c0_11 = arith.constant 0 : index
    %4 = vector.load %arg1[%c0_8, %c0_9, %c0_10, %c0_11] : memref<1x4x27x400xf32, #tpu.memory_space<vmem>>, vector<1x4x27x400xf32>
    %5 = vector.shape_cast %4 : vector<1x4x27x400xf32> to vector<4x27x400xf32>
    %6 = vector.extract_strided_slice %5 {offsets = [0, 0, 0], sizes = [1, 27, 400], strides = [1, 1, 1]} : vector<4x27x400xf32> to vector<1x27x400xf32>
    %7 = vector.shape_cast %6 : vector<1x27x400xf32> to vector<27x400xf32>
    %cst = arith.constant dense<0.000000e+00> : vector<12x400xf32>
    %8 = tpu.matmul %0, %7, %cst {dimension_numbers = #tpu.dot_dimension_numbers<[1], [0], [0], [1], [0, 0, 1, 1], [], []>} : vector<12x27xf32>, vector<27x400xf32>, vector<12x400xf32> -> vector<12x400xf32>
    %9 = vector.broadcast %1 : vector<12x1xf32> to vector<12x400xf32>
    %10 = arith.addf %8, %9 : vector<12x400xf32>
    %cst_12 = arith.constant 0.000000e+00 : f32
    %11 = vector.broadcast %cst_12 : f32 to vector<12x400xf32>
    %12 = arith.maximumf %10, %11 : vector<12x400xf32>
    %13 = vector.extract_strided_slice %2 {offsets = [0, 0, 0], sizes = [1, 6, 12], strides = [1, 1, 1]} : vector<4x6x12xf32> to vector<1x6x12xf32>
    %14 = vector.shape_cast %13 : vector<1x6x12xf32> to vector<6x12xf32>
    %cst_13 = arith.constant dense<0.000000e+00> : vector<6x400xf32>
    %15 = tpu.matmul %14, %12, %cst_13 {dimension_numbers = #tpu.dot_dimension_numbers<[1], [0], [0], [1], [0, 0, 1, 1], [], []>} : vector<6x12xf32>, vector<12x400xf32>, vector<6x400xf32> -> vector<6x400xf32>
    %16 = vector.broadcast %3 : vector<6x1xf32> to vector<6x400xf32>
    %17 = arith.addf %16, %15 : vector<6x400xf32>
    %18 = vector.extract_strided_slice %5 {offsets = [1, 0, 0], sizes = [1, 27, 400], strides = [1, 1, 1]} : vector<4x27x400xf32> to vector<1x27x400xf32>
    %19 = vector.shape_cast %18 : vector<1x27x400xf32> to vector<27x400xf32>
    %cst_14 = arith.constant dense<0.000000e+00> : vector<12x400xf32>
    %20 = tpu.matmul %0, %19, %cst_14 {dimension_numbers = #tpu.dot_dimension_numbers<[1], [0], [0], [1], [0, 0, 1, 1], [], []>} : vector<12x27xf32>, vector<27x400xf32>, vector<12x400xf32> -> vector<12x400xf32>
    %21 = vector.broadcast %1 : vector<12x1xf32> to vector<12x400xf32>
    %22 = arith.addf %20, %21 : vector<12x400xf32>
    %cst_15 = arith.constant 0.000000e+00 : f32
    %23 = vector.broadcast %cst_15 : f32 to vector<12x400xf32>
    %24 = arith.maximumf %22, %23 : vector<12x400xf32>
    %25 = vector.extract_strided_slice %2 {offsets = [1, 0, 0], sizes = [1, 6, 12], strides = [1, 1, 1]} : vector<4x6x12xf32> to vector<1x6x12xf32>
    %26 = vector.shape_cast %25 : vector<1x6x12xf32> to vector<6x12xf32>
    %cst_16 = arith.constant dense<0.000000e+00> : vector<6x400xf32>
    %27 = tpu.matmul %26, %24, %cst_16 {dimension_numbers = #tpu.dot_dimension_numbers<[1], [0], [0], [1], [0, 0, 1, 1], [], []>} : vector<6x12xf32>, vector<12x400xf32>, vector<6x400xf32> -> vector<6x400xf32>
    %28 = arith.addf %17, %27 : vector<6x400xf32>
    %29 = vector.extract_strided_slice %5 {offsets = [2, 0, 0], sizes = [1, 27, 400], strides = [1, 1, 1]} : vector<4x27x400xf32> to vector<1x27x400xf32>
    %30 = vector.shape_cast %29 : vector<1x27x400xf32> to vector<27x400xf32>
    %cst_17 = arith.constant dense<0.000000e+00> : vector<12x400xf32>
    %31 = tpu.matmul %0, %30, %cst_17 {dimension_numbers = #tpu.dot_dimension_numbers<[1], [0], [0], [1], [0, 0, 1, 1], [], []>} : vector<12x27xf32>, vector<27x400xf32>, vector<12x400xf32> -> vector<12x400xf32>
    %32 = vector.broadcast %1 : vector<12x1xf32> to vector<12x400xf32>
    %33 = arith.addf %31, %32 : vector<12x400xf32>
    %cst_18 = arith.constant 0.000000e+00 : f32
    %34 = vector.broadcast %cst_18 : f32 to vector<12x400xf32>
    %35 = arith.maximumf %33, %34 : vector<12x400xf32>
    %36 = vector.extract_strided_slice %2 {offsets = [2, 0, 0], sizes = [1, 6, 12], strides = [1, 1, 1]} : vector<4x6x12xf32> to vector<1x6x12xf32>
    %37 = vector.shape_cast %36 : vector<1x6x12xf32> to vector<6x12xf32>
    %cst_19 = arith.constant dense<0.000000e+00> : vector<6x400xf32>
    %38 = tpu.matmul %37, %35, %cst_19 {dimension_numbers = #tpu.dot_dimension_numbers<[1], [0], [0], [1], [0, 0, 1, 1], [], []>} : vector<6x12xf32>, vector<12x400xf32>, vector<6x400xf32> -> vector<6x400xf32>
    %39 = arith.addf %28, %38 : vector<6x400xf32>
    %40 = vector.extract_strided_slice %5 {offsets = [3, 0, 0], sizes = [1, 27, 400], strides = [1, 1, 1]} : vector<4x27x400xf32> to vector<1x27x400xf32>
    %41 = vector.shape_cast %40 : vector<1x27x400xf32> to vector<27x400xf32>
    %cst_20 = arith.constant dense<0.000000e+00> : vector<12x400xf32>
    %42 = tpu.matmul %0, %41, %cst_20 {dimension_numbers = #tpu.dot_dimension_numbers<[1], [0], [0], [1], [0, 0, 1, 1], [], []>} : vector<12x27xf32>, vector<27x400xf32>, vector<12x400xf32> -> vector<12x400xf32>
    %43 = vector.broadcast %1 : vector<12x1xf32> to vector<12x400xf32>
    %44 = arith.addf %42, %43 : vector<12x400xf32>
    %cst_21 = arith.constant 0.000000e+00 : f32
    %45 = vector.broadcast %cst_21 : f32 to vector<12x400xf32>
    %46 = arith.maximumf %44, %45 : vector<12x400xf32>
    %47 = vector.extract_strided_slice %2 {offsets = [3, 0, 0], sizes = [1, 6, 12], strides = [1, 1, 1]} : vector<4x6x12xf32> to vector<1x6x12xf32>
    %48 = vector.shape_cast %47 : vector<1x6x12xf32> to vector<6x12xf32>
    %cst_22 = arith.constant dense<0.000000e+00> : vector<6x400xf32>
    %49 = tpu.matmul %48, %46, %cst_22 {dimension_numbers = #tpu.dot_dimension_numbers<[1], [0], [0], [1], [0, 0, 1, 1], [], []>} : vector<6x12xf32>, vector<12x400xf32>, vector<6x400xf32> -> vector<6x400xf32>
    %50 = arith.addf %39, %49 : vector<6x400xf32>
    %cst_23 = arith.constant 0.000000e+00 : f32
    %51 = vector.broadcast %cst_23 : f32 to vector<6x400xf32>
    %52 = arith.maximumf %50, %51 : vector<6x400xf32>
    %c0_24 = arith.constant 0 : index
    %c0_25 = arith.constant 0 : index
    %53 = vector.load %arg7[%c0_24, %c0_25] : memref<1x4xf32, #tpu.memory_space<vmem>>, vector<1x4xf32>
    %54 = vector.extract_strided_slice %52 {offsets = [0, 0], sizes = [1, 400], strides = [1, 1]} : vector<6x400xf32> to vector<1x400xf32>
    %c0_26 = arith.constant 0 : index
    %c0_27 = arith.constant 0 : index
    %c0_28 = arith.constant 0 : index
    %55 = vector.load %arg6[%c0_26, %c0_27, %c0_28] : memref<6x400x4xf32, #tpu.memory_space<vmem>>, vector<1x400x4xf32>
    %56 = vector.shape_cast %55 : vector<1x400x4xf32> to vector<400x4xf32>
    %cst_29 = arith.constant dense<0.000000e+00> : vector<1x4xf32>
    %57 = tpu.matmul %54, %56, %cst_29 {dimension_numbers = #tpu.dot_dimension_numbers<[1], [0], [0], [1], [0, 0, 1, 1], [], []>} : vector<1x400xf32>, vector<400x4xf32>, vector<1x4xf32> -> vector<1x4xf32>
    %58 = arith.addf %53, %57 : vector<1x4xf32>
    %59 = vector.extract_strided_slice %52 {offsets = [1, 0], sizes = [1, 400], strides = [1, 1]} : vector<6x400xf32> to vector<1x400xf32>
    %c1 = arith.constant 1 : index
    %c0_30 = arith.constant 0 : index
    %c0_31 = arith.constant 0 : index
    %60 = vector.load %arg6[%c1, %c0_30, %c0_31] : memref<6x400x4xf32, #tpu.memory_space<vmem>>, vector<1x400x4xf32>
    %61 = vector.shape_cast %60 : vector<1x400x4xf32> to vector<400x4xf32>
    %cst_32 = arith.constant dense<0.000000e+00> : vector<1x4xf32>
    %62 = tpu.matmul %59, %61, %cst_32 {dimension_numbers = #tpu.dot_dimension_numbers<[1], [0], [0], [1], [0, 0, 1, 1], [], []>} : vector<1x400xf32>, vector<400x4xf32>, vector<1x4xf32> -> vector<1x4xf32>
    %63 = arith.addf %58, %62 : vector<1x4xf32>
    %64 = vector.extract_strided_slice %52 {offsets = [2, 0], sizes = [1, 400], strides = [1, 1]} : vector<6x400xf32> to vector<1x400xf32>
    %c2 = arith.constant 2 : index
    %c0_33 = arith.constant 0 : index
    %c0_34 = arith.constant 0 : index
    %65 = vector.load %arg6[%c2, %c0_33, %c0_34] : memref<6x400x4xf32, #tpu.memory_space<vmem>>, vector<1x400x4xf32>
    %66 = vector.shape_cast %65 : vector<1x400x4xf32> to vector<400x4xf32>
    %cst_35 = arith.constant dense<0.000000e+00> : vector<1x4xf32>
    %67 = tpu.matmul %64, %66, %cst_35 {dimension_numbers = #tpu.dot_dimension_numbers<[1], [0], [0], [1], [0, 0, 1, 1], [], []>} : vector<1x400xf32>, vector<400x4xf32>, vector<1x4xf32> -> vector<1x4xf32>
    %68 = arith.addf %63, %67 : vector<1x4xf32>
    %69 = vector.extract_strided_slice %52 {offsets = [3, 0], sizes = [1, 400], strides = [1, 1]} : vector<6x400xf32> to vector<1x400xf32>
    %c3 = arith.constant 3 : index
    %c0_36 = arith.constant 0 : index
    %c0_37 = arith.constant 0 : index
    %70 = vector.load %arg6[%c3, %c0_36, %c0_37] : memref<6x400x4xf32, #tpu.memory_space<vmem>>, vector<1x400x4xf32>
    %71 = vector.shape_cast %70 : vector<1x400x4xf32> to vector<400x4xf32>
    %cst_38 = arith.constant dense<0.000000e+00> : vector<1x4xf32>
    %72 = tpu.matmul %69, %71, %cst_38 {dimension_numbers = #tpu.dot_dimension_numbers<[1], [0], [0], [1], [0, 0, 1, 1], [], []>} : vector<1x400xf32>, vector<400x4xf32>, vector<1x4xf32> -> vector<1x4xf32>
    %73 = arith.addf %68, %72 : vector<1x4xf32>
    %74 = vector.extract_strided_slice %52 {offsets = [4, 0], sizes = [1, 400], strides = [1, 1]} : vector<6x400xf32> to vector<1x400xf32>
    %c4 = arith.constant 4 : index
    %c0_39 = arith.constant 0 : index
    %c0_40 = arith.constant 0 : index
    %75 = vector.load %arg6[%c4, %c0_39, %c0_40] : memref<6x400x4xf32, #tpu.memory_space<vmem>>, vector<1x400x4xf32>
    %76 = vector.shape_cast %75 : vector<1x400x4xf32> to vector<400x4xf32>
    %cst_41 = arith.constant dense<0.000000e+00> : vector<1x4xf32>
    %77 = tpu.matmul %74, %76, %cst_41 {dimension_numbers = #tpu.dot_dimension_numbers<[1], [0], [0], [1], [0, 0, 1, 1], [], []>} : vector<1x400xf32>, vector<400x4xf32>, vector<1x4xf32> -> vector<1x4xf32>
    %78 = arith.addf %73, %77 : vector<1x4xf32>
    %79 = vector.extract_strided_slice %52 {offsets = [5, 0], sizes = [1, 400], strides = [1, 1]} : vector<6x400xf32> to vector<1x400xf32>
    %c5 = arith.constant 5 : index
    %c0_42 = arith.constant 0 : index
    %c0_43 = arith.constant 0 : index
    %80 = vector.load %arg6[%c5, %c0_42, %c0_43] : memref<6x400x4xf32, #tpu.memory_space<vmem>>, vector<1x400x4xf32>
    %81 = vector.shape_cast %80 : vector<1x400x4xf32> to vector<400x4xf32>
    %cst_44 = arith.constant dense<0.000000e+00> : vector<1x4xf32>
    %82 = tpu.matmul %79, %81, %cst_44 {dimension_numbers = #tpu.dot_dimension_numbers<[1], [0], [0], [1], [0, 0, 1, 1], [], []>} : vector<1x400xf32>, vector<400x4xf32>, vector<1x4xf32> -> vector<1x4xf32>
    %83 = arith.addf %78, %82 : vector<1x4xf32>
    %c0_45 = arith.constant 0 : index
    %c0_46 = arith.constant 0 : index
    %c0_47 = arith.constant 0 : index
    %84 = vector.load %arg8[%c0_45, %c0_46, %c0_47] : memref<1x1x4xf32, #tpu.memory_space<vmem>>, vector<1x1x4xf32>
    %85 = vector.shape_cast %84 : vector<1x1x4xf32> to vector<1x4xf32>
    %86 = vector.shape_cast %83 : vector<1x4xf32> to vector<1x1x4xf32>
    tpu.vector_store %arg8[%c0_45, %c0_46, %c0_47], %86 {strides = array<i32>} : memref<1x1x4xf32, #tpu.memory_space<vmem>>, vector<1x1x4xf32>,
    return
  }
  func.func @transform_0(%arg0: i32) -> (i32, i32, i32, i32) {
    %c0_i32 = arith.constant 0 : i32
    %c0_i32_0 = arith.constant 0 : i32
    %c0_i32_1 = arith.constant 0 : i32
    %c0_i32_2 = arith.constant 0 : i32
    return %arg0, %c0_i32, %c0_i32_0, %c0_i32_1 : i32, i32, i32, i32
  }
  func.func @transform_1(%arg0: i32) -> (i32, i32) {
    %c0_i32 = arith.constant 0 : i32
    %c0_i32_0 = arith.constant 0 : i32
    %c0_i32_1 = arith.constant 0 : i32
    return %c0_i32, %c0_i32_0 : i32, i32
  }
  func.func @transform_2(%arg0: i32) -> (i32, i32) {
    %c0_i32 = arith.constant 0 : i32
    %c0_i32_0 = arith.constant 0 : i32
    %c0_i32_1 = arith.constant 0 : i32
    return %c0_i32, %c0_i32_0 : i32, i32
  }
  func.func @transform_3(%arg0: i32) -> (i32, i32, i32) {
    %c0_i32 = arith.constant 0 : i32
    %c0_i32_0 = arith.constant 0 : i32
    %c0_i32_1 = arith.constant 0 : i32
    %c0_i32_2 = arith.constant 0 : i32
    return %c0_i32, %c0_i32_0, %c0_i32_1 : i32, i32, i32
  }
  func.func @transform_4(%arg0: i32) -> (i32, i32) {
    %c0_i32 = arith.constant 0 : i32
    %c0_i32_0 = arith.constant 0 : i32
    %c0_i32_1 = arith.constant 0 : i32
    return %c0_i32, %c0_i32_0 : i32, i32
  }
  func.func @transform_5(%arg0: i32) -> (i32, i32, i32) {
    %c0_i32 = arith.constant 0 : i32
    %c0_i32_0 = arith.constant 0 : i32
    %c0_i32_1 = arith.constant 0 : i32
    %c0_i32_2 = arith.constant 0 : i32
    return %c0_i32, %c0_i32_0, %c0_i32_1 : i32, i32, i32
  }
  func.func @transform_6(%arg0: i32) -> (i32, i32) {
    %c0_i32 = arith.constant 0 : i32
    %c0_i32_0 = arith.constant 0 : i32
    %c0_i32_1 = arith.constant 0 : i32
    return %c0_i32, %c0_i32_0 : i32, i32
  }
  func.func @transform_7(%arg0: i32) -> (i32, i32, i32) {
    %c0_i32 = arith.constant 0 : i32
    %c0_i32_0 = arith.constant 0 : i32
    %c0_i32_1 = arith.constant 0 : i32
    return %arg0, %c0_i32, %c0_i32_0 : i32, i32, i32
  }
}

</mosaic_0001>

<llo_original>
// kernel: qnetwork_forward.1
$region0: #{qnetwork_forward.1}
  #allocation0 [shape = 'u32[]', space=smem, size = 0x4, offset = 0x4, fixed_abs, tag = 'smem constant byte address 0x4 - core index']
  #allocation1 [shape = 'u32[144,128]{1,0:T(1,128)}', space=vmem, size = 0x12000, scoped, tag = 'internal scratch']
  %s0 = inlined_call_operand.vmem [shape: f32[2,4,27,400], index: 0, kind: input, shape index: {}]
  %s1 = inlined_call_operand.vmem [shape: f32[12,27], index: 1, kind: input, shape index: {}]
  %s2 = inlined_call_operand.vmem [shape: f32[12,1], index: 2, kind: input, shape index: {}]
  %s3 = inlined_call_operand.vmem [shape: f32[4,6,12], index: 3, kind: input, shape index: {}]
  %s4 = inlined_call_operand.vmem [shape: f32[6,1], index: 4, kind: input, shape index: {}]
  %s5 = inlined_call_operand.vmem [shape: f32[6,400,4], index: 5, kind: input, shape index: {}]
  %s6 = inlined_call_operand.vmem [shape: f32[1,4], index: 6, kind: input, shape index: {}]
  %s7 = inlined_call_operand.hbm [shape: f32[2,1,4], index: 7, kind: output, shape index: {}]
  %s8 = sld [smem:[#allocation0]]
  $region61: #{qnetwork_forward.1} parent=0
    _
  %s10 = ssub.s32 1, %s8
  %s11 = scalar_select 0, %s10, %s8
  $region1: #{qnetwork_forward.1} parent=0
    #allocation2 [shape = 'u8[1024]{0}', space=vmem, size = 0x400, scoped, tag = 'output window, operand 0']
    #allocation3 [shape = 's32[2]{0}', space=sflag, size = 0x8, scoped, tag = 'scoped memory for qnetwork_forward.1']
    %12 = vsyncpa [#allocation3], 0
    %s13 = scalar_lea.sflag [#allocation3], 1
    %14 = vsyncpa %s13, 0
    loop: start=0, step=1, limit=4
    $region2: #{qnetwork_forward.1} parent=1 // loop_pre_header
      _
    $region3: #{qnetwork_forward.1} parent=1 // loop_header
      %s16 = sphi 0, %s20
      %p17 = scmp.ge.s32.totalorder %s16, 4
      %s26 = sphi 0, %s28
      %s29 = sphi 0, %s26
      %s30 = sphi 0, %s29
      %s46 = sphi 0, %s30
      %s50 = sphi 0, %s50
      %s52 = sphi 0, %s50
      %s53 = sphi 0, %s52
      %s67 = sphi 0, %s53
      %s71 = sphi 0, %s71
      %s73 = sphi 0, %s71
      %s74 = sphi 0, %s73
      %s88 = sphi 0, %s74
      %s92 = sphi 0, %s92
      %s94 = sphi 0, %s92
      %s95 = sphi 0, %s94
      %s109 = sphi 0, %s95
      %s113 = sphi 0, %s113
      %s115 = sphi 0, %s113
      %s116 = sphi 0, %s115
      %s130 = sphi 0, %s116
      %s134 = sphi 0, %s134
      %s136 = sphi 0, %s134
      %s137 = sphi 0, %s136
      %s151 = sphi 0, %s137
      %s155 = sphi 0, %s155
      %s157 = sphi 0, %s155
      %s158 = sphi 0, %s157
      %s172 = sphi 0, %s158
      %s178 = sphi 0, %s180
      %s181 = sphi 0, %s178
      %s182 = sphi 0, %s181
      %s198 = sphi 0, %s182
    $region4: #{qnetwork_forward.1} parent=1 // loop_header_branch
      %19 = sbr.rel (%p17) target = $region8
    $region5: #{qnetwork_forward.1} parent=1 // loop_body
      %s21 = ssub.s32 %s16, 1
      %s22 = ssub.s32 %s16, 2
      %s23 = sadd.s32 %s16, 1
      %s24 = ssub.s32 %s16, %s23
      %p25 = scmp.eq.s32.totalorder %s24, 0
      %s27 = sadd.s32 %s26, 1
      %s28 = scalar_select %p25, %s26, %s27
      %p31 = pneg %p25
      %p32 = scmp.eq.s32.totalorder %s16, 1
      %p33 = por %p31, %p32
      %p34 = scmp.ne.s32.totalorder %s26, %s29
      %p35 = scmp.eq.s32.totalorder %s16, 0
      %p36 = por %p34, %p35
      %p37 = scmp.ne.s32.totalorder %s26, %s29
      %p38 = scmp.eq.s32.totalorder %s21, 1
      %p39 = por %p37, %p38
      %p40 = scmp.ne.s32.totalorder %s29, %s30
      %p41 = scmp.eq.s32.totalorder %s21, 0
      %p42 = por %p40, %p41
      %p43 = scmp.ne.s32.totalorder %s29, %s30
      %p44 = scmp.eq.s32.totalorder %s22, 1
      %p45 = por %p43, %p44
      %p47 = scmp.ne.s32.totalorder %s30, %s46
      %p48 = scmp.eq.s32.totalorder %s22, 0
      %p49 = por %p47, %p48
      %s51 = sadd.s32 %s50, 1
      %p54 = scmp.eq.s32.totalorder %s16, 1
      %p55 = scmp.ne.s32.totalorder %s50, %s52
      %p56 = scmp.eq.s32.totalorder %s16, 0
      %p57 = por %p55, %p56
      %p58 = scmp.ne.s32.totalorder %s50, %s52
      %p59 = scmp.eq.s32.totalorder %s21, 1
      %p60 = por %p58, %p59
      %p61 = scmp.ne.s32.totalorder %s52, %s53
      %p62 = scmp.eq.s32.totalorder %s21, 0
      %p63 = por %p61, %p62
      %p64 = scmp.ne.s32.totalorder %s52, %s53
      %p65 = scmp.eq.s32.totalorder %s22, 1
      %p66 = por %p64, %p65
      %p68 = scmp.ne.s32.totalorder %s53, %s67
      %p69 = scmp.eq.s32.totalorder %s22, 0
      %p70 = por %p68, %p69
      %s72 = sadd.s32 %s71, 1
      %p75 = scmp.eq.s32.totalorder %s16, 1
      %p76 = scmp.ne.s32.totalorder %s71, %s73
      %p77 = scmp.eq.s32.totalorder %s16, 0
      %p78 = por %p76, %p77
      %p79 = scmp.ne.s32.totalorder %s71, %s73
      %p80 = scmp.eq.s32.totalorder %s21, 1
      %p81 = por %p79, %p80
      %p82 = scmp.ne.s32.totalorder %s73, %s74
      %p83 = scmp.eq.s32.totalorder %s21, 0
      %p84 = por %p82, %p83
      %p85 = scmp.ne.s32.totalorder %s73, %s74
      %p86 = scmp.eq.s32.totalorder %s22, 1
      %p87 = por %p85, %p86
      %p89 = scmp.ne.s32.totalorder %s74, %s88
      %p90 = scmp.eq.s32.totalorder %s22, 0
      %p91 = por %p89, %p90
      %s93 = sadd.s32 %s92, 1
      %p96 = scmp.eq.s32.totalorder %s16, 1
      %p97 = scmp.ne.s32.totalorder %s92, %s94
      %p98 = scmp.eq.s32.totalorder %s16, 0
      %p99 = por %p97, %p98
      %p100 = scmp.ne.s32.totalorder %s92, %s94
      %p101 = scmp.eq.s32.totalorder %s21, 1
      %p102 = por %p100, %p101
      %p103 = scmp.ne.s32.totalorder %s94, %s95
      %p104 = scmp.eq.s32.totalorder %s21, 0
      %p105 = por %p103, %p104
      %p106 = scmp.ne.s32.totalorder %s94, %s95
      %p107 = scmp.eq.s32.totalorder %s22, 1
      %p108 = por %p106, %p107
      %p110 = scmp.ne.s32.totalorder %s95, %s109
      %p111 = scmp.eq.s32.totalorder %s22, 0
      %p112 = por %p110, %p111
      %s114 = sadd.s32 %s113, 1
      %p117 = scmp.eq.s32.totalorder %s16, 1
      %p118 = scmp.ne.s32.totalorder %s113, %s115
      %p119 = scmp.eq.s32.totalorder %s16, 0
      %p120 = por %p118, %p119
      %p121 = scmp.ne.s32.totalorder %s113, %s115
      %p122 = scmp.eq.s32.totalorder %s21, 1
      %p123 = por %p121, %p122
      %p124 = scmp.ne.s32.totalorder %s115, %s116
      %p125 = scmp.eq.s32.totalorder %s21, 0
      %p126 = por %p124, %p125
      %p127 = scmp.ne.s32.totalorder %s115, %s116
      %p128 = scmp.eq.s32.totalorder %s22, 1
      %p129 = por %p127, %p128
      %p131 = scmp.ne.s32.totalorder %s116, %s130
      %p132 = scmp.eq.s32.totalorder %s22, 0
      %p133 = por %p131, %p132
      %s135 = sadd.s32 %s134, 1
      %p138 = scmp.eq.s32.totalorder %s16, 1
      %p139 = scmp.ne.s32.totalorder %s134, %s136
      %p140 = scmp.eq.s32.totalorder %s16, 0
      %p141 = por %p139, %p140
      %p142 = scmp.ne.s32.totalorder %s134, %s136
      %p143 = scmp.eq.s32.totalorder %s21, 1
      %p144 = por %p142, %p143
      %p145 = scmp.ne.s32.totalorder %s136, %s137
      %p146 = scmp.eq.s32.totalorder %s21, 0
      %p147 = por %p145, %p146
      %p148 = scmp.ne.s32.totalorder %s136, %s137
      %p149 = scmp.eq.s32.totalorder %s22, 1
      %p150 = por %p148, %p149
      %p152 = scmp.ne.s32.totalorder %s137, %s151
      %p153 = scmp.eq.s32.totalorder %s22, 0
      %p154 = por %p152, %p153
      %s156 = sadd.s32 %s155, 1
      %p159 = scmp.eq.s32.totalorder %s16, 1
      %p160 = scmp.ne.s32.totalorder %s155, %s157
      %p161 = scmp.eq.s32.totalorder %s16, 0
      %p162 = por %p160, %p161
      %p163 = scmp.ne.s32.totalorder %s155, %s157
      %p164 = scmp.eq.s32.totalorder %s21, 1
      %p165 = por %p163, %p164
      %p166 = scmp.ne.s32.totalorder %s157, %s158
      %p167 = scmp.eq.s32.totalorder %s21, 0
      %p168 = por %p166, %p167
      %p169 = scmp.ne.s32.totalorder %s157, %s158
      %p170 = scmp.eq.s32.totalorder %s22, 1
      %p171 = por %p169, %p170
      %p173 = scmp.ne.s32.totalorder %s158, %s172
      %p174 = scmp.eq.s32.totalorder %s22, 0
      %p175 = por %p173, %p174
      %s176 = ssub.s32 %s16, %s23
      %p177 = scmp.eq.s32.totalorder %s176, 0
      %s179 = sadd.s32 %s178, 1
      %s180 = scalar_select %p177, %s178, %s179
      %p183 = pneg %p177
      %p184 = scmp.eq.s32.totalorder %s16, 1
      %p185 = por %p183, %p184
      %p186 = scmp.ne.s32.totalorder %s178, %s181
      %p187 = scmp.eq.s32.totalorder %s16, 0
      %p188 = por %p186, %p187
      %p189 = scmp.ne.s32.totalorder %s178, %s181
      %p190 = scmp.eq.s32.totalorder %s21, 1
      %p191 = por %p189, %p190
      %p192 = scmp.ne.s32.totalorder %s181, %s182
      %p193 = scmp.eq.s32.totalorder %s21, 0
      %p194 = por %p192, %p193
      %p195 = scmp.ne.s32.totalorder %s181, %s182
      %p196 = scmp.eq.s32.totalorder %s22, 1
      %p197 = por %p195, %p196
      %p199 = scmp.ne.s32.totalorder %s182, %s198
      %p200 = scmp.eq.s32.totalorder %s22, 0
      %p201 = por %p199, %p200
      %p202 = scmp.le.s32.totalorder 1, %s16
      %p203 = scmp.lt.s32.totalorder %s16, 3
      %p204 = pnand %p202, %p203
      %p205 = pneg %p204
      // Predicated region
      $region9: #{qnetwork_forward.1} parent=5 // pred_check
        _
      $region10: #{qnetwork_forward.1} parent=5 // pred_check_branch
        %207 = sbr.rel (%p204) target = $region12
      $region11: #{qnetwork_forward.1} parent=5 // pred_region
        %s208 = ssub.s32 %s16, 1
        // Predicated region
        $region13: #{qnetwork_forward.1} parent=11 // pred_check
          %p209 = pneg %p63
        $region14: #{qnetwork_forward.1} parent=11 // pred_check_branch
          %211 = sbr.rel (%p209) target = $region16
        $region15: #{qnetwork_forward.1} parent=11 // pred_region
          _
        $region16: #{qnetwork_forward.1} parent=11 // pred_fallthru
          _
        // Predicated region
        $region17: #{qnetwork_forward.1} parent=11 // pred_check
          %p212 = pneg %p84
        $region18: #{qnetwork_forward.1} parent=11 // pred_check_branch
          %214 = sbr.rel (%p212) target = $region20
        $region19: #{qnetwork_forward.1} parent=11 // pred_region
          _
        $region20: #{qnetwork_forward.1} parent=11 // pred_fallthru
          _
        // Predicated region
        $region21: #{qnetwork_forward.1} parent=11 // pred_check
          %p215 = pneg %p105
        $region22: #{qnetwork_forward.1} parent=11 // pred_check_branch
          %217 = sbr.rel (%p215) target = $region24
        $region23: #{qnetwork_forward.1} parent=11 // pred_region
          _
        $region24: #{qnetwork_forward.1} parent=11 // pred_fallthru
          _
        // Predicated region
        $region25: #{qnetwork_forward.1} parent=11 // pred_check
          %p218 = pneg %p126
        $region26: #{qnetwork_forward.1} parent=11 // pred_check_branch
          %220 = sbr.rel (%p218) target = $region28
        $region27: #{qnetwork_forward.1} parent=11 // pred_region
          _
        $region28: #{qnetwork_forward.1} parent=11 // pred_fallthru
          _
        // Predicated region
        $region29: #{qnetwork_forward.1} parent=11 // pred_check
          %p221 = pneg %p147
        $region30: #{qnetwork_forward.1} parent=11 // pred_check_branch
          %223 = sbr.rel (%p221) target = $region32
        $region31: #{qnetwork_forward.1} parent=11 // pred_region
          _
        $region32: #{qnetwork_forward.1} parent=11 // pred_fallthru
          _
        // Predicated region
        $region33: #{qnetwork_forward.1} parent=11 // pred_check
          %p224 = pneg %p168
        $region34: #{qnetwork_forward.1} parent=11 // pred_check_branch
          %226 = sbr.rel (%p224) target = $region36
        $region35: #{qnetwork_forward.1} parent=11 // pred_region
          _
        $region36: #{qnetwork_forward.1} parent=11 // pred_fallthru
          _
      $region12: #{qnetwork_forward.1} parent=5 // pred_fallthru
        _
      %p227 = scmp.lt.s32.totalorder %s16, 2
      // Predicated region
      $region37: #{qnetwork_forward.1} parent=5 // pred_check
        %p228 = pneg %p227
      $region38: #{qnetwork_forward.1} parent=5 // pred_check_branch
        %230 = sbr.rel (%p228) target = $region40
      $region39: #{qnetwork_forward.1} parent=5 // pred_region
        // Predicated region
        $region41: #{qnetwork_forward.1} parent=39 // pred_check
          %p231 = pneg %p36
        $region42: #{qnetwork_forward.1} parent=39 // pred_check_branch
          %233 = sbr.rel (%p231) target = $region44
        $region43: #{qnetwork_forward.1} parent=39 // pred_region
          %p234 = scmp.lt.s32.totalorder %s16, 1
          %s235 = scalar_select %p234, %s16, 1
          %s236 = smul.addr %s235, 64
          %s237 = smul.addr %s236, 8
          %s238 = scalar_lea.vmem %s0, %s237
        $region44: #{qnetwork_forward.1} parent=39 // pred_fallthru
          _
      $region40: #{qnetwork_forward.1} parent=5 // pred_fallthru
        _
      %p239 = scmp.le.s32.totalorder 1, %s16
      %p240 = scmp.lt.s32.totalorder %s16, 3
      %p241 = pnand %p239, %p240
      %p242 = pneg %p241
      // Predicated region
      $region45: #{qnetwork_forward.1} parent=5 // pred_check
        _
      $region46: #{qnetwork_forward.1} parent=5 // pred_check_branch
        %244 = sbr.rel (%p241) target = $region48
      $region47: #{qnetwork_forward.1} parent=5 // pred_region
        %s245 = ssub.s32 %s16, 1
        %p246 = scmp.lt.s32.totalorder %s21, 1
        %s247 = scalar_select %p246, %s21, 1
        %s248 = smul.addr %s247, 64
        %s249 = smul.addr %s248, 8
        %s250 = scalar_lea.vmem %s0, %s249
        %p251 = pneg %p42
        %p252 = pneg %p39
        %p253 = pneg %p63
        %p254 = pneg %p60
        %p255 = pneg %p84
        %p256 = pneg %p81
        %p257 = pneg %p105
        %p258 = pneg %p102
        %p259 = pneg %p126
        %p260 = pneg %p123
        %p261 = pneg %p147
        %p262 = pneg %p144
        %p263 = pneg %p168
        %p264 = pneg %p165
        %p265 = pneg %p194
        %p266 = pneg %p191
        %s267 = sand.u32 %s181, 1
        %s268 = scalar_lea.sflag [#allocation3], %s267
        %s269 = sand.u32 %s181, 1
        %s270 = scalar_lea.vmem [#allocation2], %s269
        %p271 = scmp.lt.s32.totalorder %s21, 1
        %s272 = scalar_select %p271, %s21, 1
        %s273 = smul.addr %s272, 64
        %s274 = smul.addr %s273, 8
        %s275 = scalar_lea.vmem %s0, %s274
        %v276 = vld [vmem:[%s1] sm:$0xff]
        %v277 = vld [vmem:[%s1 + $0x8] sm:$0xf]
        %v278 = vld [vmem:[%s2] sm:$0xff]
        %v279 = vld [vmem:[%s2 + $0x8] sm:$0xf]
        %v280 = vld [vmem:[%s3] sm:$0x3f]
        %v281 = vld [vmem:[%s3 + $0x8] sm:$0x3f]
        %v282 = vld [vmem:[%s3 + $0x10] sm:$0x3f]
        %v283 = vld [vmem:[%s3 + $0x18] sm:$0x3f]
        %v284 = vld [vmem:[%s4] sm:$0x3f]
        %v285 = vld [vmem:[%s275] sm:$0xff]
        %v286 = vld [vmem:[%s275 + $0x8] sm:$0xff]
        %v287 = vld [vmem:[%s275 + $0x10] sm:$0xff]
        %v288 = vld [vmem:[%s275 + $0x18] sm:$0xff]
        %v289 = vld [vmem:[%s275 + $0x20] sm:$0xff]
        %v290 = vld [vmem:[%s275 + $0x28] sm:$0xff]
        %v291 = vld [vmem:[%s275 + $0x30] sm:$0xff]
        %v292 = vld [vmem:[%s275 + $0x38] sm:$0xff]
        %v293 = vld [vmem:[%s275 + $0x40] sm:$0xff]
        %v294 = vld [vmem:[%s275 + $0x48] sm:$0xff]
        %v295 = vld [vmem:[%s275 + $0x50] sm:$0xff]
        %v296 = vld [vmem:[%s275 + $0x58] sm:$0xff]
        %v297 = vld [vmem:[%s275 + $0x60] sm:$0x7]
        %v298 = vld [vmem:[%s275 + $0x68] sm:$0x7]
        %v299 = vld [vmem:[%s275 + $0x70] sm:$0x7]
        %v300 = vld [vmem:[%s275 + $0x78] sm:$0x7]
        %v301 = vld [vmem:[%s275 + $0x80] sm:$0xff]
        %v302 = vld [vmem:[%s275 + $0x88] sm:$0xff]
        %v303 = vld [vmem:[%s275 + $0x90] sm:$0xff]
        %v304 = vld [vmem:[%s275 + $0x98] sm:$0xff]
        %v305 = vld [vmem:[%s275 + $0xa0] sm:$0xff]
        %v306 = vld [vmem:[%s275 + $0xa8] sm:$0xff]
        %v307 = vld [vmem:[%s275 + $0xb0] sm:$0xff]
        %v308 = vld [vmem:[%s275 + $0xb8] sm:$0xff]
        %v309 = vld [vmem:[%s275 + $0xc0] sm:$0xff]
        %v310 = vld [vmem:[%s275 + $0xc8] sm:$0xff]
        %v311 = vld [vmem:[%s275 + $0xd0] sm:$0xff]
        %v312 = vld [vmem:[%s275 + $0xd8] sm:$0xff]
        %v313 = vld [vmem:[%s275 + $0xe0] sm:$0x7]
        %v314 = vld [vmem:[%s275 + $0xe8] sm:$0x7]
        %v315 = vld [vmem:[%s275 + $0xf0] sm:$0x7]
        %v316 = vld [vmem:[%s275 + $0xf8] sm:$0x7]
        %v317 = vld [vmem:[%s275 + $0x100] sm:$0xff]
        %v318 = vld [vmem:[%s275 + $0x108] sm:$0xff]
        %v319 = vld [vmem:[%s275 + $0x110] sm:$0xff]
        %v320 = vld [vmem:[%s275 + $0x118] sm:$0xff]
        %v321 = vld [vmem:[%s275 + $0x120] sm:$0xff]
        %v322 = vld [vmem:[%s275 + $0x128] sm:$0xff]
        %v323 = vld [vmem:[%s275 + $0x130] sm:$0xff]
        %v324 = vld [vmem:[%s275 + $0x138] sm:$0xff]
        %v325 = vld [vmem:[%s275 + $0x140] sm:$0xff]
        %v326 = vld [vmem:[%s275 + $0x148] sm:$0xff]
        %v327 = vld [vmem:[%s275 + $0x150] sm:$0xff]
        %v328 = vld [vmem:[%s275 + $0x158] sm:$0xff]
        %v329 = vld [vmem:[%s275 + $0x160] sm:$0x7]
        %v330 = vld [vmem:[%s275 + $0x168] sm:$0x7]
        %v331 = vld [vmem:[%s275 + $0x170] sm:$0x7]
        %v332 = vld [vmem:[%s275 + $0x178] sm:$0x7]
        %v333 = vld [vmem:[%s275 + $0x180] sm:$0xff]
        %v334 = vld [vmem:[%s275 + $0x188] sm:$0xff]
        %v335 = vld [vmem:[%s275 + $0x190] sm:$0xff]
        %v336 = vld [vmem:[%s275 + $0x198] sm:$0xff]
        %v337 = vld [vmem:[%s275 + $0x1a0] sm:$0xff]
        %v338 = vld [vmem:[%s275 + $0x1a8] sm:$0xff]
        %v339 = vld [vmem:[%s275 + $0x1b0] sm:$0xff]
        %v340 = vld [vmem:[%s275 + $0x1b8] sm:$0xff]
        %v341 = vld [vmem:[%s275 + $0x1c0] sm:$0xff]
        %v342 = vld [vmem:[%s275 + $0x1c8] sm:$0xff]
        %v343 = vld [vmem:[%s275 + $0x1d0] sm:$0xff]
        %v344 = vld [vmem:[%s275 + $0x1d8] sm:$0xff]
        %v345 = vld [vmem:[%s275 + $0x1e0] sm:$0x7]
        %v346 = vld [vmem:[%s275 + $0x1e8] sm:$0x7]
        %v347 = vld [vmem:[%s275 + $0x1f0] sm:$0x7]
        %v348 = vld [vmem:[%s275 + $0x1f8] sm:$0x7]
        %350 = vset.pattern.permute.xlu0 0
        %351 = vperm.xlu0 %350, %v278
        %v352 = vpop.permute.xlu0 %351
        %355 = vset.pattern.permute.xlu0 0
        %356 = vperm.xlu0 %355, %v279
        %v357 = vpop.permute.xlu0 %356
        %vm359 = vcmask 220160
        %v361 = vsel %vm359, %v276, 0
        %v364 = vsel %vm359, %v277, 0
        %vm366 = vcmask 1042432
        %v368 = vsel %vm366, %v297, 0
        %v371 = vsel %vm366, %v298, 0
        %v374 = vsel %vm366, %v299, 0
        %v377 = vsel %vm366, %v300, 0
        %379 = vmatprep.subr.mxu0 0.0
        %380 = vmatpush1.msra.mxu0 0.0
        %381 = vmatprep.subr.mxu0 0.0
        %382 = vmatpush1.msra.mxu0 0.0
        %383 = vmatprep.subr.mxu0 0.0
        %384 = vmatpush1.msra.mxu0 0.0
        %385 = vmatprep.subr.mxu0 0.0
        %386 = vmatpush1.msra.mxu0 0.0
        %387 = vmatprep.subr.mxu0 0.0
        %388 = vmatpush1.msra.mxu0 0.0
        %389 = vmatprep.subr.mxu0 0.0
        %390 = vmatpush1.msra.mxu0 0.0
        %391 = vmatprep.subr.mxu0 0.0
        %392 = vmatpush1.msra.mxu0 0.0
        %393 = vmatprep.subr.mxu0 0.0
        %394 = vmatpush1.msra.mxu0 0.0
        %395 = vmatprep.subr.mxu0 0.0
        %396 = vmatpush1.msra.mxu0 0.0
        %397 = vmatprep.subr.mxu0 0.0
        %398 = vmatpush1.msra.mxu0 0.0
        %399 = vmatprep.subr.mxu0 0.0
        %400 = vmatpush1.msra.mxu0 0.0
        %401 = vmatprep.subr.mxu0 0.0
        %402 = vmatpush1.msra.mxu0 0.0
        %403 = vmatprep.subr.mxu0 %v371
        %404 = vmatpush1.msra.mxu0 %v368
        %405 = vmatprep.subr.mxu0 %v294
        %406 = vmatpush1.msra.mxu0 %v293
        %407 = vmatprep.subr.mxu0 %v290
        %408 = vmatpush1.msra.mxu0 %v289
        %409 = vmatprep.subr.mxu0 %v286
        %410 = vmatpush1.msra.mxu0 %v285
        %411 = vmatprep.subr.mxu0 0.0
        %412 = vmatpush2.msra.mxu0 0.0
        %413 = vmatprep.subr.mxu0 0.0
        %414 = vmatpush2.msra.mxu0 0.0
        %415 = vmatprep.subr.mxu0 0.0
        %416 = vmatpush2.msra.mxu0 0.0
        %417 = vmatprep.subr.mxu0 0.0
        %418 = vmatpush2.msra.mxu0 0.0
        %419 = vmatprep.subr.mxu0 0.0
        %420 = vmatpush2.msra.mxu0 0.0
        %421 = vmatprep.subr.mxu0 0.0
        %422 = vmatpush2.msra.mxu0 0.0
        %423 = vmatprep.subr.mxu0 0.0
        %424 = vmatpush2.msra.mxu0 0.0
        %425 = vmatprep.subr.mxu0 0.0
        %426 = vmatpush2.msra.mxu0 0.0
        %427 = vmatprep.subr.mxu0 0.0
        %428 = vmatpush2.msra.mxu0 0.0
        %429 = vmatprep.subr.mxu0 0.0
        %430 = vmatpush2.msra.mxu0 0.0
        %431 = vmatprep.subr.mxu0 0.0
        %432 = vmatpush2.msra.mxu0 0.0
        %433 = vmatprep.subr.mxu0 0.0
        %434 = vmatpush2.msra.mxu0 0.0
        %435 = vmatprep.subr.mxu0 0.0
        %436 = vmatpush2.msra.mxu0 0.0
        %437 = vmatprep.subr.mxu0 0.0
        %438 = vmatpush2.msra.mxu0 0.0
        %439 = vmatprep.subr.mxu0 0.0
        %440 = vmatpush2.msra.mxu0 0.0
        %441 = vmatprep.subr.mxu0 0.0
        %442 = vmatpush2.msra.mxu0 0.0
        %443 = vmatprep.mubr.f32.mxu0 0.0
        %444 = vmatmul.mubr.f32.gmra.mxu0 %v361
        %v445 = vpop.f32.mrf.mxu0
        %v446 = vadd.f32 %v352, %v445
        %v447 = vpop.f32.mrf.mxu0
        %v448 = vadd.f32 %v352, %v447
        %449 = vmatprep.mubr.f32.mxu0 0.0
        %450 = vmatmul.mubr.f32.gmra.mxu0 %v364
        %v451 = vpop.f32.mrf.mxu0
        %v452 = vadd.f32 %v357, %v451
        %v453 = vpop.f32.mrf.mxu0
        %v454 = vadd.f32 %v357, %v453
        %455 = vdwg.mxu0
        %456 = vmatprep.subr.mxu0 0.0
        %457 = vmatpush1.msra.mxu0 0.0
        %458 = vmatprep.subr.mxu0 0.0
        %459 = vmatpush1.msra.mxu0 0.0
        %460 = vmatprep.subr.mxu0 0.0
        %461 = vmatpush1.msra.mxu0 0.0
        %462 = vmatprep.subr.mxu0 0.0
        %463 = vmatpush1.msra.mxu0 0.0
        %464 = vmatprep.subr.mxu0 0.0
        %465 = vmatpush1.msra.mxu0 0.0
        %466 = vmatprep.subr.mxu0 0.0
        %467 = vmatpush1.msra.mxu0 0.0
        %468 = vmatprep.subr.mxu0 0.0
        %469 = vmatpush1.msra.mxu0 0.0
        %470 = vmatprep.subr.mxu0 0.0
        %471 = vmatpush1.msra.mxu0 0.0
        %472 = vmatprep.subr.mxu0 0.0
        %473 = vmatpush1.msra.mxu0 0.0
        %474 = vmatprep.subr.mxu0 0.0
        %475 = vmatpush1.msra.mxu0 0.0
        %476 = vmatprep.subr.mxu0 0.0
        %477 = vmatpush1.msra.mxu0 0.0
        %478 = vmatprep.subr.mxu0 0.0
        %479 = vmatpush1.msra.mxu0 0.0
        %480 = vmatprep.subr.mxu0 %v377
        %481 = vmatpush1.msra.mxu0 %v374
        %482 = vmatprep.subr.mxu0 %v296
        %483 = vmatpush1.msra.mxu0 %v295
        %484 = vmatprep.subr.mxu0 %v292
        %485 = vmatpush1.msra.mxu0 %v291
        %486 = vmatprep.subr.mxu0 %v288
        %487 = vmatpush1.msra.mxu0 %v287
        %488 = vmatprep.subr.mxu0 0.0
        %489 = vmatpush2.msra.mxu0 0.0
        %490 = vmatprep.subr.mxu0 0.0
        %491 = vmatpush2.msra.mxu0 0.0
        %492 = vmatprep.subr.mxu0 0.0
        %493 = vmatpush2.msra.mxu0 0.0
        %494 = vmatprep.subr.mxu0 0.0
        %495 = vmatpush2.msra.mxu0 0.0
        %496 = vmatprep.subr.mxu0 0.0
        %497 = vmatpush2.msra.mxu0 0.0
        %498 = vmatprep.subr.mxu0 0.0
        %499 = vmatpush2.msra.mxu0 0.0
        %500 = vmatprep.subr.mxu0 0.0
        %501 = vmatpush2.msra.mxu0 0.0
        %502 = vmatprep.subr.mxu0 0.0
        %503 = vmatpush2.msra.mxu0 0.0
        %504 = vmatprep.subr.mxu0 0.0
        %505 = vmatpush2.msra.mxu0 0.0
        %506 = vmatprep.subr.mxu0 0.0
        %507 = vmatpush2.msra.mxu0 0.0
        %508 = vmatprep.subr.mxu0 0.0
        %509 = vmatpush2.msra.mxu0 0.0
        %510 = vmatprep.subr.mxu0 0.0
        %511 = vmatpush2.msra.mxu0 0.0
        %512 = vmatprep.subr.mxu0 0.0
        %513 = vmatpush2.msra.mxu0 0.0
        %514 = vmatprep.subr.mxu0 0.0
        %515 = vmatpush2.msra.mxu0 0.0
        %516 = vmatprep.subr.mxu0 0.0
        %517 = vmatpush2.msra.mxu0 0.0
        %518 = vmatprep.subr.mxu0 0.0
        %519 = vmatpush2.msra.mxu0 0.0
        %520 = vmatprep.mubr.f32.mxu0 0.0
        %521 = vmatmul.mubr.f32.gmra.mxu0 %v361
        %v522 = vpop.f32.mrf.mxu0
        %v523 = vadd.f32 %v352, %v522
        %v524 = vpop.f32.mrf.mxu0
        %v525 = vadd.f32 %v352, %v524
        %526 = vmatprep.mubr.f32.mxu0 0.0
        %527 = vmatmul.mubr.f32.gmra.mxu0 %v364
        %v528 = vpop.f32.mrf.mxu0
        %v529 = vadd.f32 %v357, %v528
        %v530 = vpop.f32.mrf.mxu0
        %v531 = vadd.f32 %v357, %v530
        %532 = vdwg.mxu0
        %v533 = vmax.f32 %v446, 0.0
        %v534 = vmax.f32 %v448, 0.0
        %v535 = vmax.f32 %v523, 0.0
        %v536 = vmax.f32 %v525, 0.0
        %v537 = vmax.f32 %v452, 0.0
        %v538 = vmax.f32 %v454, 0.0
        %v539 = vmax.f32 %v529, 0.0
        %v540 = vmax.f32 %v531, 0.0
        %vm541 = vcmask 97280
        %v543 = vsel %vm541, %v280, 0
        %vm545 = vcmask 1043456
        %v547 = vsel %vm545, %v537, 0
        %v550 = vsel %vm545, %v538, 0
        %v553 = vsel %vm545, %v539, 0
        %v556 = vsel %vm545, %v540, 0
        %558 = vmatprep.subr.mxu0 0.0
        %559 = vmatpush1.msra.mxu0 0.0
        %560 = vmatprep.subr.mxu0 0.0
        %561 = vmatpush1.msra.mxu0 0.0
        %562 = vmatprep.subr.mxu0 0.0
        %563 = vmatpush1.msra.mxu0 0.0
        %564 = vmatprep.subr.mxu0 0.0
        %565 = vmatpush1.msra.mxu0 0.0
        %566 = vmatprep.subr.mxu0 0.0
        %567 = vmatpush1.msra.mxu0 0.0
        %568 = vmatprep.subr.mxu0 0.0
        %569 = vmatpush1.msra.mxu0 0.0
        %570 = vmatprep.subr.mxu0 0.0
        %571 = vmatpush1.msra.mxu0 0.0
        %572 = vmatprep.subr.mxu0 0.0
        %573 = vmatpush1.msra.mxu0 0.0
        %574 = vmatprep.subr.mxu0 0.0
        %575 = vmatpush1.msra.mxu0 0.0
        %576 = vmatprep.subr.mxu0 0.0
        %577 = vmatpush1.msra.mxu0 0.0
        %578 = vmatprep.subr.mxu0 0.0
        %579 = vmatpush1.msra.mxu0 0.0
        %580 = vmatprep.subr.mxu0 0.0
        %581 = vmatpush1.msra.mxu0 0.0
        %582 = vmatprep.subr.mxu0 0.0
        %583 = vmatpush1.msra.mxu0 0.0
        %584 = vmatprep.subr.mxu0 0.0
        %585 = vmatpush1.msra.mxu0 0.0
        %586 = vmatprep.subr.mxu0 %v550
        %587 = vmatpush1.msra.mxu0 %v547
        %588 = vmatprep.subr.mxu0 %v534
        %589 = vmatpush1.msra.mxu0 %v533
        %590 = vmatprep.subr.mxu0 0.0
        %591 = vmatpush2.msra.mxu0 0.0
        %592 = vmatprep.subr.mxu0 0.0
        %593 = vmatpush2.msra.mxu0 0.0
        %594 = vmatprep.subr.mxu0 0.0
        %595 = vmatpush2.msra.mxu0 0.0
        %596 = vmatprep.subr.mxu0 0.0
        %597 = vmatpush2.msra.mxu0 0.0
        %598 = vmatprep.subr.mxu0 0.0
        %599 = vmatpush2.msra.mxu0 0.0
        %600 = vmatprep.subr.mxu0 0.0
        %601 = vmatpush2.msra.mxu0 0.0
        %602 = vmatprep.subr.mxu0 0.0
        %603 = vmatpush2.msra.mxu0 0.0
        %604 = vmatprep.subr.mxu0 0.0
        %605 = vmatpush2.msra.mxu0 0.0
        %606 = vmatprep.subr.mxu0 0.0
        %607 = vmatpush2.msra.mxu0 0.0
        %608 = vmatprep.subr.mxu0 0.0
        %609 = vmatpush2.msra.mxu0 0.0
        %610 = vmatprep.subr.mxu0 0.0
        %611 = vmatpush2.msra.mxu0 0.0
        %612 = vmatprep.subr.mxu0 0.0
        %613 = vmatpush2.msra.mxu0 0.0
        %614 = vmatprep.subr.mxu0 0.0
        %615 = vmatpush2.msra.mxu0 0.0
        %616 = vmatprep.subr.mxu0 0.0
        %617 = vmatpush2.msra.mxu0 0.0
        %618 = vmatprep.subr.mxu0 0.0
        %619 = vmatpush2.msra.mxu0 0.0
        %620 = vmatprep.subr.mxu0 0.0
        %621 = vmatpush2.msra.mxu0 0.0
        %622 = vmatprep.mubr.f32.mxu0 0.0
        %623 = vmatmul.mubr.f32.gmra.mxu0 %v543
        %v624 = vpop.f32.mrf.mxu0
        %v625 = vadd.f32 0.0, %v624
        %v626 = vpop.f32.mrf.mxu0
        %v627 = vadd.f32 0.0, %v626
        %628 = vdwg.mxu0
        %629 = vmatprep.subr.mxu0 0.0
        %630 = vmatpush1.msra.mxu0 0.0
        %631 = vmatprep.subr.mxu0 0.0
        %632 = vmatpush1.msra.mxu0 0.0
        %633 = vmatprep.subr.mxu0 0.0
        %634 = vmatpush1.msra.mxu0 0.0
        %635 = vmatprep.subr.mxu0 0.0
        %636 = vmatpush1.msra.mxu0 0.0
        %637 = vmatprep.subr.mxu0 0.0
        %638 = vmatpush1.msra.mxu0 0.0
        %639 = vmatprep.subr.mxu0 0.0
        %640 = vmatpush1.msra.mxu0 0.0
        %641 = vmatprep.subr.mxu0 0.0
        %642 = vmatpush1.msra.mxu0 0.0
        %643 = vmatprep.subr.mxu0 0.0
        %644 = vmatpush1.msra.mxu0 0.0
        %645 = vmatprep.subr.mxu0 0.0
        %646 = vmatpush1.msra.mxu0 0.0
        %647 = vmatprep.subr.mxu0 0.0
        %648 = vmatpush1.msra.mxu0 0.0
        %649 = vmatprep.subr.mxu0 0.0
        %650 = vmatpush1.msra.mxu0 0.0
        %651 = vmatprep.subr.mxu0 0.0
        %652 = vmatpush1.msra.mxu0 0.0
        %653 = vmatprep.subr.mxu0 0.0
        %654 = vmatpush1.msra.mxu0 0.0
        %655 = vmatprep.subr.mxu0 0.0
        %656 = vmatpush1.msra.mxu0 0.0
        %657 = vmatprep.subr.mxu0 %v556
        %658 = vmatpush1.msra.mxu0 %v553
        %659 = vmatprep.subr.mxu0 %v536
        %660 = vmatpush1.msra.mxu0 %v535
        %661 = vmatprep.subr.mxu0 0.0
        %662 = vmatpush2.msra.mxu0 0.0
        %663 = vmatprep.subr.mxu0 0.0
        %664 = vmatpush2.msra.mxu0 0.0
        %665 = vmatprep.subr.mxu0 0.0
        %666 = vmatpush2.msra.mxu0 0.0
        %667 = vmatprep.subr.mxu0 0.0
        %668 = vmatpush2.msra.mxu0 0.0
        %669 = vmatprep.subr.mxu0 0.0
        %670 = vmatpush2.msra.mxu0 0.0
        %671 = vmatprep.subr.mxu0 0.0
        %672 = vmatpush2.msra.mxu0 0.0
        %673 = vmatprep.subr.mxu0 0.0
        %674 = vmatpush2.msra.mxu0 0.0
        %675 = vmatprep.subr.mxu0 0.0
        %676 = vmatpush2.msra.mxu0 0.0
        %677 = vmatprep.subr.mxu0 0.0
        %678 = vmatpush2.msra.mxu0 0.0
        %679 = vmatprep.subr.mxu0 0.0
        %680 = vmatpush2.msra.mxu0 0.0
        %681 = vmatprep.subr.mxu0 0.0
        %682 = vmatpush2.msra.mxu0 0.0
        %683 = vmatprep.subr.mxu0 0.0
        %684 = vmatpush2.msra.mxu0 0.0
        %685 = vmatprep.subr.mxu0 0.0
        %686 = vmatpush2.msra.mxu0 0.0
        %687 = vmatprep.subr.mxu0 0.0
        %688 = vmatpush2.msra.mxu0 0.0
        %689 = vmatprep.subr.mxu0 0.0
        %690 = vmatpush2.msra.mxu0 0.0
        %691 = vmatprep.subr.mxu0 0.0
        %692 = vmatpush2.msra.mxu0 0.0
        %693 = vmatprep.mubr.f32.mxu0 0.0
        %694 = vmatmul.mubr.f32.gmra.mxu0 %v543
        %v695 = vpop.f32.mrf.mxu0
        %v696 = vadd.f32 0.0, %v695
        %v697 = vpop.f32.mrf.mxu0
        %v698 = vadd.f32 0.0, %v697
        %699 = vdwg.mxu0
        %701 = vset.pattern.permute.xlu0 0
        %702 = vperm.xlu0 %701, %v284
        %v703 = vpop.permute.xlu0 %702
        %v705 = vadd.f32 %v703, %v625
        %v706 = vadd.f32 %v703, %v627
        %v707 = vadd.f32 %v703, %v696
        %v708 = vadd.f32 %v703, %v698
        %v710 = vsel %vm366, %v313, 0
        %v713 = vsel %vm366, %v314, 0
        %v716 = vsel %vm366, %v315, 0
        %v719 = vsel %vm366, %v316, 0
        %721 = vmatprep.subr.mxu0 0.0
        %722 = vmatpush1.msra.mxu0 0.0
        %723 = vmatprep.subr.mxu0 0.0
        %724 = vmatpush1.msra.mxu0 0.0
        %725 = vmatprep.subr.mxu0 0.0
        %726 = vmatpush1.msra.mxu0 0.0
        %727 = vmatprep.subr.mxu0 0.0
        %728 = vmatpush1.msra.mxu0 0.0
        %729 = vmatprep.subr.mxu0 0.0
        %730 = vmatpush1.msra.mxu0 0.0
        %731 = vmatprep.subr.mxu0 0.0
        %732 = vmatpush1.msra.mxu0 0.0
        %733 = vmatprep.subr.mxu0 0.0
        %734 = vmatpush1.msra.mxu0 0.0
        %735 = vmatprep.subr.mxu0 0.0
        %736 = vmatpush1.msra.mxu0 0.0
        %737 = vmatprep.subr.mxu0 0.0
        %738 = vmatpush1.msra.mxu0 0.0
        %739 = vmatprep.subr.mxu0 0.0
        %740 = vmatpush1.msra.mxu0 0.0
        %741 = vmatprep.subr.mxu0 0.0
        %742 = vmatpush1.msra.mxu0 0.0
        %743 = vmatprep.subr.mxu0 0.0
        %744 = vmatpush1.msra.mxu0 0.0
        %745 = vmatprep.subr.mxu0 %v713
        %746 = vmatpush1.msra.mxu0 %v710
        %747 = vmatprep.subr.mxu0 %v310
        %748 = vmatpush1.msra.mxu0 %v309
        %749 = vmatprep.subr.mxu0 %v306
        %750 = vmatpush1.msra.mxu0 %v305
        %751 = vmatprep.subr.mxu0 %v302
        %752 = vmatpush1.msra.mxu0 %v301
        %753 = vmatprep.subr.mxu0 0.0
        %754 = vmatpush2.msra.mxu0 0.0
        %755 = vmatprep.subr.mxu0 0.0
        %756 = vmatpush2.msra.mxu0 0.0
        %757 = vmatprep.subr.mxu0 0.0
        %758 = vmatpush2.msra.mxu0 0.0
        %759 = vmatprep.subr.mxu0 0.0
        %760 = vmatpush2.msra.mxu0 0.0
        %761 = vmatprep.subr.mxu0 0.0
        %762 = vmatpush2.msra.mxu0 0.0
        %763 = vmatprep.subr.mxu0 0.0
        %764 = vmatpush2.msra.mxu0 0.0
        %765 = vmatprep.subr.mxu0 0.0
        %766 = vmatpush2.msra.mxu0 0.0
        %767 = vmatprep.subr.mxu0 0.0
        %768 = vmatpush2.msra.mxu0 0.0
        %769 = vmatprep.subr.mxu0 0.0
        %770 = vmatpush2.msra.mxu0 0.0
        %771 = vmatprep.subr.mxu0 0.0
        %772 = vmatpush2.msra.mxu0 0.0
        %773 = vmatprep.subr.mxu0 0.0
        %774 = vmatpush2.msra.mxu0 0.0
        %775 = vmatprep.subr.mxu0 0.0
        %776 = vmatpush2.msra.mxu0 0.0
        %777 = vmatprep.subr.mxu0 0.0
        %778 = vmatpush2.msra.mxu0 0.0
        %779 = vmatprep.subr.mxu0 0.0
        %780 = vmatpush2.msra.mxu0 0.0
        %781 = vmatprep.subr.mxu0 0.0
        %782 = vmatpush2.msra.mxu0 0.0
        %783 = vmatprep.subr.mxu0 0.0
        %784 = vmatpush2.msra.mxu0 0.0
        %785 = vmatprep.mubr.f32.mxu0 0.0
        %786 = vmatmul.mubr.f32.gmra.mxu0 %v361
        %v787 = vpop.f32.mrf.mxu0
        %v788 = vadd.f32 %v352, %v787
        %v789 = vpop.f32.mrf.mxu0
        %v790 = vadd.f32 %v352, %v789
        %791 = vmatprep.mubr.f32.mxu0 0.0
        %792 = vmatmul.mubr.f32.gmra.mxu0 %v364
        %v793 = vpop.f32.mrf.mxu0
        %v794 = vadd.f32 %v357, %v793
        %v795 = vpop.f32.mrf.mxu0
        %v796 = vadd.f32 %v357, %v795
        %797 = vdwg.mxu0
        %798 = vmatprep.subr.mxu0 0.0
        %799 = vmatpush1.msra.mxu0 0.0
        %800 = vmatprep.subr.mxu0 0.0
        %801 = vmatpush1.msra.mxu0 0.0
        %802 = vmatprep.subr.mxu0 0.0
        %803 = vmatpush1.msra.mxu0 0.0
        %804 = vmatprep.subr.mxu0 0.0
        %805 = vmatpush1.msra.mxu0 0.0
        %806 = vmatprep.subr.mxu0 0.0
        %807 = vmatpush1.msra.mxu0 0.0
        %808 = vmatprep.subr.mxu0 0.0
        %809 = vmatpush1.msra.mxu0 0.0
        %810 = vmatprep.subr.mxu0 0.0
        %811 = vmatpush1.msra.mxu0 0.0
        %812 = vmatprep.subr.mxu0 0.0
        %813 = vmatpush1.msra.mxu0 0.0
        %814 = vmatprep.subr.mxu0 0.0
        %815 = vmatpush1.msra.mxu0 0.0
        %816 = vmatprep.subr.mxu0 0.0
        %817 = vmatpush1.msra.mxu0 0.0
        %818 = vmatprep.subr.mxu0 0.0
        %819 = vmatpush1.msra.mxu0 0.0
        %820 = vmatprep.subr.mxu0 0.0
        %821 = vmatpush1.msra.mxu0 0.0
        %822 = vmatprep.subr.mxu0 %v719
        %823 = vmatpush1.msra.mxu0 %v716
        %824 = vmatprep.subr.mxu0 %v312
        %825 = vmatpush1.msra.mxu0 %v311
        %826 = vmatprep.subr.mxu0 %v308
        %827 = vmatpush1.msra.mxu0 %v307
        %828 = vmatprep.subr.mxu0 %v304
        %829 = vmatpush1.msra.mxu0 %v303
        %830 = vmatprep.subr.mxu0 0.0
        %831 = vmatpush2.msra.mxu0 0.0
        %832 = vmatprep.subr.mxu0 0.0
        %833 = vmatpush2.msra.mxu0 0.0
        %834 = vmatprep.subr.mxu0 0.0
        %835 = vmatpush2.msra.mxu0 0.0
        %836 = vmatprep.subr.mxu0 0.0
        %837 = vmatpush2.msra.mxu0 0.0
        %838 = vmatprep.subr.mxu0 0.0
        %839 = vmatpush2.msra.mxu0 0.0
        %840 = vmatprep.subr.mxu0 0.0
        %841 = vmatpush2.msra.mxu0 0.0
        %842 = vmatprep.subr.mxu0 0.0
        %843 = vmatpush2.msra.mxu0 0.0
        %844 = vmatprep.subr.mxu0 0.0
        %845 = vmatpush2.msra.mxu0 0.0
        %846 = vmatprep.subr.mxu0 0.0
        %847 = vmatpush2.msra.mxu0 0.0
        %848 = vmatprep.subr.mxu0 0.0
        %849 = vmatpush2.msra.mxu0 0.0
        %850 = vmatprep.subr.mxu0 0.0
        %851 = vmatpush2.msra.mxu0 0.0
        %852 = vmatprep.subr.mxu0 0.0
        %853 = vmatpush2.msra.mxu0 0.0
        %854 = vmatprep.subr.mxu0 0.0
        %855 = vmatpush2.msra.mxu0 0.0
        %856 = vmatprep.subr.mxu0 0.0
        %857 = vmatpush2.msra.mxu0 0.0
        %858 = vmatprep.subr.mxu0 0.0
        %859 = vmatpush2.msra.mxu0 0.0
        %860 = vmatprep.subr.mxu0 0.0
        %861 = vmatpush2.msra.mxu0 0.0
        %862 = vmatprep.mubr.f32.mxu0 0.0
        %863 = vmatmul.mubr.f32.gmra.mxu0 %v361
        %v864 = vpop.f32.mrf.mxu0
        %v865 = vadd.f32 %v352, %v864
        %v866 = vpop.f32.mrf.mxu0
        %v867 = vadd.f32 %v352, %v866
        %868 = vmatprep.mubr.f32.mxu0 0.0
        %869 = vmatmul.mubr.f32.gmra.mxu0 %v364
        %v870 = vpop.f32.mrf.mxu0
        %v871 = vadd.f32 %v357, %v870
        %v872 = vpop.f32.mrf.mxu0
        %v873 = vadd.f32 %v357, %v872
        %874 = vdwg.mxu0
        %v875 = vmax.f32 %v788, 0.0
        %v876 = vmax.f32 %v790, 0.0
        %v877 = vmax.f32 %v865, 0.0
        %v878 = vmax.f32 %v867, 0.0
        %v879 = vmax.f32 %v794, 0.0
        %v880 = vmax.f32 %v796, 0.0
        %v881 = vmax.f32 %v871, 0.0
        %v882 = vmax.f32 %v873, 0.0
        %v884 = vsel %vm541, %v281, 0
        %v887 = vsel %vm545, %v879, 0
        %v890 = vsel %vm545, %v880, 0
        %v893 = vsel %vm545, %v881, 0
        %v896 = vsel %vm545, %v882, 0
        %898 = vmatprep.subr.mxu0 0.0
        %899 = vmatpush1.msra.mxu0 0.0
        %900 = vmatprep.subr.mxu0 0.0
        %901 = vmatpush1.msra.mxu0 0.0
        %902 = vmatprep.subr.mxu0 0.0
        %903 = vmatpush1.msra.mxu0 0.0
        %904 = vmatprep.subr.mxu0 0.0
        %905 = vmatpush1.msra.mxu0 0.0
        %906 = vmatprep.subr.mxu0 0.0
        %907 = vmatpush1.msra.mxu0 0.0
        %908 = vmatprep.subr.mxu0 0.0
        %909 = vmatpush1.msra.mxu0 0.0
        %910 = vmatprep.subr.mxu0 0.0
        %911 = vmatpush1.msra.mxu0 0.0
        %912 = vmatprep.subr.mxu0 0.0
        %913 = vmatpush1.msra.mxu0 0.0
        %914 = vmatprep.subr.mxu0 0.0
        %915 = vmatpush1.msra.mxu0 0.0
        %916 = vmatprep.subr.mxu0 0.0
        %917 = vmatpush1.msra.mxu0 0.0
        %918 = vmatprep.subr.mxu0 0.0
        %919 = vmatpush1.msra.mxu0 0.0
        %920 = vmatprep.subr.mxu0 0.0
        %921 = vmatpush1.msra.mxu0 0.0
        %922 = vmatprep.subr.mxu0 0.0
        %923 = vmatpush1.msra.mxu0 0.0
        %924 = vmatprep.subr.mxu0 0.0
        %925 = vmatpush1.msra.mxu0 0.0
        %926 = vmatprep.subr.mxu0 %v890
        %927 = vmatpush1.msra.mxu0 %v887
        %928 = vmatprep.subr.mxu0 %v876
        %929 = vmatpush1.msra.mxu0 %v875
        %930 = vmatprep.subr.mxu0 0.0
        %931 = vmatpush2.msra.mxu0 0.0
        %932 = vmatprep.subr.mxu0 0.0
        %933 = vmatpush2.msra.mxu0 0.0
        %934 = vmatprep.subr.mxu0 0.0
        %935 = vmatpush2.msra.mxu0 0.0
        %936 = vmatprep.subr.mxu0 0.0
        %937 = vmatpush2.msra.mxu0 0.0
        %938 = vmatprep.subr.mxu0 0.0
        %939 = vmatpush2.msra.mxu0 0.0
        %940 = vmatprep.subr.mxu0 0.0
        %941 = vmatpush2.msra.mxu0 0.0
        %942 = vmatprep.subr.mxu0 0.0
        %943 = vmatpush2.msra.mxu0 0.0
        %944 = vmatprep.subr.mxu0 0.0
        %945 = vmatpush2.msra.mxu0 0.0
        %946 = vmatprep.subr.mxu0 0.0
        %947 = vmatpush2.msra.mxu0 0.0
        %948 = vmatprep.subr.mxu0 0.0
        %949 = vmatpush2.msra.mxu0 0.0
        %950 = vmatprep.subr.mxu0 0.0
        %951 = vmatpush2.msra.mxu0 0.0
        %952 = vmatprep.subr.mxu0 0.0
        %953 = vmatpush2.msra.mxu0 0.0
        %954 = vmatprep.subr.mxu0 0.0
        %955 = vmatpush2.msra.mxu0 0.0
        %956 = vmatprep.subr.mxu0 0.0
        %957 = vmatpush2.msra.mxu0 0.0
        %958 = vmatprep.subr.mxu0 0.0
        %959 = vmatpush2.msra.mxu0 0.0
        %960 = vmatprep.subr.mxu0 0.0
        %961 = vmatpush2.msra.mxu0 0.0
        %962 = vmatprep.mubr.f32.mxu0 0.0
        %963 = vmatmul.mubr.f32.gmra.mxu0 %v884
        %v964 = vpop.f32.mrf.mxu0
        %v965 = vadd.f32 0.0, %v964
        %v966 = vpop.f32.mrf.mxu0
        %v967 = vadd.f32 0.0, %v966
        %968 = vdwg.mxu0
        %969 = vmatprep.subr.mxu0 0.0
        %970 = vmatpush1.msra.mxu0 0.0
        %971 = vmatprep.subr.mxu0 0.0
        %972 = vmatpush1.msra.mxu0 0.0
        %973 = vmatprep.subr.mxu0 0.0
        %974 = vmatpush1.msra.mxu0 0.0
        %975 = vmatprep.subr.mxu0 0.0
        %976 = vmatpush1.msra.mxu0 0.0
        %977 = vmatprep.subr.mxu0 0.0
        %978 = vmatpush1.msra.mxu0 0.0
        %979 = vmatprep.subr.mxu0 0.0
        %980 = vmatpush1.msra.mxu0 0.0
        %981 = vmatprep.subr.mxu0 0.0
        %982 = vmatpush1.msra.mxu0 0.0
        %983 = vmatprep.subr.mxu0 0.0
        %984 = vmatpush1.msra.mxu0 0.0
        %985 = vmatprep.subr.mxu0 0.0
        %986 = vmatpush1.msra.mxu0 0.0
        %987 = vmatprep.subr.mxu0 0.0
        %988 = vmatpush1.msra.mxu0 0.0
        %989 = vmatprep.subr.mxu0 0.0
        %990 = vmatpush1.msra.mxu0 0.0
        %991 = vmatprep.subr.mxu0 0.0
        %992 = vmatpush1.msra.mxu0 0.0
        %993 = vmatprep.subr.mxu0 0.0
        %994 = vmatpush1.msra.mxu0 0.0
        %995 = vmatprep.subr.mxu0 0.0
        %996 = vmatpush1.msra.mxu0 0.0
        %997 = vmatprep.subr.mxu0 %v896
        %998 = vmatpush1.msra.mxu0 %v893
        %999 = vmatprep.subr.mxu0 %v878
        %1000 = vmatpush1.msra.mxu0 %v877
        %1001 = vmatprep.subr.mxu0 0.0
        %1002 = vmatpush2.msra.mxu0 0.0
        %1003 = vmatprep.subr.mxu0 0.0
        %1004 = vmatpush2.msra.mxu0 0.0
        %1005 = vmatprep.subr.mxu0 0.0
        %1006 = vmatpush2.msra.mxu0 0.0
        %1007 = vmatprep.subr.mxu0 0.0
        %1008 = vmatpush2.msra.mxu0 0.0
        %1009 = vmatprep.subr.mxu0 0.0
        %1010 = vmatpush2.msra.mxu0 0.0
        %1011 = vmatprep.subr.mxu0 0.0
        %1012 = vmatpush2.msra.mxu0 0.0
        %1013 = vmatprep.subr.mxu0 0.0
        %1014 = vmatpush2.msra.mxu0 0.0
        %1015 = vmatprep.subr.mxu0 0.0
        %1016 = vmatpush2.msra.mxu0 0.0
        %1017 = vmatprep.subr.mxu0 0.0
        %1018 = vmatpush2.msra.mxu0 0.0
        %1019 = vmatprep.subr.mxu0 0.0
        %1020 = vmatpush2.msra.mxu0 0.0
        %1021 = vmatprep.subr.mxu0 0.0
        %1022 = vmatpush2.msra.mxu0 0.0
        %1023 = vmatprep.subr.mxu0 0.0
        %1024 = vmatpush2.msra.mxu0 0.0
        %1025 = vmatprep.subr.mxu0 0.0
        %1026 = vmatpush2.msra.mxu0 0.0
        %1027 = vmatprep.subr.mxu0 0.0
        %1028 = vmatpush2.msra.mxu0 0.0
        %1029 = vmatprep.subr.mxu0 0.0
        %1030 = vmatpush2.msra.mxu0 0.0
        %1031 = vmatprep.subr.mxu0 0.0
        %1032 = vmatpush2.msra.mxu0 0.0
        %1033 = vmatprep.mubr.f32.mxu0 0.0
        %1034 = vmatmul.mubr.f32.gmra.mxu0 %v884
        %v1035 = vpop.f32.mrf.mxu0
        %v1036 = vadd.f32 0.0, %v1035
        %v1037 = vpop.f32.mrf.mxu0
        %v1038 = vadd.f32 0.0, %v1037
        %1039 = vdwg.mxu0
        %v1040 = vadd.f32 %v705, %v965
        %v1041 = vadd.f32 %v706, %v967
        %v1042 = vadd.f32 %v707, %v1036
        %v1043 = vadd.f32 %v708, %v1038
        %v1045 = vsel %vm366, %v329, 0
        %v1048 = vsel %vm366, %v330, 0
        %v1051 = vsel %vm366, %v331, 0
        %v1054 = vsel %vm366, %v332, 0
        %1056 = vmatprep.subr.mxu0 0.0
        %1057 = vmatpush1.msra.mxu0 0.0
        %1058 = vmatprep.subr.mxu0 0.0
        %1059 = vmatpush1.msra.mxu0 0.0
        %1060 = vmatprep.subr.mxu0 0.0
        %1061 = vmatpush1.msra.mxu0 0.0
        %1062 = vmatprep.subr.mxu0 0.0
        %1063 = vmatpush1.msra.mxu0 0.0
        %1064 = vmatprep.subr.mxu0 0.0
        %1065 = vmatpush1.msra.mxu0 0.0
        %1066 = vmatprep.subr.mxu0 0.0
        %1067 = vmatpush1.msra.mxu0 0.0
        %1068 = vmatprep.subr.mxu0 0.0
        %1069 = vmatpush1.msra.mxu0 0.0
        %1070 = vmatprep.subr.mxu0 0.0
        %1071 = vmatpush1.msra.mxu0 0.0
        %1072 = vmatprep.subr.mxu0 0.0
        %1073 = vmatpush1.msra.mxu0 0.0
        %1074 = vmatprep.subr.mxu0 0.0
        %1075 = vmatpush1.msra.mxu0 0.0
        %1076 = vmatprep.subr.mxu0 0.0
        %1077 = vmatpush1.msra.mxu0 0.0
        %1078 = vmatprep.subr.mxu0 0.0
        %1079 = vmatpush1.msra.mxu0 0.0
        %1080 = vmatprep.subr.mxu0 %v1048
        %1081 = vmatpush1.msra.mxu0 %v1045
        %1082 = vmatprep.subr.mxu0 %v326
        %1083 = vmatpush1.msra.mxu0 %v325
        %1084 = vmatprep.subr.mxu0 %v322
        %1085 = vmatpush1.msra.mxu0 %v321
        %1086 = vmatprep.subr.mxu0 %v318
        %1087 = vmatpush1.msra.mxu0 %v317
        %1088 = vmatprep.subr.mxu0 0.0
        %1089 = vmatpush2.msra.mxu0 0.0
        %1090 = vmatprep.subr.mxu0 0.0
        %1091 = vmatpush2.msra.mxu0 0.0
        %1092 = vmatprep.subr.mxu0 0.0
        %1093 = vmatpush2.msra.mxu0 0.0
        %1094 = vmatprep.subr.mxu0 0.0
        %1095 = vmatpush2.msra.mxu0 0.0
        %1096 = vmatprep.subr.mxu0 0.0
        %1097 = vmatpush2.msra.mxu0 0.0
        %1098 = vmatprep.subr.mxu0 0.0
        %1099 = vmatpush2.msra.mxu0 0.0
        %1100 = vmatprep.subr.mxu0 0.0
        %1101 = vmatpush2.msra.mxu0 0.0
        %1102 = vmatprep.subr.mxu0 0.0
        %1103 = vmatpush2.msra.mxu0 0.0
        %1104 = vmatprep.subr.mxu0 0.0
        %1105 = vmatpush2.msra.mxu0 0.0
        %1106 = vmatprep.subr.mxu0 0.0
        %1107 = vmatpush2.msra.mxu0 0.0
        %1108 = vmatprep.subr.mxu0 0.0
        %1109 = vmatpush2.msra.mxu0 0.0
        %1110 = vmatprep.subr.mxu0 0.0
        %1111 = vmatpush2.msra.mxu0 0.0
        %1112 = vmatprep.subr.mxu0 0.0
        %1113 = vmatpush2.msra.mxu0 0.0
        %1114 = vmatprep.subr.mxu0 0.0
        %1115 = vmatpush2.msra.mxu0 0.0
        %1116 = vmatprep.subr.mxu0 0.0
        %1117 = vmatpush2.msra.mxu0 0.0
        %1118 = vmatprep.subr.mxu0 0.0
        %1119 = vmatpush2.msra.mxu0 0.0
        %1120 = vmatprep.mubr.f32.mxu0 0.0
        %1121 = vmatmul.mubr.f32.gmra.mxu0 %v361
        %v1122 = vpop.f32.mrf.mxu0
        %v1123 = vadd.f32 %v352, %v1122
        %v1124 = vpop.f32.mrf.mxu0
        %v1125 = vadd.f32 %v352, %v1124
        %1126 = vmatprep.mubr.f32.mxu0 0.0
        %1127 = vmatmul.mubr.f32.gmra.mxu0 %v364
        %v1128 = vpop.f32.mrf.mxu0
        %v1129 = vadd.f32 %v357, %v1128
        %v1130 = vpop.f32.mrf.mxu0
        %v1131 = vadd.f32 %v357, %v1130
        %1132 = vdwg.mxu0
        %1133 = vmatprep.subr.mxu0 0.0
        %1134 = vmatpush1.msra.mxu0 0.0
        %1135 = vmatprep.subr.mxu0 0.0
        %1136 = vmatpush1.msra.mxu0 0.0
        %1137 = vmatprep.subr.mxu0 0.0
        %1138 = vmatpush1.msra.mxu0 0.0
        %1139 = vmatprep.subr.mxu0 0.0
        %1140 = vmatpush1.msra.mxu0 0.0
        %1141 = vmatprep.subr.mxu0 0.0
        %1142 = vmatpush1.msra.mxu0 0.0
        %1143 = vmatprep.subr.mxu0 0.0
        %1144 = vmatpush1.msra.mxu0 0.0
        %1145 = vmatprep.subr.mxu0 0.0
        %1146 = vmatpush1.msra.mxu0 0.0
        %1147 = vmatprep.subr.mxu0 0.0
        %1148 = vmatpush1.msra.mxu0 0.0
        %1149 = vmatprep.subr.mxu0 0.0
        %1150 = vmatpush1.msra.mxu0 0.0
        %1151 = vmatprep.subr.mxu0 0.0
        %1152 = vmatpush1.msra.mxu0 0.0
        %1153 = vmatprep.subr.mxu0 0.0
        %1154 = vmatpush1.msra.mxu0 0.0
        %1155 = vmatprep.subr.mxu0 0.0
        %1156 = vmatpush1.msra.mxu0 0.0
        %1157 = vmatprep.subr.mxu0 %v1054
        %1158 = vmatpush1.msra.mxu0 %v1051
        %1159 = vmatprep.subr.mxu0 %v328
        %1160 = vmatpush1.msra.mxu0 %v327
        %1161 = vmatprep.subr.mxu0 %v324
        %1162 = vmatpush1.msra.mxu0 %v323
        %1163 = vmatprep.subr.mxu0 %v320
        %1164 = vmatpush1.msra.mxu0 %v319
        %1165 = vmatprep.subr.mxu0 0.0
        %1166 = vmatpush2.msra.mxu0 0.0
        %1167 = vmatprep.subr.mxu0 0.0
        %1168 = vmatpush2.msra.mxu0 0.0
        %1169 = vmatprep.subr.mxu0 0.0
        %1170 = vmatpush2.msra.mxu0 0.0
        %1171 = vmatprep.subr.mxu0 0.0
        %1172 = vmatpush2.msra.mxu0 0.0
        %1173 = vmatprep.subr.mxu0 0.0
        %1174 = vmatpush2.msra.mxu0 0.0
        %1175 = vmatprep.subr.mxu0 0.0
        %1176 = vmatpush2.msra.mxu0 0.0
        %1177 = vmatprep.subr.mxu0 0.0
        %1178 = vmatpush2.msra.mxu0 0.0
        %1179 = vmatprep.subr.mxu0 0.0
        %1180 = vmatpush2.msra.mxu0 0.0
        %1181 = vmatprep.subr.mxu0 0.0
        %1182 = vmatpush2.msra.mxu0 0.0
        %1183 = vmatprep.subr.mxu0 0.0
        %1184 = vmatpush2.msra.mxu0 0.0
        %1185 = vmatprep.subr.mxu0 0.0
        %1186 = vmatpush2.msra.mxu0 0.0
        %1187 = vmatprep.subr.mxu0 0.0
        %1188 = vmatpush2.msra.mxu0 0.0
        %1189 = vmatprep.subr.mxu0 0.0
        %1190 = vmatpush2.msra.mxu0 0.0
        %1191 = vmatprep.subr.mxu0 0.0
        %1192 = vmatpush2.msra.mxu0 0.0
        %1193 = vmatprep.subr.mxu0 0.0
        %1194 = vmatpush2.msra.mxu0 0.0
        %1195 = vmatprep.subr.mxu0 0.0
        %1196 = vmatpush2.msra.mxu0 0.0
        %1197 = vmatprep.mubr.f32.mxu0 0.0
        %1198 = vmatmul.mubr.f32.gmra.mxu0 %v361
        %v1199 = vpop.f32.mrf.mxu0
        %v1200 = vadd.f32 %v352, %v1199
        %v1201 = vpop.f32.mrf.mxu0
        %v1202 = vadd.f32 %v352, %v1201
        %1203 = vmatprep.mubr.f32.mxu0 0.0
        %1204 = vmatmul.mubr.f32.gmra.mxu0 %v364
        %v1205 = vpop.f32.mrf.mxu0
        %v1206 = vadd.f32 %v357, %v1205
        %v1207 = vpop.f32.mrf.mxu0
        %v1208 = vadd.f32 %v357, %v1207
        %1209 = vdwg.mxu0
        %v1210 = vmax.f32 %v1123, 0.0
        %v1211 = vmax.f32 %v1125, 0.0
        %v1212 = vmax.f32 %v1200, 0.0
        %v1213 = vmax.f32 %v1202, 0.0
        %v1214 = vmax.f32 %v1129, 0.0
        %v1215 = vmax.f32 %v1131, 0.0
        %v1216 = vmax.f32 %v1206, 0.0
        %v1217 = vmax.f32 %v1208, 0.0
        %v1219 = vsel %vm541, %v282, 0
        %v1222 = vsel %vm545, %v1214, 0
        %v1225 = vsel %vm545, %v1215, 0
        %v1228 = vsel %vm545, %v1216, 0
        %v1231 = vsel %vm545, %v1217, 0
        %1233 = vmatprep.subr.mxu0 0.0
        %1234 = vmatpush1.msra.mxu0 0.0
        %1235 = vmatprep.subr.mxu0 0.0
        %1236 = vmatpush1.msra.mxu0 0.0
        %1237 = vmatprep.subr.mxu0 0.0
        %1238 = vmatpush1.msra.mxu0 0.0
        %1239 = vmatprep.subr.mxu0 0.0
        %1240 = vmatpush1.msra.mxu0 0.0
        %1241 = vmatprep.subr.mxu0 0.0
        %1242 = vmatpush1.msra.mxu0 0.0
        %1243 = vmatprep.subr.mxu0 0.0
        %1244 = vmatpush1.msra.mxu0 0.0
        %1245 = vmatprep.subr.mxu0 0.0
        %1246 = vmatpush1.msra.mxu0 0.0
        %1247 = vmatprep.subr.mxu0 0.0
        %1248 = vmatpush1.msra.mxu0 0.0
        %1249 = vmatprep.subr.mxu0 0.0
        %1250 = vmatpush1.msra.mxu0 0.0
        %1251 = vmatprep.subr.mxu0 0.0
        %1252 = vmatpush1.msra.mxu0 0.0
        %1253 = vmatprep.subr.mxu0 0.0
        %1254 = vmatpush1.msra.mxu0 0.0
        %1255 = vmatprep.subr.mxu0 0.0
        %1256 = vmatpush1.msra.mxu0 0.0
        %1257 = vmatprep.subr.mxu0 0.0
        %1258 = vmatpush1.msra.mxu0 0.0
        %1259 = vmatprep.subr.mxu0 0.0
        %1260 = vmatpush1.msra.mxu0 0.0
        %1261 = vmatprep.subr.mxu0 %v1225
        %1262 = vmatpush1.msra.mxu0 %v1222
        %1263 = vmatprep.subr.mxu0 %v1211
        %1264 = vmatpush1.msra.mxu0 %v1210
        %1265 = vmatprep.subr.mxu0 0.0
        %1266 = vmatpush2.msra.mxu0 0.0
        %1267 = vmatprep.subr.mxu0 0.0
        %1268 = vmatpush2.msra.mxu0 0.0
        %1269 = vmatprep.subr.mxu0 0.0
        %1270 = vmatpush2.msra.mxu0 0.0
        %1271 = vmatprep.subr.mxu0 0.0
        %1272 = vmatpush2.msra.mxu0 0.0
        %1273 = vmatprep.subr.mxu0 0.0
        %1274 = vmatpush2.msra.mxu0 0.0
        %1275 = vmatprep.subr.mxu0 0.0
        %1276 = vmatpush2.msra.mxu0 0.0
        %1277 = vmatprep.subr.mxu0 0.0
        %1278 = vmatpush2.msra.mxu0 0.0
        %1279 = vmatprep.subr.mxu0 0.0
        %1280 = vmatpush2.msra.mxu0 0.0
        %1281 = vmatprep.subr.mxu0 0.0
        %1282 = vmatpush2.msra.mxu0 0.0
        %1283 = vmatprep.subr.mxu0 0.0
        %1284 = vmatpush2.msra.mxu0 0.0
        %1285 = vmatprep.subr.mxu0 0.0
        %1286 = vmatpush2.msra.mxu0 0.0
        %1287 = vmatprep.subr.mxu0 0.0
        %1288 = vmatpush2.msra.mxu0 0.0
        %1289 = vmatprep.subr.mxu0 0.0
        %1290 = vmatpush2.msra.mxu0 0.0
        %1291 = vmatprep.subr.mxu0 0.0
        %1292 = vmatpush2.msra.mxu0 0.0
        %1293 = vmatprep.subr.mxu0 0.0
        %1294 = vmatpush2.msra.mxu0 0.0
        %1295 = vmatprep.subr.mxu0 0.0
        %1296 = vmatpush2.msra.mxu0 0.0
        %1297 = vmatprep.mubr.f32.mxu0 0.0
        %1298 = vmatmul.mubr.f32.gmra.mxu0 %v1219
        %v1299 = vpop.f32.mrf.mxu0
        %v1300 = vadd.f32 0.0, %v1299
        %v1301 = vpop.f32.mrf.mxu0
        %v1302 = vadd.f32 0.0, %v1301
        %1303 = vdwg.mxu0
        %1304 = vmatprep.subr.mxu0 0.0
        %1305 = vmatpush1.msra.mxu0 0.0
        %1306 = vmatprep.subr.mxu0 0.0
        %1307 = vmatpush1.msra.mxu0 0.0
        %1308 = vmatprep.subr.mxu0 0.0
        %1309 = vmatpush1.msra.mxu0 0.0
        %1310 = vmatprep.subr.mxu0 0.0
        %1311 = vmatpush1.msra.mxu0 0.0
        %1312 = vmatprep.subr.mxu0 0.0
        %1313 = vmatpush1.msra.mxu0 0.0
        %1314 = vmatprep.subr.mxu0 0.0
        %1315 = vmatpush1.msra.mxu0 0.0
        %1316 = vmatprep.subr.mxu0 0.0
        %1317 = vmatpush1.msra.mxu0 0.0
        %1318 = vmatprep.subr.mxu0 0.0
        %1319 = vmatpush1.msra.mxu0 0.0
        %1320 = vmatprep.subr.mxu0 0.0
        %1321 = vmatpush1.msra.mxu0 0.0
        %1322 = vmatprep.subr.mxu0 0.0
        %1323 = vmatpush1.msra.mxu0 0.0
        %1324 = vmatprep.subr.mxu0 0.0
        %1325 = vmatpush1.msra.mxu0 0.0
        %1326 = vmatprep.subr.mxu0 0.0
        %1327 = vmatpush1.msra.mxu0 0.0
        %1328 = vmatprep.subr.mxu0 0.0
        %1329 = vmatpush1.msra.mxu0 0.0
        %1330 = vmatprep.subr.mxu0 0.0
        %1331 = vmatpush1.msra.mxu0 0.0
        %1332 = vmatprep.subr.mxu0 %v1231
        %1333 = vmatpush1.msra.mxu0 %v1228
        %1334 = vmatprep.subr.mxu0 %v1213
        %1335 = vmatpush1.msra.mxu0 %v1212
        %1336 = vmatprep.subr.mxu0 0.0
        %1337 = vmatpush2.msra.mxu0 0.0
        %1338 = vmatprep.subr.mxu0 0.0
        %1339 = vmatpush2.msra.mxu0 0.0
        %1340 = vmatprep.subr.mxu0 0.0
        %1341 = vmatpush2.msra.mxu0 0.0
        %1342 = vmatprep.subr.mxu0 0.0
        %1343 = vmatpush2.msra.mxu0 0.0
        %1344 = vmatprep.subr.mxu0 0.0
        %1345 = vmatpush2.msra.mxu0 0.0
        %1346 = vmatprep.subr.mxu0 0.0
        %1347 = vmatpush2.msra.mxu0 0.0
        %1348 = vmatprep.subr.mxu0 0.0
        %1349 = vmatpush2.msra.mxu0 0.0
        %1350 = vmatprep.subr.mxu0 0.0
        %1351 = vmatpush2.msra.mxu0 0.0
        %1352 = vmatprep.subr.mxu0 0.0
        %1353 = vmatpush2.msra.mxu0 0.0
        %1354 = vmatprep.subr.mxu0 0.0
        %1355 = vmatpush2.msra.mxu0 0.0
        %1356 = vmatprep.subr.mxu0 0.0
        %1357 = vmatpush2.msra.mxu0 0.0
        %1358 = vmatprep.subr.mxu0 0.0
        %1359 = vmatpush2.msra.mxu0 0.0
        %1360 = vmatprep.subr.mxu0 0.0
        %1361 = vmatpush2.msra.mxu0 0.0
        %1362 = vmatprep.subr.mxu0 0.0
        %1363 = vmatpush2.msra.mxu0 0.0
        %1364 = vmatprep.subr.mxu0 0.0
        %1365 = vmatpush2.msra.mxu0 0.0
        %1366 = vmatprep.subr.mxu0 0.0
        %1367 = vmatpush2.msra.mxu0 0.0
        %1368 = vmatprep.mubr.f32.mxu0 0.0
        %1369 = vmatmul.mubr.f32.gmra.mxu0 %v1219
        %v1370 = vpop.f32.mrf.mxu0
        %v1371 = vadd.f32 0.0, %v1370
        %v1372 = vpop.f32.mrf.mxu0
        %v1373 = vadd.f32 0.0, %v1372
        %1374 = vdwg.mxu0
        %v1375 = vadd.f32 %v1040, %v1300
        %v1376 = vadd.f32 %v1041, %v1302
        %v1377 = vadd.f32 %v1042, %v1371
        %v1378 = vadd.f32 %v1043, %v1373
        %v1380 = vsel %vm366, %v345, 0
        %v1383 = vsel %vm366, %v346, 0
        %v1386 = vsel %vm366, %v347, 0
        %v1389 = vsel %vm366, %v348, 0
        %1391 = vmatprep.subr.mxu0 0.0
        %1392 = vmatpush1.msra.mxu0 0.0
        %1393 = vmatprep.subr.mxu0 0.0
        %1394 = vmatpush1.msra.mxu0 0.0
        %1395 = vmatprep.subr.mxu0 0.0
        %1396 = vmatpush1.msra.mxu0 0.0
        %1397 = vmatprep.subr.mxu0 0.0
        %1398 = vmatpush1.msra.mxu0 0.0
        %1399 = vmatprep.subr.mxu0 0.0
        %1400 = vmatpush1.msra.mxu0 0.0
        %1401 = vmatprep.subr.mxu0 0.0
        %1402 = vmatpush1.msra.mxu0 0.0
        %1403 = vmatprep.subr.mxu0 0.0
        %1404 = vmatpush1.msra.mxu0 0.0
        %1405 = vmatprep.subr.mxu0 0.0
        %1406 = vmatpush1.msra.mxu0 0.0
        %1407 = vmatprep.subr.mxu0 0.0
        %1408 = vmatpush1.msra.mxu0 0.0
        %1409 = vmatprep.subr.mxu0 0.0
        %1410 = vmatpush1.msra.mxu0 0.0
        %1411 = vmatprep.subr.mxu0 0.0
        %1412 = vmatpush1.msra.mxu0 0.0
        %1413 = vmatprep.subr.mxu0 0.0
        %1414 = vmatpush1.msra.mxu0 0.0
        %1415 = vmatprep.subr.mxu0 %v1383
        %1416 = vmatpush1.msra.mxu0 %v1380
        %1417 = vmatprep.subr.mxu0 %v342
        %1418 = vmatpush1.msra.mxu0 %v341
        %1419 = vmatprep.subr.mxu0 %v338
        %1420 = vmatpush1.msra.mxu0 %v337
        %1421 = vmatprep.subr.mxu0 %v334
        %1422 = vmatpush1.msra.mxu0 %v333
        %1423 = vmatprep.subr.mxu0 0.0
        %1424 = vmatpush2.msra.mxu0 0.0
        %1425 = vmatprep.subr.mxu0 0.0
        %1426 = vmatpush2.msra.mxu0 0.0
        %1427 = vmatprep.subr.mxu0 0.0
        %1428 = vmatpush2.msra.mxu0 0.0
        %1429 = vmatprep.subr.mxu0 0.0
        %1430 = vmatpush2.msra.mxu0 0.0
        %1431 = vmatprep.subr.mxu0 0.0
        %1432 = vmatpush2.msra.mxu0 0.0
        %1433 = vmatprep.subr.mxu0 0.0
        %1434 = vmatpush2.msra.mxu0 0.0
        %1435 = vmatprep.subr.mxu0 0.0
        %1436 = vmatpush2.msra.mxu0 0.0
        %1437 = vmatprep.subr.mxu0 0.0
        %1438 = vmatpush2.msra.mxu0 0.0
        %1439 = vmatprep.subr.mxu0 0.0
        %1440 = vmatpush2.msra.mxu0 0.0
        %1441 = vmatprep.subr.mxu0 0.0
        %1442 = vmatpush2.msra.mxu0 0.0
        %1443 = vmatprep.subr.mxu0 0.0
        %1444 = vmatpush2.msra.mxu0 0.0
        %1445 = vmatprep.subr.mxu0 0.0
        %1446 = vmatpush2.msra.mxu0 0.0
        %1447 = vmatprep.subr.mxu0 0.0
        %1448 = vmatpush2.msra.mxu0 0.0
        %1449 = vmatprep.subr.mxu0 0.0
        %1450 = vmatpush2.msra.mxu0 0.0
        %1451 = vmatprep.subr.mxu0 0.0
        %1452 = vmatpush2.msra.mxu0 0.0
        %1453 = vmatprep.subr.mxu0 0.0
        %1454 = vmatpush2.msra.mxu0 0.0
        %1455 = vmatprep.mubr.f32.mxu0 0.0
        %1456 = vmatmul.mubr.f32.gmra.mxu0 %v361
        %v1457 = vpop.f32.mrf.mxu0
        %v1458 = vadd.f32 %v352, %v1457
        %v1459 = vpop.f32.mrf.mxu0
        %v1460 = vadd.f32 %v352, %v1459
        %1461 = vmatprep.mubr.f32.mxu0 0.0
        %1462 = vmatmul.mubr.f32.gmra.mxu0 %v364
        %v1463 = vpop.f32.mrf.mxu0
        %v1464 = vadd.f32 %v357, %v1463
        %v1465 = vpop.f32.mrf.mxu0
        %v1466 = vadd.f32 %v357, %v1465
        %1467 = vdwg.mxu0
        %1468 = vmatprep.subr.mxu0 0.0
        %1469 = vmatpush1.msra.mxu0 0.0
        %1470 = vmatprep.subr.mxu0 0.0
        %1471 = vmatpush1.msra.mxu0 0.0
        %1472 = vmatprep.subr.mxu0 0.0
        %1473 = vmatpush1.msra.mxu0 0.0
        %1474 = vmatprep.subr.mxu0 0.0
        %1475 = vmatpush1.msra.mxu0 0.0
        %1476 = vmatprep.subr.mxu0 0.0
        %1477 = vmatpush1.msra.mxu0 0.0
        %1478 = vmatprep.subr.mxu0 0.0
        %1479 = vmatpush1.msra.mxu0 0.0
        %1480 = vmatprep.subr.mxu0 0.0
        %1481 = vmatpush1.msra.mxu0 0.0
        %1482 = vmatprep.subr.mxu0 0.0
        %1483 = vmatpush1.msra.mxu0 0.0
        %1484 = vmatprep.subr.mxu0 0.0
        %1485 = vmatpush1.msra.mxu0 0.0
        %1486 = vmatprep.subr.mxu0 0.0
        %1487 = vmatpush1.msra.mxu0 0.0
        %1488 = vmatprep.subr.mxu0 0.0
        %1489 = vmatpush1.msra.mxu0 0.0
        %1490 = vmatprep.subr.mxu0 0.0
        %1491 = vmatpush1.msra.mxu0 0.0
        %1492 = vmatprep.subr.mxu0 %v1389
        %1493 = vmatpush1.msra.mxu0 %v1386
        %1494 = vmatprep.subr.mxu0 %v344
        %1495 = vmatpush1.msra.mxu0 %v343
        %1496 = vmatprep.subr.mxu0 %v340
        %1497 = vmatpush1.msra.mxu0 %v339
        %1498 = vmatprep.subr.mxu0 %v336
        %1499 = vmatpush1.msra.mxu0 %v335
        %1500 = vmatprep.subr.mxu0 0.0
        %1501 = vmatpush2.msra.mxu0 0.0
        %1502 = vmatprep.subr.mxu0 0.0
        %1503 = vmatpush2.msra.mxu0 0.0
        %1504 = vmatprep.subr.mxu0 0.0
        %1505 = vmatpush2.msra.mxu0 0.0
        %1506 = vmatprep.subr.mxu0 0.0
        %1507 = vmatpush2.msra.mxu0 0.0
        %1508 = vmatprep.subr.mxu0 0.0
        %1509 = vmatpush2.msra.mxu0 0.0
        %1510 = vmatprep.subr.mxu0 0.0
        %1511 = vmatpush2.msra.mxu0 0.0
        %1512 = vmatprep.subr.mxu0 0.0
        %1513 = vmatpush2.msra.mxu0 0.0
        %1514 = vmatprep.subr.mxu0 0.0
        %1515 = vmatpush2.msra.mxu0 0.0
        %1516 = vmatprep.subr.mxu0 0.0
        %1517 = vmatpush2.msra.mxu0 0.0
        %1518 = vmatprep.subr.mxu0 0.0
        %1519 = vmatpush2.msra.mxu0 0.0
        %1520 = vmatprep.subr.mxu0 0.0
        %1521 = vmatpush2.msra.mxu0 0.0
        %1522 = vmatprep.subr.mxu0 0.0
        %1523 = vmatpush2.msra.mxu0 0.0
        %1524 = vmatprep.subr.mxu0 0.0
        %1525 = vmatpush2.msra.mxu0 0.0
        %1526 = vmatprep.subr.mxu0 0.0
        %1527 = vmatpush2.msra.mxu0 0.0
        %1528 = vmatprep.subr.mxu0 0.0
        %1529 = vmatpush2.msra.mxu0 0.0
        %1530 = vmatprep.subr.mxu0 0.0
        %1531 = vmatpush2.msra.mxu0 0.0
        %1532 = vmatprep.mubr.f32.mxu0 0.0
        %1533 = vmatmul.mubr.f32.gmra.mxu0 %v361
        %v1534 = vpop.f32.mrf.mxu0
        %v1535 = vadd.f32 %v352, %v1534
        %v1536 = vpop.f32.mrf.mxu0
        %v1537 = vadd.f32 %v352, %v1536
        %1538 = vmatprep.mubr.f32.mxu0 0.0
        %1539 = vmatmul.mubr.f32.gmra.mxu0 %v364
        %v1540 = vpop.f32.mrf.mxu0
        %v1541 = vadd.f32 %v357, %v1540
        %v1542 = vpop.f32.mrf.mxu0
        %v1543 = vadd.f32 %v357, %v1542
        %1544 = vdwg.mxu0
        %v1545 = vmax.f32 %v1458, 0.0
        %v1546 = vmax.f32 %v1460, 0.0
        %v1547 = vmax.f32 %v1535, 0.0
        %v1548 = vmax.f32 %v1537, 0.0
        %v1549 = vmax.f32 %v1464, 0.0
        %v1550 = vmax.f32 %v1466, 0.0
        %v1551 = vmax.f32 %v1541, 0.0
        %v1552 = vmax.f32 %v1543, 0.0
        %v1554 = vsel %vm541, %v283, 0
        %v1557 = vsel %vm545, %v1549, 0
        %v1560 = vsel %vm545, %v1550, 0
        %v1563 = vsel %vm545, %v1551, 0
        %v1566 = vsel %vm545, %v1552, 0
        %1568 = vmatprep.subr.mxu0 0.0
        %1569 = vmatpush1.msra.mxu0 0.0
        %1570 = vmatprep.subr.mxu0 0.0
        %1571 = vmatpush1.msra.mxu0 0.0
        %1572 = vmatprep.subr.mxu0 0.0
        %1573 = vmatpush1.msra.mxu0 0.0
        %1574 = vmatprep.subr.mxu0 0.0
        %1575 = vmatpush1.msra.mxu0 0.0
        %1576 = vmatprep.subr.mxu0 0.0
        %1577 = vmatpush1.msra.mxu0 0.0
        %1578 = vmatprep.subr.mxu0 0.0
        %1579 = vmatpush1.msra.mxu0 0.0
        %1580 = vmatprep.subr.mxu0 0.0
        %1581 = vmatpush1.msra.mxu0 0.0
        %1582 = vmatprep.subr.mxu0 0.0
        %1583 = vmatpush1.msra.mxu0 0.0
        %1584 = vmatprep.subr.mxu0 0.0
        %1585 = vmatpush1.msra.mxu0 0.0
        %1586 = vmatprep.subr.mxu0 0.0
        %1587 = vmatpush1.msra.mxu0 0.0
        %1588 = vmatprep.subr.mxu0 0.0
        %1589 = vmatpush1.msra.mxu0 0.0
        %1590 = vmatprep.subr.mxu0 0.0
        %1591 = vmatpush1.msra.mxu0 0.0
        %1592 = vmatprep.subr.mxu0 0.0
        %1593 = vmatpush1.msra.mxu0 0.0
        %1594 = vmatprep.subr.mxu0 0.0
        %1595 = vmatpush1.msra.mxu0 0.0
        %1596 = vmatprep.subr.mxu0 %v1560
        %1597 = vmatpush1.msra.mxu0 %v1557
        %1598 = vmatprep.subr.mxu0 %v1546
        %1599 = vmatpush1.msra.mxu0 %v1545
        %1600 = vmatprep.subr.mxu0 0.0
        %1601 = vmatpush2.msra.mxu0 0.0
        %1602 = vmatprep.subr.mxu0 0.0
        %1603 = vmatpush2.msra.mxu0 0.0
        %1604 = vmatprep.subr.mxu0 0.0
        %1605 = vmatpush2.msra.mxu0 0.0
        %1606 = vmatprep.subr.mxu0 0.0
        %1607 = vmatpush2.msra.mxu0 0.0
        %1608 = vmatprep.subr.mxu0 0.0
        %1609 = vmatpush2.msra.mxu0 0.0
        %1610 = vmatprep.subr.mxu0 0.0
        %1611 = vmatpush2.msra.mxu0 0.0
        %1612 = vmatprep.subr.mxu0 0.0
        %1613 = vmatpush2.msra.mxu0 0.0
        %1614 = vmatprep.subr.mxu0 0.0
        %1615 = vmatpush2.msra.mxu0 0.0
        %1616 = vmatprep.subr.mxu0 0.0
        %1617 = vmatpush2.msra.mxu0 0.0
        %1618 = vmatprep.subr.mxu0 0.0
        %1619 = vmatpush2.msra.mxu0 0.0
        %1620 = vmatprep.subr.mxu0 0.0
        %1621 = vmatpush2.msra.mxu0 0.0
        %1622 = vmatprep.subr.mxu0 0.0
        %1623 = vmatpush2.msra.mxu0 0.0
        %1624 = vmatprep.subr.mxu0 0.0
        %1625 = vmatpush2.msra.mxu0 0.0
        %1626 = vmatprep.subr.mxu0 0.0
        %1627 = vmatpush2.msra.mxu0 0.0
        %1628 = vmatprep.subr.mxu0 0.0
        %1629 = vmatpush2.msra.mxu0 0.0
        %1630 = vmatprep.subr.mxu0 0.0
        %1631 = vmatpush2.msra.mxu0 0.0
        %1632 = vmatprep.mubr.f32.mxu0 0.0
        %1633 = vmatmul.mubr.f32.gmra.mxu0 %v1554
        %v1634 = vpop.f32.mrf.mxu0
        %v1635 = vadd.f32 0.0, %v1634
        %v1636 = vpop.f32.mrf.mxu0
        %v1637 = vadd.f32 0.0, %v1636
        %1638 = vdwg.mxu0
        %1639 = vmatprep.subr.mxu0 0.0
        %1640 = vmatpush1.msra.mxu0 0.0
        %1641 = vmatprep.subr.mxu0 0.0
        %1642 = vmatpush1.msra.mxu0 0.0
        %1643 = vmatprep.subr.mxu0 0.0
        %1644 = vmatpush1.msra.mxu0 0.0
        %1645 = vmatprep.subr.mxu0 0.0
        %1646 = vmatpush1.msra.mxu0 0.0
        %1647 = vmatprep.subr.mxu0 0.0
        %1648 = vmatpush1.msra.mxu0 0.0
        %1649 = vmatprep.subr.mxu0 0.0
        %1650 = vmatpush1.msra.mxu0 0.0
        %1651 = vmatprep.subr.mxu0 0.0
        %1652 = vmatpush1.msra.mxu0 0.0
        %1653 = vmatprep.subr.mxu0 0.0
        %1654 = vmatpush1.msra.mxu0 0.0
        %1655 = vmatprep.subr.mxu0 0.0
        %1656 = vmatpush1.msra.mxu0 0.0
        %1657 = vmatprep.subr.mxu0 0.0
        %1658 = vmatpush1.msra.mxu0 0.0
        %1659 = vmatprep.subr.mxu0 0.0
        %1660 = vmatpush1.msra.mxu0 0.0
        %1661 = vmatprep.subr.mxu0 0.0
        %1662 = vmatpush1.msra.mxu0 0.0
        %1663 = vmatprep.subr.mxu0 0.0
        %1664 = vmatpush1.msra.mxu0 0.0
        %1665 = vmatprep.subr.mxu0 0.0
        %1666 = vmatpush1.msra.mxu0 0.0
        %1667 = vmatprep.subr.mxu0 %v1566
        %1668 = vmatpush1.msra.mxu0 %v1563
        %1669 = vmatprep.subr.mxu0 %v1548
        %1670 = vmatpush1.msra.mxu0 %v1547
        %1671 = vmatprep.subr.mxu0 0.0
        %1672 = vmatpush2.msra.mxu0 0.0
        %1673 = vmatprep.subr.mxu0 0.0
        %1674 = vmatpush2.msra.mxu0 0.0
        %1675 = vmatprep.subr.mxu0 0.0
        %1676 = vmatpush2.msra.mxu0 0.0
        %1677 = vmatprep.subr.mxu0 0.0
        %1678 = vmatpush2.msra.mxu0 0.0
        %1679 = vmatprep.subr.mxu0 0.0
        %1680 = vmatpush2.msra.mxu0 0.0
        %1681 = vmatprep.subr.mxu0 0.0
        %1682 = vmatpush2.msra.mxu0 0.0
        %1683 = vmatprep.subr.mxu0 0.0
        %1684 = vmatpush2.msra.mxu0 0.0
        %1685 = vmatprep.subr.mxu0 0.0
        %1686 = vmatpush2.msra.mxu0 0.0
        %1687 = vmatprep.subr.mxu0 0.0
        %1688 = vmatpush2.msra.mxu0 0.0
        %1689 = vmatprep.subr.mxu0 0.0
        %1690 = vmatpush2.msra.mxu0 0.0
        %1691 = vmatprep.subr.mxu0 0.0
        %1692 = vmatpush2.msra.mxu0 0.0
        %1693 = vmatprep.subr.mxu0 0.0
        %1694 = vmatpush2.msra.mxu0 0.0
        %1695 = vmatprep.subr.mxu0 0.0
        %1696 = vmatpush2.msra.mxu0 0.0
        %1697 = vmatprep.subr.mxu0 0.0
        %1698 = vmatpush2.msra.mxu0 0.0
        %1699 = vmatprep.subr.mxu0 0.0
        %1700 = vmatpush2.msra.mxu0 0.0
        %1701 = vmatprep.subr.mxu0 0.0
        %1702 = vmatpush2.msra.mxu0 0.0
        %1703 = vmatprep.mubr.f32.mxu0 0.0
        %1704 = vmatmul.mubr.f32.gmra.mxu0 %v1554
        %v1705 = vpop.f32.mrf.mxu0
        %v1706 = vadd.f32 0.0, %v1705
        %v1707 = vpop.f32.mrf.mxu0
        %v1708 = vadd.f32 0.0, %v1707
        %1709 = vdwg.mxu0
        %v1710 = vadd.f32 %v1375, %v1635
        %v1711 = vadd.f32 %v1376, %v1637
        %v1712 = vadd.f32 %v1377, %v1706
        %v1713 = vadd.f32 %v1378, %v1708
        %v1714 = vmax.f32 %v1710, 0.0
        %v1715 = vmax.f32 %v1711, 0.0
        %v1716 = vmax.f32 %v1712, 0.0
        %v1717 = vmax.f32 %v1713, 0.0
        %v1718 = vld [vmem:[%s6] sm:$0x1]
        %v1719 = vld [vmem:[%s5] sm:$0xff]
        %v1720 = vld [vmem:[%s5 + $0x8] sm:$0xff]
        %v1721 = vld [vmem:[%s5 + $0x10] sm:$0xff]
        %v1722 = vld [vmem:[%s5 + $0x18] sm:$0xff]
        %v1723 = vld [vmem:[%s5 + $0x20] sm:$0xff]
        %v1724 = vld [vmem:[%s5 + $0x28] sm:$0xff]
        %v1725 = vld [vmem:[%s5 + $0x30] sm:$0xff]
        %v1726 = vld [vmem:[%s5 + $0x38] sm:$0xff]
        %v1727 = vld [vmem:[%s5 + $0x40] sm:$0xff]
        %v1728 = vld [vmem:[%s5 + $0x48] sm:$0xff]
        %v1729 = vld [vmem:[%s5 + $0x50] sm:$0xff]
        %v1730 = vld [vmem:[%s5 + $0x58] sm:$0xff]
        %v1731 = vld [vmem:[%s5 + $0x60] sm:$0xff]
        %v1732 = vld [vmem:[%s5 + $0x68] sm:$0xff]
        %v1733 = vld [vmem:[%s5 + $0x70] sm:$0xff]
        %v1734 = vld [vmem:[%s5 + $0x78] sm:$0xff]
        %v1735 = vld [vmem:[%s5 + $0x80] sm:$0xff]
        %v1736 = vld [vmem:[%s5 + $0x88] sm:$0xff]
        %v1737 = vld [vmem:[%s5 + $0x90] sm:$0xff]
        %v1738 = vld [vmem:[%s5 + $0x98] sm:$0xff]
        %v1739 = vld [vmem:[%s5 + $0xa0] sm:$0xff]
        %v1740 = vld [vmem:[%s5 + $0xa8] sm:$0xff]
        %v1741 = vld [vmem:[%s5 + $0xb0] sm:$0xff]
        %v1742 = vld [vmem:[%s5 + $0xb8] sm:$0xff]
        %v1743 = vld [vmem:[%s5 + $0xc0] sm:$0xff]
        %v1744 = vld [vmem:[%s5 + $0xc8] sm:$0xff]
        %v1745 = vld [vmem:[%s5 + $0xd0] sm:$0xff]
        %v1746 = vld [vmem:[%s5 + $0xd8] sm:$0xff]
        %v1747 = vld [vmem:[%s5 + $0xe0] sm:$0xff]
        %v1748 = vld [vmem:[%s5 + $0xe8] sm:$0xff]
        %v1749 = vld [vmem:[%s5 + $0xf0] sm:$0xff]
        %v1750 = vld [vmem:[%s5 + $0xf8] sm:$0xff]
        %v1751 = vld [vmem:[%s5 + $0x100] sm:$0xff]
        %v1752 = vld [vmem:[%s5 + $0x108] sm:$0xff]
        %v1753 = vld [vmem:[%s5 + $0x110] sm:$0xff]
        %v1754 = vld [vmem:[%s5 + $0x118] sm:$0xff]
        %v1755 = vld [vmem:[%s5 + $0x120] sm:$0xff]
        %v1756 = vld [vmem:[%s5 + $0x128] sm:$0xff]
        %v1757 = vld [vmem:[%s5 + $0x130] sm:$0xff]
        %v1758 = vld [vmem:[%s5 + $0x138] sm:$0xff]
        %v1759 = vld [vmem:[%s5 + $0x140] sm:$0xff]
        %v1760 = vld [vmem:[%s5 + $0x148] sm:$0xff]
        %v1761 = vld [vmem:[%s5 + $0x150] sm:$0xff]
        %v1762 = vld [vmem:[%s5 + $0x158] sm:$0xff]
        %v1763 = vld [vmem:[%s5 + $0x160] sm:$0xff]
        %v1764 = vld [vmem:[%s5 + $0x168] sm:$0xff]
        %v1765 = vld [vmem:[%s5 + $0x170] sm:$0xff]
        %v1766 = vld [vmem:[%s5 + $0x178] sm:$0xff]
        %v1767 = vld [vmem:[%s5 + $0x180] sm:$0xff]
        %v1768 = vld [vmem:[%s5 + $0x188] sm:$0xff]
        %vm1769 = vcmask 130048
        %v1771 = vsel %vm1769, %v1717, 0
        %1773 = vmatprep.subr.mxu0 0.0
        %1774 = vmatpush1.msra.mxu0 %v1734
        %1775 = vmatprep.subr.mxu0 0.0
        %1776 = vmatpush1.msra.mxu0 %v1733
        %1777 = vmatprep.subr.mxu0 0.0
        %1778 = vmatpush1.msra.mxu0 %v1732
        %1779 = vmatprep.subr.mxu0 0.0
        %1780 = vmatpush1.msra.mxu0 %v1731
        %1781 = vmatprep.subr.mxu0 0.0
        %1782 = vmatpush1.msra.mxu0 %v1730
        %1783 = vmatprep.subr.mxu0 0.0
        %1784 = vmatpush1.msra.mxu0 %v1729
        %1785 = vmatprep.subr.mxu0 0.0
        %1786 = vmatpush1.msra.mxu0 %v1728
        %1787 = vmatprep.subr.mxu0 0.0
        %1788 = vmatpush1.msra.mxu0 %v1727
        %1789 = vmatprep.subr.mxu0 0.0
        %1790 = vmatpush1.msra.mxu0 %v1726
        %1791 = vmatprep.subr.mxu0 0.0
        %1792 = vmatpush1.msra.mxu0 %v1725
        %1793 = vmatprep.subr.mxu0 0.0
        %1794 = vmatpush1.msra.mxu0 %v1724
        %1795 = vmatprep.subr.mxu0 0.0
        %1796 = vmatpush1.msra.mxu0 %v1723
        %1797 = vmatprep.subr.mxu0 0.0
        %1798 = vmatpush1.msra.mxu0 %v1722
        %1799 = vmatprep.subr.mxu0 0.0
        %1800 = vmatpush1.msra.mxu0 %v1721
        %1801 = vmatprep.subr.mxu0 0.0
        %1802 = vmatpush1.msra.mxu0 %v1720
        %1803 = vmatprep.subr.mxu0 0.0
        %1804 = vmatpush1.msra.mxu0 %v1719
        %1805 = vmatprep.subr.mxu0 0.0
        %1806 = vmatpush2.msra.mxu0 %v1750
        %1807 = vmatprep.subr.mxu0 0.0
        %1808 = vmatpush2.msra.mxu0 %v1749
        %1809 = vmatprep.subr.mxu0 0.0
        %1810 = vmatpush2.msra.mxu0 %v1748
        %1811 = vmatprep.subr.mxu0 0.0
        %1812 = vmatpush2.msra.mxu0 %v1747
        %1813 = vmatprep.subr.mxu0 0.0
        %1814 = vmatpush2.msra.mxu0 %v1746
        %1815 = vmatprep.subr.mxu0 0.0
        %1816 = vmatpush2.msra.mxu0 %v1745
        %1817 = vmatprep.subr.mxu0 0.0
        %1818 = vmatpush2.msra.mxu0 %v1744
        %1819 = vmatprep.subr.mxu0 0.0
        %1820 = vmatpush2.msra.mxu0 %v1743
        %1821 = vmatprep.subr.mxu0 0.0
        %1822 = vmatpush2.msra.mxu0 %v1742
        %1823 = vmatprep.subr.mxu0 0.0
        %1824 = vmatpush2.msra.mxu0 %v1741
        %1825 = vmatprep.subr.mxu0 0.0
        %1826 = vmatpush2.msra.mxu0 %v1740
        %1827 = vmatprep.subr.mxu0 0.0
        %1828 = vmatpush2.msra.mxu0 %v1739
        %1829 = vmatprep.subr.mxu0 0.0
        %1830 = vmatpush2.msra.mxu0 %v1738
        %1831 = vmatprep.subr.mxu0 0.0
        %1832 = vmatpush2.msra.mxu0 %v1737
        %1833 = vmatprep.subr.mxu0 0.0
        %1834 = vmatpush2.msra.mxu0 %v1736
        %1835 = vmatprep.subr.mxu0 0.0
        %1836 = vmatpush2.msra.mxu0 %v1735
        %1837 = vmatprep.mubr.f32.mxu0 %v1715
        %1838 = vmatmul.mubr.f32.gmra.mxu0 %v1714
        %v1839 = vpop.f32.mrf.mxu0
        %v1840 = vadd.f32 0.0, %v1839
        %v1841 = vpop.f32.mrf.mxu0
        %1842 = vdwg.mxu0
        %1843 = vmatprep.subr.mxu0 0.0
        %1844 = vmatpush1.msra.mxu0 %v1766
        %1845 = vmatprep.subr.mxu0 0.0
        %1846 = vmatpush1.msra.mxu0 %v1765
        %1847 = vmatprep.subr.mxu0 0.0
        %1848 = vmatpush1.msra.mxu0 %v1764
        %1849 = vmatprep.subr.mxu0 0.0
        %1850 = vmatpush1.msra.mxu0 %v1763
        %1851 = vmatprep.subr.mxu0 0.0
        %1852 = vmatpush1.msra.mxu0 %v1762
        %1853 = vmatprep.subr.mxu0 0.0
        %1854 = vmatpush1.msra.mxu0 %v1761
        %1855 = vmatprep.subr.mxu0 0.0
        %1856 = vmatpush1.msra.mxu0 %v1760
        %1857 = vmatprep.subr.mxu0 0.0
        %1858 = vmatpush1.msra.mxu0 %v1759
        %1859 = vmatprep.subr.mxu0 0.0
        %1860 = vmatpush1.msra.mxu0 %v1758
        %1861 = vmatprep.subr.mxu0 0.0
        %1862 = vmatpush1.msra.mxu0 %v1757
        %1863 = vmatprep.subr.mxu0 0.0
        %1864 = vmatpush1.msra.mxu0 %v1756
        %1865 = vmatprep.subr.mxu0 0.0
        %1866 = vmatpush1.msra.mxu0 %v1755
        %1867 = vmatprep.subr.mxu0 0.0
        %1868 = vmatpush1.msra.mxu0 %v1754
        %1869 = vmatprep.subr.mxu0 0.0
        %1870 = vmatpush1.msra.mxu0 %v1753
        %1871 = vmatprep.subr.mxu0 0.0
        %1872 = vmatpush1.msra.mxu0 %v1752
        %1873 = vmatprep.subr.mxu0 0.0
        %1874 = vmatpush1.msra.mxu0 %v1751
        %1875 = vmatprep.subr.mxu0 0.0
        %1876 = vmatpush2.msra.mxu0 0.0
        %1877 = vmatprep.subr.mxu0 0.0
        %1878 = vmatpush2.msra.mxu0 0.0
        %1879 = vmatprep.subr.mxu0 0.0
        %1880 = vmatpush2.msra.mxu0 0.0
        %1881 = vmatprep.subr.mxu0 0.0
        %1882 = vmatpush2.msra.mxu0 0.0
        %1883 = vmatprep.subr.mxu0 0.0
        %1884 = vmatpush2.msra.mxu0 0.0
        %1885 = vmatprep.subr.mxu0 0.0
        %1886 = vmatpush2.msra.mxu0 0.0
        %1887 = vmatprep.subr.mxu0 0.0
        %1888 = vmatpush2.msra.mxu0 0.0
        %1889 = vmatprep.subr.mxu0 0.0
        %1890 = vmatpush2.msra.mxu0 0.0
        %1891 = vmatprep.subr.mxu0 0.0
        %1892 = vmatpush2.msra.mxu0 0.0
        %1893 = vmatprep.subr.mxu0 0.0
        %1894 = vmatpush2.msra.mxu0 0.0
        %1895 = vmatprep.subr.mxu0 0.0
        %1896 = vmatpush2.msra.mxu0 0.0
        %1897 = vmatprep.subr.mxu0 0.0
        %1898 = vmatpush2.msra.mxu0 0.0
        %1899 = vmatprep.subr.mxu0 0.0
        %1900 = vmatpush2.msra.mxu0 0.0
        %1901 = vmatprep.subr.mxu0 0.0
        %1902 = vmatpush2.msra.mxu0 0.0
        %1903 = vmatprep.subr.mxu0 0.0
        %1904 = vmatpush2.msra.mxu0 %v1768
        %1905 = vmatprep.subr.mxu0 0.0
        %1906 = vmatpush2.msra.mxu0 %v1767
        %1907 = vmatprep.mubr.f32.mxu0 %v1771
        %1908 = vmatmul.mubr.f32.gmra.mxu0 %v1716
        %v1909 = vpop.f32.mrf.mxu0
        %v1910 = vadd.f32 %v1840, %v1909
        %v1911 = vpop.f32.mrf.mxu0
        %1912 = vdwg.mxu0
        %v1913 = vadd.f32 %v1718, %v1910
        %s1914 = scalar_lea.vmem %s5, 400
        %v1915 = vld [vmem:[%s1914] sm:$0xff]
        %v1916 = vld [vmem:[%s1914 + $0x8] sm:$0xff]
        %v1917 = vld [vmem:[%s1914 + $0x10] sm:$0xff]
        %v1918 = vld [vmem:[%s1914 + $0x18] sm:$0xff]
        %v1919 = vld [vmem:[%s1914 + $0x20] sm:$0xff]
        %v1920 = vld [vmem:[%s1914 + $0x28] sm:$0xff]
        %v1921 = vld [vmem:[%s1914 + $0x30] sm:$0xff]
        %v1922 = vld [vmem:[%s1914 + $0x38] sm:$0xff]
        %v1923 = vld [vmem:[%s1914 + $0x40] sm:$0xff]
        %v1924 = vld [vmem:[%s1914 + $0x48] sm:$0xff]
        %v1925 = vld [vmem:[%s1914 + $0x50] sm:$0xff]
        %v1926 = vld [vmem:[%s1914 + $0x58] sm:$0xff]
        %v1927 = vld [vmem:[%s1914 + $0x60] sm:$0xff]
        %v1928 = vld [vmem:[%s1914 + $0x68] sm:$0xff]
        %v1929 = vld [vmem:[%s1914 + $0x70] sm:$0xff]
        %v1930 = vld [vmem:[%s1914 + $0x78] sm:$0xff]
        %v1931 = vld [vmem:[%s1914 + $0x80] sm:$0xff]
        %v1932 = vld [vmem:[%s1914 + $0x88] sm:$0xff]
        %v1933 = vld [vmem:[%s1914 + $0x90] sm:$0xff]
        %v1934 = vld [vmem:[%s1914 + $0x98] sm:$0xff]
        %v1935 = vld [vmem:[%s1914 + $0xa0] sm:$0xff]
        %v1936 = vld [vmem:[%s1914 + $0xa8] sm:$0xff]
        %v1937 = vld [vmem:[%s1914 + $0xb0] sm:$0xff]
        %v1938 = vld [vmem:[%s1914 + $0xb8] sm:$0xff]
        %v1939 = vld [vmem:[%s1914 + $0xc0] sm:$0xff]
        %v1940 = vld [vmem:[%s1914 + $0xc8] sm:$0xff]
        %v1941 = vld [vmem:[%s1914 + $0xd0] sm:$0xff]
        %v1942 = vld [vmem:[%s1914 + $0xd8] sm:$0xff]
        %v1943 = vld [vmem:[%s1914 + $0xe0] sm:$0xff]
        %v1944 = vld [vmem:[%s1914 + $0xe8] sm:$0xff]
        %v1945 = vld [vmem:[%s1914 + $0xf0] sm:$0xff]
        %v1946 = vld [vmem:[%s1914 + $0xf8] sm:$0xff]
        %v1947 = vld [vmem:[%s1914 + $0x100] sm:$0xff]
        %v1948 = vld [vmem:[%s1914 + $0x108] sm:$0xff]
        %v1949 = vld [vmem:[%s1914 + $0x110] sm:$0xff]
        %v1950 = vld [vmem:[%s1914 + $0x118] sm:$0xff]
        %v1951 = vld [vmem:[%s1914 + $0x120] sm:$0xff]
        %v1952 = vld [vmem:[%s1914 + $0x128] sm:$0xff]
        %v1953 = vld [vmem:[%s1914 + $0x130] sm:$0xff]
        %v1954 = vld [vmem:[%s1914 + $0x138] sm:$0xff]
        %v1955 = vld [vmem:[%s1914 + $0x140] sm:$0xff]
        %v1956 = vld [vmem:[%s1914 + $0x148] sm:$0xff]
        %v1957 = vld [vmem:[%s1914 + $0x150] sm:$0xff]
        %v1958 = vld [vmem:[%s1914 + $0x158] sm:$0xff]
        %v1959 = vld [vmem:[%s1914 + $0x160] sm:$0xff]
        %v1960 = vld [vmem:[%s1914 + $0x168] sm:$0xff]
        %v1961 = vld [vmem:[%s1914 + $0x170] sm:$0xff]
        %v1962 = vld [vmem:[%s1914 + $0x178] sm:$0xff]
        %v1963 = vld [vmem:[%s1914 + $0x180] sm:$0xff]
        %v1964 = vld [vmem:[%s1914 + $0x188] sm:$0xff]
        %v1968 = vrot.slane %v1714, 1
        %v1969 = vrot.slane %v1715, 1
        %v1970 = vrot.slane %v1716, 1
        %v1971 = vrot.slane %v1717, 1
        %v1975 = vsel %vm1769, %v1971, 0
        %1977 = vmatprep.subr.mxu0 0.0
        %1978 = vmatpush1.msra.mxu0 %v1930
        %1979 = vmatprep.subr.mxu0 0.0
        %1980 = vmatpush1.msra.mxu0 %v1929
        %1981 = vmatprep.subr.mxu0 0.0
        %1982 = vmatpush1.msra.mxu0 %v1928
        %1983 = vmatprep.subr.mxu0 0.0
        %1984 = vmatpush1.msra.mxu0 %v1927
        %1985 = vmatprep.subr.mxu0 0.0
        %1986 = vmatpush1.msra.mxu0 %v1926
        %1987 = vmatprep.subr.mxu0 0.0
        %1988 = vmatpush1.msra.mxu0 %v1925
        %1989 = vmatprep.subr.mxu0 0.0
        %1990 = vmatpush1.msra.mxu0 %v1924
        %1991 = vmatprep.subr.mxu0 0.0
        %1992 = vmatpush1.msra.mxu0 %v1923
        %1993 = vmatprep.subr.mxu0 0.0
        %1994 = vmatpush1.msra.mxu0 %v1922
        %1995 = vmatprep.subr.mxu0 0.0
        %1996 = vmatpush1.msra.mxu0 %v1921
        %1997 = vmatprep.subr.mxu0 0.0
        %1998 = vmatpush1.msra.mxu0 %v1920
        %1999 = vmatprep.subr.mxu0 0.0
        %2000 = vmatpush1.msra.mxu0 %v1919
        %2001 = vmatprep.subr.mxu0 0.0
        %2002 = vmatpush1.msra.mxu0 %v1918
        %2003 = vmatprep.subr.mxu0 0.0
        %2004 = vmatpush1.msra.mxu0 %v1917
        %2005 = vmatprep.subr.mxu0 0.0
        %2006 = vmatpush1.msra.mxu0 %v1916
        %2007 = vmatprep.subr.mxu0 0.0
        %2008 = vmatpush1.msra.mxu0 %v1915
        %2009 = vmatprep.subr.mxu0 0.0
        %2010 = vmatpush2.msra.mxu0 %v1946
        %2011 = vmatprep.subr.mxu0 0.0
        %2012 = vmatpush2.msra.mxu0 %v1945
        %2013 = vmatprep.subr.mxu0 0.0
        %2014 = vmatpush2.msra.mxu0 %v1944
        %2015 = vmatprep.subr.mxu0 0.0
        %2016 = vmatpush2.msra.mxu0 %v1943
        %2017 = vmatprep.subr.mxu0 0.0
        %2018 = vmatpush2.msra.mxu0 %v1942
        %2019 = vmatprep.subr.mxu0 0.0
        %2020 = vmatpush2.msra.mxu0 %v1941
        %2021 = vmatprep.subr.mxu0 0.0
        %2022 = vmatpush2.msra.mxu0 %v1940
        %2023 = vmatprep.subr.mxu0 0.0
        %2024 = vmatpush2.msra.mxu0 %v1939
        %2025 = vmatprep.subr.mxu0 0.0
        %2026 = vmatpush2.msra.mxu0 %v1938
        %2027 = vmatprep.subr.mxu0 0.0
        %2028 = vmatpush2.msra.mxu0 %v1937
        %2029 = vmatprep.subr.mxu0 0.0
        %2030 = vmatpush2.msra.mxu0 %v1936
        %2031 = vmatprep.subr.mxu0 0.0
        %2032 = vmatpush2.msra.mxu0 %v1935
        %2033 = vmatprep.subr.mxu0 0.0
        %2034 = vmatpush2.msra.mxu0 %v1934
        %2035 = vmatprep.subr.mxu0 0.0
        %2036 = vmatpush2.msra.mxu0 %v1933
        %2037 = vmatprep.subr.mxu0 0.0
        %2038 = vmatpush2.msra.mxu0 %v1932
        %2039 = vmatprep.subr.mxu0 0.0
        %2040 = vmatpush2.msra.mxu0 %v1931
        %2041 = vmatprep.mubr.f32.mxu0 %v1969
        %2042 = vmatmul.mubr.f32.gmra.mxu0 %v1968
        %v2043 = vpop.f32.mrf.mxu0
        %v2044 = vadd.f32 0.0, %v2043
        %v2045 = vpop.f32.mrf.mxu0
        %2046 = vdwg.mxu0
        %2047 = vmatprep.subr.mxu0 0.0
        %2048 = vmatpush1.msra.mxu0 %v1962
        %2049 = vmatprep.subr.mxu0 0.0
        %2050 = vmatpush1.msra.mxu0 %v1961
        %2051 = vmatprep.subr.mxu0 0.0
        %2052 = vmatpush1.msra.mxu0 %v1960
        %2053 = vmatprep.subr.mxu0 0.0
        %2054 = vmatpush1.msra.mxu0 %v1959
        %2055 = vmatprep.subr.mxu0 0.0
        %2056 = vmatpush1.msra.mxu0 %v1958
        %2057 = vmatprep.subr.mxu0 0.0
        %2058 = vmatpush1.msra.mxu0 %v1957
        %2059 = vmatprep.subr.mxu0 0.0
        %2060 = vmatpush1.msra.mxu0 %v1956
        %2061 = vmatprep.subr.mxu0 0.0
        %2062 = vmatpush1.msra.mxu0 %v1955
        %2063 = vmatprep.subr.mxu0 0.0
        %2064 = vmatpush1.msra.mxu0 %v1954
        %2065 = vmatprep.subr.mxu0 0.0
        %2066 = vmatpush1.msra.mxu0 %v1953
        %2067 = vmatprep.subr.mxu0 0.0
        %2068 = vmatpush1.msra.mxu0 %v1952
        %2069 = vmatprep.subr.mxu0 0.0
        %2070 = vmatpush1.msra.mxu0 %v1951
        %2071 = vmatprep.subr.mxu0 0.0
        %2072 = vmatpush1.msra.mxu0 %v1950
        %2073 = vmatprep.subr.mxu0 0.0
        %2074 = vmatpush1.msra.mxu0 %v1949
        %2075 = vmatprep.subr.mxu0 0.0
        %2076 = vmatpush1.msra.mxu0 %v1948
        %2077 = vmatprep.subr.mxu0 0.0
        %2078 = vmatpush1.msra.mxu0 %v1947
        %2079 = vmatprep.subr.mxu0 0.0
        %2080 = vmatpush2.msra.mxu0 0.0
        %2081 = vmatprep.subr.mxu0 0.0
        %2082 = vmatpush2.msra.mxu0 0.0
        %2083 = vmatprep.subr.mxu0 0.0
        %2084 = vmatpush2.msra.mxu0 0.0
        %2085 = vmatprep.subr.mxu0 0.0
        %2086 = vmatpush2.msra.mxu0 0.0
        %2087 = vmatprep.subr.mxu0 0.0
        %2088 = vmatpush2.msra.mxu0 0.0
        %2089 = vmatprep.subr.mxu0 0.0
        %2090 = vmatpush2.msra.mxu0 0.0
        %2091 = vmatprep.subr.mxu0 0.0
        %2092 = vmatpush2.msra.mxu0 0.0
        %2093 = vmatprep.subr.mxu0 0.0
        %2094 = vmatpush2.msra.mxu0 0.0
        %2095 = vmatprep.subr.mxu0 0.0
        %2096 = vmatpush2.msra.mxu0 0.0
        %2097 = vmatprep.subr.mxu0 0.0
        %2098 = vmatpush2.msra.mxu0 0.0
        %2099 = vmatprep.subr.mxu0 0.0
        %2100 = vmatpush2.msra.mxu0 0.0
        %2101 = vmatprep.subr.mxu0 0.0
        %2102 = vmatpush2.msra.mxu0 0.0
        %2103 = vmatprep.subr.mxu0 0.0
        %2104 = vmatpush2.msra.mxu0 0.0
        %2105 = vmatprep.subr.mxu0 0.0
        %2106 = vmatpush2.msra.mxu0 0.0
        %2107 = vmatprep.subr.mxu0 0.0
        %2108 = vmatpush2.msra.mxu0 %v1964
        %2109 = vmatprep.subr.mxu0 0.0
        %2110 = vmatpush2.msra.mxu0 %v1963
        %2111 = vmatprep.mubr.f32.mxu0 %v1975
        %2112 = vmatmul.mubr.f32.gmra.mxu0 %v1970
        %v2113 = vpop.f32.mrf.mxu0
        %v2114 = vadd.f32 %v2044, %v2113
        %v2115 = vpop.f32.mrf.mxu0
        %2116 = vdwg.mxu0
        %v2117 = vadd.f32 %v1913, %v2114
        %s2118 = scalar_lea.vmem %s5, 800
        %v2119 = vld [vmem:[%s2118] sm:$0xff]
        %v2120 = vld [vmem:[%s2118 + $0x8] sm:$0xff]
        %v2121 = vld [vmem:[%s2118 + $0x10] sm:$0xff]
        %v2122 = vld [vmem:[%s2118 + $0x18] sm:$0xff]
        %v2123 = vld [vmem:[%s2118 + $0x20] sm:$0xff]
        %v2124 = vld [vmem:[%s2118 + $0x28] sm:$0xff]
        %v2125 = vld [vmem:[%s2118 + $0x30] sm:$0xff]
        %v2126 = vld [vmem:[%s2118 + $0x38] sm:$0xff]
        %v2127 = vld [vmem:[%s2118 + $0x40] sm:$0xff]
        %v2128 = vld [vmem:[%s2118 + $0x48] sm:$0xff]
        %v2129 = vld [vmem:[%s2118 + $0x50] sm:$0xff]
        %v2130 = vld [vmem:[%s2118 + $0x58] sm:$0xff]
        %v2131 = vld [vmem:[%s2118 + $0x60] sm:$0xff]
        %v2132 = vld [vmem:[%s2118 + $0x68] sm:$0xff]
        %v2133 = vld [vmem:[%s2118 + $0x70] sm:$0xff]
        %v2134 = vld [vmem:[%s2118 + $0x78] sm:$0xff]
        %v2135 = vld [vmem:[%s2118 + $0x80] sm:$0xff]
        %v2136 = vld [vmem:[%s2118 + $0x88] sm:$0xff]
        %v2137 = vld [vmem:[%s2118 + $0x90] sm:$0xff]
        %v2138 = vld [vmem:[%s2118 + $0x98] sm:$0xff]
        %v2139 = vld [vmem:[%s2118 + $0xa0] sm:$0xff]
        %v2140 = vld [vmem:[%s2118 + $0xa8] sm:$0xff]
        %v2141 = vld [vmem:[%s2118 + $0xb0] sm:$0xff]
        %v2142 = vld [vmem:[%s2118 + $0xb8] sm:$0xff]
        %v2143 = vld [vmem:[%s2118 + $0xc0] sm:$0xff]
        %v2144 = vld [vmem:[%s2118 + $0xc8] sm:$0xff]
        %v2145 = vld [vmem:[%s2118 + $0xd0] sm:$0xff]
        %v2146 = vld [vmem:[%s2118 + $0xd8] sm:$0xff]
        %v2147 = vld [vmem:[%s2118 + $0xe0] sm:$0xff]
        %v2148 = vld [vmem:[%s2118 + $0xe8] sm:$0xff]
        %v2149 = vld [vmem:[%s2118 + $0xf0] sm:$0xff]
        %v2150 = vld [vmem:[%s2118 + $0xf8] sm:$0xff]
        %v2151 = vld [vmem:[%s2118 + $0x100] sm:$0xff]
        %v2152 = vld [vmem:[%s2118 + $0x108] sm:$0xff]
        %v2153 = vld [vmem:[%s2118 + $0x110] sm:$0xff]
        %v2154 = vld [vmem:[%s2118 + $0x118] sm:$0xff]
        %v2155 = vld [vmem:[%s2118 + $0x120] sm:$0xff]
        %v2156 = vld [vmem:[%s2118 + $0x128] sm:$0xff]
        %v2157 = vld [vmem:[%s2118 + $0x130] sm:$0xff]
        %v2158 = vld [vmem:[%s2118 + $0x138] sm:$0xff]
        %v2159 = vld [vmem:[%s2118 + $0x140] sm:$0xff]
        %v2160 = vld [vmem:[%s2118 + $0x148] sm:$0xff]
        %v2161 = vld [vmem:[%s2118 + $0x150] sm:$0xff]
        %v2162 = vld [vmem:[%s2118 + $0x158] sm:$0xff]
        %v2163 = vld [vmem:[%s2118 + $0x160] sm:$0xff]
        %v2164 = vld [vmem:[%s2118 + $0x168] sm:$0xff]
        %v2165 = vld [vmem:[%s2118 + $0x170] sm:$0xff]
        %v2166 = vld [vmem:[%s2118 + $0x178] sm:$0xff]
        %v2167 = vld [vmem:[%s2118 + $0x180] sm:$0xff]
        %v2168 = vld [vmem:[%s2118 + $0x188] sm:$0xff]
        %v2169 = vrot.slane %v1714, 2
        %v2170 = vrot.slane %v1715, 2
        %v2171 = vrot.slane %v1716, 2
        %v2172 = vrot.slane %v1717, 2
        %v2176 = vsel %vm1769, %v2172, 0
        %2178 = vmatprep.subr.mxu0 0.0
        %2179 = vmatpush1.msra.mxu0 %v2134
        %2180 = vmatprep.subr.mxu0 0.0
        %2181 = vmatpush1.msra.mxu0 %v2133
        %2182 = vmatprep.subr.mxu0 0.0
        %2183 = vmatpush1.msra.mxu0 %v2132
        %2184 = vmatprep.subr.mxu0 0.0
        %2185 = vmatpush1.msra.mxu0 %v2131
        %2186 = vmatprep.subr.mxu0 0.0
        %2187 = vmatpush1.msra.mxu0 %v2130
        %2188 = vmatprep.subr.mxu0 0.0
        %2189 = vmatpush1.msra.mxu0 %v2129
        %2190 = vmatprep.subr.mxu0 0.0
        %2191 = vmatpush1.msra.mxu0 %v2128
        %2192 = vmatprep.subr.mxu0 0.0
        %2193 = vmatpush1.msra.mxu0 %v2127
        %2194 = vmatprep.subr.mxu0 0.0
        %2195 = vmatpush1.msra.mxu0 %v2126
        %2196 = vmatprep.subr.mxu0 0.0
        %2197 = vmatpush1.msra.mxu0 %v2125
        %2198 = vmatprep.subr.mxu0 0.0
        %2199 = vmatpush1.msra.mxu0 %v2124
        %2200 = vmatprep.subr.mxu0 0.0
        %2201 = vmatpush1.msra.mxu0 %v2123
        %2202 = vmatprep.subr.mxu0 0.0
        %2203 = vmatpush1.msra.mxu0 %v2122
        %2204 = vmatprep.subr.mxu0 0.0
        %2205 = vmatpush1.msra.mxu0 %v2121
        %2206 = vmatprep.subr.mxu0 0.0
        %2207 = vmatpush1.msra.mxu0 %v2120
        %2208 = vmatprep.subr.mxu0 0.0
        %2209 = vmatpush1.msra.mxu0 %v2119
        %2210 = vmatprep.subr.mxu0 0.0
        %2211 = vmatpush2.msra.mxu0 %v2150
        %2212 = vmatprep.subr.mxu0 0.0
        %2213 = vmatpush2.msra.mxu0 %v2149
        %2214 = vmatprep.subr.mxu0 0.0
        %2215 = vmatpush2.msra.mxu0 %v2148
        %2216 = vmatprep.subr.mxu0 0.0
        %2217 = vmatpush2.msra.mxu0 %v2147
        %2218 = vmatprep.subr.mxu0 0.0
        %2219 = vmatpush2.msra.mxu0 %v2146
        %2220 = vmatprep.subr.mxu0 0.0
        %2221 = vmatpush2.msra.mxu0 %v2145
        %2222 = vmatprep.subr.mxu0 0.0
        %2223 = vmatpush2.msra.mxu0 %v2144
        %2224 = vmatprep.subr.mxu0 0.0
        %2225 = vmatpush2.msra.mxu0 %v2143
        %2226 = vmatprep.subr.mxu0 0.0
        %2227 = vmatpush2.msra.mxu0 %v2142
        %2228 = vmatprep.subr.mxu0 0.0
        %2229 = vmatpush2.msra.mxu0 %v2141
        %2230 = vmatprep.subr.mxu0 0.0
        %2231 = vmatpush2.msra.mxu0 %v2140
        %2232 = vmatprep.subr.mxu0 0.0
        %2233 = vmatpush2.msra.mxu0 %v2139
        %2234 = vmatprep.subr.mxu0 0.0
        %2235 = vmatpush2.msra.mxu0 %v2138
        %2236 = vmatprep.subr.mxu0 0.0
        %2237 = vmatpush2.msra.mxu0 %v2137
        %2238 = vmatprep.subr.mxu0 0.0
        %2239 = vmatpush2.msra.mxu0 %v2136
        %2240 = vmatprep.subr.mxu0 0.0
        %2241 = vmatpush2.msra.mxu0 %v2135
        %2242 = vmatprep.mubr.f32.mxu0 %v2170
        %2243 = vmatmul.mubr.f32.gmra.mxu0 %v2169
        %v2244 = vpop.f32.mrf.mxu0
        %v2245 = vadd.f32 0.0, %v2244
        %v2246 = vpop.f32.mrf.mxu0
        %2247 = vdwg.mxu0
        %2248 = vmatprep.subr.mxu0 0.0
        %2249 = vmatpush1.msra.mxu0 %v2166
        %2250 = vmatprep.subr.mxu0 0.0
        %2251 = vmatpush1.msra.mxu0 %v2165
        %2252 = vmatprep.subr.mxu0 0.0
        %2253 = vmatpush1.msra.mxu0 %v2164
        %2254 = vmatprep.subr.mxu0 0.0
        %2255 = vmatpush1.msra.mxu0 %v2163
        %2256 = vmatprep.subr.mxu0 0.0
        %2257 = vmatpush1.msra.mxu0 %v2162
        %2258 = vmatprep.subr.mxu0 0.0
        %2259 = vmatpush1.msra.mxu0 %v2161
        %2260 = vmatprep.subr.mxu0 0.0
        %2261 = vmatpush1.msra.mxu0 %v2160
        %2262 = vmatprep.subr.mxu0 0.0
        %2263 = vmatpush1.msra.mxu0 %v2159
        %2264 = vmatprep.subr.mxu0 0.0
        %2265 = vmatpush1.msra.mxu0 %v2158
        %2266 = vmatprep.subr.mxu0 0.0
        %2267 = vmatpush1.msra.mxu0 %v2157
        %2268 = vmatprep.subr.mxu0 0.0
        %2269 = vmatpush1.msra.mxu0 %v2156
        %2270 = vmatprep.subr.mxu0 0.0
        %2271 = vmatpush1.msra.mxu0 %v2155
        %2272 = vmatprep.subr.mxu0 0.0
        %2273 = vmatpush1.msra.mxu0 %v2154
        %2274 = vmatprep.subr.mxu0 0.0
        %2275 = vmatpush1.msra.mxu0 %v2153
        %2276 = vmatprep.subr.mxu0 0.0
        %2277 = vmatpush1.msra.mxu0 %v2152
        %2278 = vmatprep.subr.mxu0 0.0
        %2279 = vmatpush1.msra.mxu0 %v2151
        %2280 = vmatprep.subr.mxu0 0.0
        %2281 = vmatpush2.msra.mxu0 0.0
        %2282 = vmatprep.subr.mxu0 0.0
        %2283 = vmatpush2.msra.mxu0 0.0
        %2284 = vmatprep.subr.mxu0 0.0
        %2285 = vmatpush2.msra.mxu0 0.0
        %2286 = vmatprep.subr.mxu0 0.0
        %2287 = vmatpush2.msra.mxu0 0.0
        %2288 = vmatprep.subr.mxu0 0.0
        %2289 = vmatpush2.msra.mxu0 0.0
        %2290 = vmatprep.subr.mxu0 0.0
        %2291 = vmatpush2.msra.mxu0 0.0
        %2292 = vmatprep.subr.mxu0 0.0
        %2293 = vmatpush2.msra.mxu0 0.0
        %2294 = vmatprep.subr.mxu0 0.0
        %2295 = vmatpush2.msra.mxu0 0.0
        %2296 = vmatprep.subr.mxu0 0.0
        %2297 = vmatpush2.msra.mxu0 0.0
        %2298 = vmatprep.subr.mxu0 0.0
        %2299 = vmatpush2.msra.mxu0 0.0
        %2300 = vmatprep.subr.mxu0 0.0
        %2301 = vmatpush2.msra.mxu0 0.0
        %2302 = vmatprep.subr.mxu0 0.0
        %2303 = vmatpush2.msra.mxu0 0.0
        %2304 = vmatprep.subr.mxu0 0.0
        %2305 = vmatpush2.msra.mxu0 0.0
        %2306 = vmatprep.subr.mxu0 0.0
        %2307 = vmatpush2.msra.mxu0 0.0
        %2308 = vmatprep.subr.mxu0 0.0
        %2309 = vmatpush2.msra.mxu0 %v2168
        %2310 = vmatprep.subr.mxu0 0.0
        %2311 = vmatpush2.msra.mxu0 %v2167
        %2312 = vmatprep.mubr.f32.mxu0 %v2176
        %2313 = vmatmul.mubr.f32.gmra.mxu0 %v2171
        %v2314 = vpop.f32.mrf.mxu0
        %v2315 = vadd.f32 %v2245, %v2314
        %v2316 = vpop.f32.mrf.mxu0
        %2317 = vdwg.mxu0
        %v2318 = vadd.f32 %v2117, %v2315
        %s2319 = scalar_lea.vmem %s5, 1200
        %v2320 = vld [vmem:[%s2319] sm:$0xff]
        %v2321 = vld [vmem:[%s2319 + $0x8] sm:$0xff]
        %v2322 = vld [vmem:[%s2319 + $0x10] sm:$0xff]
        %v2323 = vld [vmem:[%s2319 + $0x18] sm:$0xff]
        %v2324 = vld [vmem:[%s2319 + $0x20] sm:$0xff]
        %v2325 = vld [vmem:[%s2319 + $0x28] sm:$0xff]
        %v2326 = vld [vmem:[%s2319 + $0x30] sm:$0xff]
        %v2327 = vld [vmem:[%s2319 + $0x38] sm:$0xff]
        %v2328 = vld [vmem:[%s2319 + $0x40] sm:$0xff]
        %v2329 = vld [vmem:[%s2319 + $0x48] sm:$0xff]
        %v2330 = vld [vmem:[%s2319 + $0x50] sm:$0xff]
        %v2331 = vld [vmem:[%s2319 + $0x58] sm:$0xff]
        %v2332 = vld [vmem:[%s2319 + $0x60] sm:$0xff]
        %v2333 = vld [vmem:[%s2319 + $0x68] sm:$0xff]
        %v2334 = vld [vmem:[%s2319 + $0x70] sm:$0xff]
        %v2335 = vld [vmem:[%s2319 + $0x78] sm:$0xff]
        %v2336 = vld [vmem:[%s2319 + $0x80] sm:$0xff]
        %v2337 = vld [vmem:[%s2319 + $0x88] sm:$0xff]
        %v2338 = vld [vmem:[%s2319 + $0x90] sm:$0xff]
        %v2339 = vld [vmem:[%s2319 + $0x98] sm:$0xff]
        %v2340 = vld [vmem:[%s2319 + $0xa0] sm:$0xff]
        %v2341 = vld [vmem:[%s2319 + $0xa8] sm:$0xff]
        %v2342 = vld [vmem:[%s2319 + $0xb0] sm:$0xff]
        %v2343 = vld [vmem:[%s2319 + $0xb8] sm:$0xff]
        %v2344 = vld [vmem:[%s2319 + $0xc0] sm:$0xff]
        %v2345 = vld [vmem:[%s2319 + $0xc8] sm:$0xff]
        %v2346 = vld [vmem:[%s2319 + $0xd0] sm:$0xff]
        %v2347 = vld [vmem:[%s2319 + $0xd8] sm:$0xff]
        %v2348 = vld [vmem:[%s2319 + $0xe0] sm:$0xff]
        %v2349 = vld [vmem:[%s2319 + $0xe8] sm:$0xff]
        %v2350 = vld [vmem:[%s2319 + $0xf0] sm:$0xff]
        %v2351 = vld [vmem:[%s2319 + $0xf8] sm:$0xff]
        %v2352 = vld [vmem:[%s2319 + $0x100] sm:$0xff]
        %v2353 = vld [vmem:[%s2319 + $0x108] sm:$0xff]
        %v2354 = vld [vmem:[%s2319 + $0x110] sm:$0xff]
        %v2355 = vld [vmem:[%s2319 + $0x118] sm:$0xff]
        %v2356 = vld [vmem:[%s2319 + $0x120] sm:$0xff]
        %v2357 = vld [vmem:[%s2319 + $0x128] sm:$0xff]
        %v2358 = vld [vmem:[%s2319 + $0x130] sm:$0xff]
        %v2359 = vld [vmem:[%s2319 + $0x138] sm:$0xff]
        %v2360 = vld [vmem:[%s2319 + $0x140] sm:$0xff]
        %v2361 = vld [vmem:[%s2319 + $0x148] sm:$0xff]
        %v2362 = vld [vmem:[%s2319 + $0x150] sm:$0xff]
        %v2363 = vld [vmem:[%s2319 + $0x158] sm:$0xff]
        %v2364 = vld [vmem:[%s2319 + $0x160] sm:$0xff]
        %v2365 = vld [vmem:[%s2319 + $0x168] sm:$0xff]
        %v2366 = vld [vmem:[%s2319 + $0x170] sm:$0xff]
        %v2367 = vld [vmem:[%s2319 + $0x178] sm:$0xff]
        %v2368 = vld [vmem:[%s2319 + $0x180] sm:$0xff]
        %v2369 = vld [vmem:[%s2319 + $0x188] sm:$0xff]
        %v2370 = vrot.slane %v1714, 3
        %v2371 = vrot.slane %v1715, 3
        %v2372 = vrot.slane %v1716, 3
        %v2373 = vrot.slane %v1717, 3
        %v2377 = vsel %vm1769, %v2373, 0
        %2379 = vmatprep.subr.mxu0 0.0
        %2380 = vmatpush1.msra.mxu0 %v2335
        %2381 = vmatprep.subr.mxu0 0.0
        %2382 = vmatpush1.msra.mxu0 %v2334
        %2383 = vmatprep.subr.mxu0 0.0
        %2384 = vmatpush1.msra.mxu0 %v2333
        %2385 = vmatprep.subr.mxu0 0.0
        %2386 = vmatpush1.msra.mxu0 %v2332
        %2387 = vmatprep.subr.mxu0 0.0
        %2388 = vmatpush1.msra.mxu0 %v2331
        %2389 = vmatprep.subr.mxu0 0.0
        %2390 = vmatpush1.msra.mxu0 %v2330
        %2391 = vmatprep.subr.mxu0 0.0
        %2392 = vmatpush1.msra.mxu0 %v2329
        %2393 = vmatprep.subr.mxu0 0.0
        %2394 = vmatpush1.msra.mxu0 %v2328
        %2395 = vmatprep.subr.mxu0 0.0
        %2396 = vmatpush1.msra.mxu0 %v2327
        %2397 = vmatprep.subr.mxu0 0.0
        %2398 = vmatpush1.msra.mxu0 %v2326
        %2399 = vmatprep.subr.mxu0 0.0
        %2400 = vmatpush1.msra.mxu0 %v2325
        %2401 = vmatprep.subr.mxu0 0.0
        %2402 = vmatpush1.msra.mxu0 %v2324
        %2403 = vmatprep.subr.mxu0 0.0
        %2404 = vmatpush1.msra.mxu0 %v2323
        %2405 = vmatprep.subr.mxu0 0.0
        %2406 = vmatpush1.msra.mxu0 %v2322
        %2407 = vmatprep.subr.mxu0 0.0
        %2408 = vmatpush1.msra.mxu0 %v2321
        %2409 = vmatprep.subr.mxu0 0.0
        %2410 = vmatpush1.msra.mxu0 %v2320
        %2411 = vmatprep.subr.mxu0 0.0
        %2412 = vmatpush2.msra.mxu0 %v2351
        %2413 = vmatprep.subr.mxu0 0.0
        %2414 = vmatpush2.msra.mxu0 %v2350
        %2415 = vmatprep.subr.mxu0 0.0
        %2416 = vmatpush2.msra.mxu0 %v2349
        %2417 = vmatprep.subr.mxu0 0.0
        %2418 = vmatpush2.msra.mxu0 %v2348
        %2419 = vmatprep.subr.mxu0 0.0
        %2420 = vmatpush2.msra.mxu0 %v2347
        %2421 = vmatprep.subr.mxu0 0.0
        %2422 = vmatpush2.msra.mxu0 %v2346
        %2423 = vmatprep.subr.mxu0 0.0
        %2424 = vmatpush2.msra.mxu0 %v2345
        %2425 = vmatprep.subr.mxu0 0.0
        %2426 = vmatpush2.msra.mxu0 %v2344
        %2427 = vmatprep.subr.mxu0 0.0
        %2428 = vmatpush2.msra.mxu0 %v2343
        %2429 = vmatprep.subr.mxu0 0.0
        %2430 = vmatpush2.msra.mxu0 %v2342
        %2431 = vmatprep.subr.mxu0 0.0
        %2432 = vmatpush2.msra.mxu0 %v2341
        %2433 = vmatprep.subr.mxu0 0.0
        %2434 = vmatpush2.msra.mxu0 %v2340
        %2435 = vmatprep.subr.mxu0 0.0
        %2436 = vmatpush2.msra.mxu0 %v2339
        %2437 = vmatprep.subr.mxu0 0.0
        %2438 = vmatpush2.msra.mxu0 %v2338
        %2439 = vmatprep.subr.mxu0 0.0
        %2440 = vmatpush2.msra.mxu0 %v2337
        %2441 = vmatprep.subr.mxu0 0.0
        %2442 = vmatpush2.msra.mxu0 %v2336
        %2443 = vmatprep.mubr.f32.mxu0 %v2371
        %2444 = vmatmul.mubr.f32.gmra.mxu0 %v2370
        %v2445 = vpop.f32.mrf.mxu0
        %v2446 = vadd.f32 0.0, %v2445
        %v2447 = vpop.f32.mrf.mxu0
        %2448 = vdwg.mxu0
        %2449 = vmatprep.subr.mxu0 0.0
        %2450 = vmatpush1.msra.mxu0 %v2367
        %2451 = vmatprep.subr.mxu0 0.0
        %2452 = vmatpush1.msra.mxu0 %v2366
        %2453 = vmatprep.subr.mxu0 0.0
        %2454 = vmatpush1.msra.mxu0 %v2365
        %2455 = vmatprep.subr.mxu0 0.0
        %2456 = vmatpush1.msra.mxu0 %v2364
        %2457 = vmatprep.subr.mxu0 0.0
        %2458 = vmatpush1.msra.mxu0 %v2363
        %2459 = vmatprep.subr.mxu0 0.0
        %2460 = vmatpush1.msra.mxu0 %v2362
        %2461 = vmatprep.subr.mxu0 0.0
        %2462 = vmatpush1.msra.mxu0 %v2361
        %2463 = vmatprep.subr.mxu0 0.0
        %2464 = vmatpush1.msra.mxu0 %v2360
        %2465 = vmatprep.subr.mxu0 0.0
        %2466 = vmatpush1.msra.mxu0 %v2359
        %2467 = vmatprep.subr.mxu0 0.0
        %2468 = vmatpush1.msra.mxu0 %v2358
        %2469 = vmatprep.subr.mxu0 0.0
        %2470 = vmatpush1.msra.mxu0 %v2357
        %2471 = vmatprep.subr.mxu0 0.0
        %2472 = vmatpush1.msra.mxu0 %v2356
        %2473 = vmatprep.subr.mxu0 0.0
        %2474 = vmatpush1.msra.mxu0 %v2355
        %2475 = vmatprep.subr.mxu0 0.0
        %2476 = vmatpush1.msra.mxu0 %v2354
        %2477 = vmatprep.subr.mxu0 0.0
        %2478 = vmatpush1.msra.mxu0 %v2353
        %2479 = vmatprep.subr.mxu0 0.0
        %2480 = vmatpush1.msra.mxu0 %v2352
        %2481 = vmatprep.subr.mxu0 0.0
        %2482 = vmatpush2.msra.mxu0 0.0
        %2483 = vmatprep.subr.mxu0 0.0
        %2484 = vmatpush2.msra.mxu0 0.0
        %2485 = vmatprep.subr.mxu0 0.0
        %2486 = vmatpush2.msra.mxu0 0.0
        %2487 = vmatprep.subr.mxu0 0.0
        %2488 = vmatpush2.msra.mxu0 0.0
        %2489 = vmatprep.subr.mxu0 0.0
        %2490 = vmatpush2.msra.mxu0 0.0
        %2491 = vmatprep.subr.mxu0 0.0
        %2492 = vmatpush2.msra.mxu0 0.0
        %2493 = vmatprep.subr.mxu0 0.0
        %2494 = vmatpush2.msra.mxu0 0.0
        %2495 = vmatprep.subr.mxu0 0.0
        %2496 = vmatpush2.msra.mxu0 0.0
        %2497 = vmatprep.subr.mxu0 0.0
        %2498 = vmatpush2.msra.mxu0 0.0
        %2499 = vmatprep.subr.mxu0 0.0
        %2500 = vmatpush2.msra.mxu0 0.0
        %2501 = vmatprep.subr.mxu0 0.0
        %2502 = vmatpush2.msra.mxu0 0.0
        %2503 = vmatprep.subr.mxu0 0.0
        %2504 = vmatpush2.msra.mxu0 0.0
        %2505 = vmatprep.subr.mxu0 0.0
        %2506 = vmatpush2.msra.mxu0 0.0
        %2507 = vmatprep.subr.mxu0 0.0
        %2508 = vmatpush2.msra.mxu0 0.0
        %2509 = vmatprep.subr.mxu0 0.0
        %2510 = vmatpush2.msra.mxu0 %v2369
        %2511 = vmatprep.subr.mxu0 0.0
        %2512 = vmatpush2.msra.mxu0 %v2368
        %2513 = vmatprep.mubr.f32.mxu0 %v2377
        %2514 = vmatmul.mubr.f32.gmra.mxu0 %v2372
        %v2515 = vpop.f32.mrf.mxu0
        %v2516 = vadd.f32 %v2446, %v2515
        %v2517 = vpop.f32.mrf.mxu0
        %2518 = vdwg.mxu0
        %v2519 = vadd.f32 %v2318, %v2516
        %s2520 = scalar_lea.vmem %s5, 1600
        %v2521 = vld [vmem:[%s2520] sm:$0xff]
        %v2522 = vld [vmem:[%s2520 + $0x8] sm:$0xff]
        %v2523 = vld [vmem:[%s2520 + $0x10] sm:$0xff]
        %v2524 = vld [vmem:[%s2520 + $0x18] sm:$0xff]
        %v2525 = vld [vmem:[%s2520 + $0x20] sm:$0xff]
        %v2526 = vld [vmem:[%s2520 + $0x28] sm:$0xff]
        %v2527 = vld [vmem:[%s2520 + $0x30] sm:$0xff]
        %v2528 = vld [vmem:[%s2520 + $0x38] sm:$0xff]
        %v2529 = vld [vmem:[%s2520 + $0x40] sm:$0xff]
        %v2530 = vld [vmem:[%s2520 + $0x48] sm:$0xff]
        %v2531 = vld [vmem:[%s2520 + $0x50] sm:$0xff]
        %v2532 = vld [vmem:[%s2520 + $0x58] sm:$0xff]
        %v2533 = vld [vmem:[%s2520 + $0x60] sm:$0xff]
        %v2534 = vld [vmem:[%s2520 + $0x68] sm:$0xff]
        %v2535 = vld [vmem:[%s2520 + $0x70] sm:$0xff]
        %v2536 = vld [vmem:[%s2520 + $0x78] sm:$0xff]
        %v2537 = vld [vmem:[%s2520 + $0x80] sm:$0xff]
        %v2538 = vld [vmem:[%s2520 + $0x88] sm:$0xff]
        %v2539 = vld [vmem:[%s2520 + $0x90] sm:$0xff]
        %v2540 = vld [vmem:[%s2520 + $0x98] sm:$0xff]
        %v2541 = vld [vmem:[%s2520 + $0xa0] sm:$0xff]
        %v2542 = vld [vmem:[%s2520 + $0xa8] sm:$0xff]
        %v2543 = vld [vmem:[%s2520 + $0xb0] sm:$0xff]
        %v2544 = vld [vmem:[%s2520 + $0xb8] sm:$0xff]
        %v2545 = vld [vmem:[%s2520 + $0xc0] sm:$0xff]
        %v2546 = vld [vmem:[%s2520 + $0xc8] sm:$0xff]
        %v2547 = vld [vmem:[%s2520 + $0xd0] sm:$0xff]
        %v2548 = vld [vmem:[%s2520 + $0xd8] sm:$0xff]
        %v2549 = vld [vmem:[%s2520 + $0xe0] sm:$0xff]
        %v2550 = vld [vmem:[%s2520 + $0xe8] sm:$0xff]
        %v2551 = vld [vmem:[%s2520 + $0xf0] sm:$0xff]
        %v2552 = vld [vmem:[%s2520 + $0xf8] sm:$0xff]
        %v2553 = vld [vmem:[%s2520 + $0x100] sm:$0xff]
        %v2554 = vld [vmem:[%s2520 + $0x108] sm:$0xff]
        %v2555 = vld [vmem:[%s2520 + $0x110] sm:$0xff]
        %v2556 = vld [vmem:[%s2520 + $0x118] sm:$0xff]
        %v2557 = vld [vmem:[%s2520 + $0x120] sm:$0xff]
        %v2558 = vld [vmem:[%s2520 + $0x128] sm:$0xff]
        %v2559 = vld [vmem:[%s2520 + $0x130] sm:$0xff]
        %v2560 = vld [vmem:[%s2520 + $0x138] sm:$0xff]
        %v2561 = vld [vmem:[%s2520 + $0x140] sm:$0xff]
        %v2562 = vld [vmem:[%s2520 + $0x148] sm:$0xff]
        %v2563 = vld [vmem:[%s2520 + $0x150] sm:$0xff]
        %v2564 = vld [vmem:[%s2520 + $0x158] sm:$0xff]
        %v2565 = vld [vmem:[%s2520 + $0x160] sm:$0xff]
        %v2566 = vld [vmem:[%s2520 + $0x168] sm:$0xff]
        %v2567 = vld [vmem:[%s2520 + $0x170] sm:$0xff]
        %v2568 = vld [vmem:[%s2520 + $0x178] sm:$0xff]
        %v2569 = vld [vmem:[%s2520 + $0x180] sm:$0xff]
        %v2570 = vld [vmem:[%s2520 + $0x188] sm:$0xff]
        %v2571 = vrot.slane %v1714, 4
        %v2572 = vrot.slane %v1715, 4
        %v2573 = vrot.slane %v1716, 4
        %v2574 = vrot.slane %v1717, 4
        %v2578 = vsel %vm1769, %v2574, 0
        %2580 = vmatprep.subr.mxu0 0.0
        %2581 = vmatpush1.msra.mxu0 %v2536
        %2582 = vmatprep.subr.mxu0 0.0
        %2583 = vmatpush1.msra.mxu0 %v2535
        %2584 = vmatprep.subr.mxu0 0.0
        %2585 = vmatpush1.msra.mxu0 %v2534
        %2586 = vmatprep.subr.mxu0 0.0
        %2587 = vmatpush1.msra.mxu0 %v2533
        %2588 = vmatprep.subr.mxu0 0.0
        %2589 = vmatpush1.msra.mxu0 %v2532
        %2590 = vmatprep.subr.mxu0 0.0
        %2591 = vmatpush1.msra.mxu0 %v2531
        %2592 = vmatprep.subr.mxu0 0.0
        %2593 = vmatpush1.msra.mxu0 %v2530
        %2594 = vmatprep.subr.mxu0 0.0
        %2595 = vmatpush1.msra.mxu0 %v2529
        %2596 = vmatprep.subr.mxu0 0.0
        %2597 = vmatpush1.msra.mxu0 %v2528
        %2598 = vmatprep.subr.mxu0 0.0
        %2599 = vmatpush1.msra.mxu0 %v2527
        %2600 = vmatprep.subr.mxu0 0.0
        %2601 = vmatpush1.msra.mxu0 %v2526
        %2602 = vmatprep.subr.mxu0 0.0
        %2603 = vmatpush1.msra.mxu0 %v2525
        %2604 = vmatprep.subr.mxu0 0.0
        %2605 = vmatpush1.msra.mxu0 %v2524
        %2606 = vmatprep.subr.mxu0 0.0
        %2607 = vmatpush1.msra.mxu0 %v2523
        %2608 = vmatprep.subr.mxu0 0.0
        %2609 = vmatpush1.msra.mxu0 %v2522
        %2610 = vmatprep.subr.mxu0 0.0
        %2611 = vmatpush1.msra.mxu0 %v2521
        %2612 = vmatprep.subr.mxu0 0.0
        %2613 = vmatpush2.msra.mxu0 %v2552
        %2614 = vmatprep.subr.mxu0 0.0
        %2615 = vmatpush2.msra.mxu0 %v2551
        %2616 = vmatprep.subr.mxu0 0.0
        %2617 = vmatpush2.msra.mxu0 %v2550
        %2618 = vmatprep.subr.mxu0 0.0
        %2619 = vmatpush2.msra.mxu0 %v2549
        %2620 = vmatprep.subr.mxu0 0.0
        %2621 = vmatpush2.msra.mxu0 %v2548
        %2622 = vmatprep.subr.mxu0 0.0
        %2623 = vmatpush2.msra.mxu0 %v2547
        %2624 = vmatprep.subr.mxu0 0.0
        %2625 = vmatpush2.msra.mxu0 %v2546
        %2626 = vmatprep.subr.mxu0 0.0
        %2627 = vmatpush2.msra.mxu0 %v2545
        %2628 = vmatprep.subr.mxu0 0.0
        %2629 = vmatpush2.msra.mxu0 %v2544
        %2630 = vmatprep.subr.mxu0 0.0
        %2631 = vmatpush2.msra.mxu0 %v2543
        %2632 = vmatprep.subr.mxu0 0.0
        %2633 = vmatpush2.msra.mxu0 %v2542
        %2634 = vmatprep.subr.mxu0 0.0
        %2635 = vmatpush2.msra.mxu0 %v2541
        %2636 = vmatprep.subr.mxu0 0.0
        %2637 = vmatpush2.msra.mxu0 %v2540
        %2638 = vmatprep.subr.mxu0 0.0
        %2639 = vmatpush2.msra.mxu0 %v2539
        %2640 = vmatprep.subr.mxu0 0.0
        %2641 = vmatpush2.msra.mxu0 %v2538
        %2642 = vmatprep.subr.mxu0 0.0
        %2643 = vmatpush2.msra.mxu0 %v2537
        %2644 = vmatprep.mubr.f32.mxu0 %v2572
        %2645 = vmatmul.mubr.f32.gmra.mxu0 %v2571
        %v2646 = vpop.f32.mrf.mxu0
        %v2647 = vadd.f32 0.0, %v2646
        %v2648 = vpop.f32.mrf.mxu0
        %2649 = vdwg.mxu0
        %2650 = vmatprep.subr.mxu0 0.0
        %2651 = vmatpush1.msra.mxu0 %v2568
        %2652 = vmatprep.subr.mxu0 0.0
        %2653 = vmatpush1.msra.mxu0 %v2567
        %2654 = vmatprep.subr.mxu0 0.0
        %2655 = vmatpush1.msra.mxu0 %v2566
        %2656 = vmatprep.subr.mxu0 0.0
        %2657 = vmatpush1.msra.mxu0 %v2565
        %2658 = vmatprep.subr.mxu0 0.0
        %2659 = vmatpush1.msra.mxu0 %v2564
        %2660 = vmatprep.subr.mxu0 0.0
        %2661 = vmatpush1.msra.mxu0 %v2563
        %2662 = vmatprep.subr.mxu0 0.0
        %2663 = vmatpush1.msra.mxu0 %v2562
        %2664 = vmatprep.subr.mxu0 0.0
        %2665 = vmatpush1.msra.mxu0 %v2561
        %2666 = vmatprep.subr.mxu0 0.0
        %2667 = vmatpush1.msra.mxu0 %v2560
        %2668 = vmatprep.subr.mxu0 0.0
        %2669 = vmatpush1.msra.mxu0 %v2559
        %2670 = vmatprep.subr.mxu0 0.0
        %2671 = vmatpush1.msra.mxu0 %v2558
        %2672 = vmatprep.subr.mxu0 0.0
        %2673 = vmatpush1.msra.mxu0 %v2557
        %2674 = vmatprep.subr.mxu0 0.0
        %2675 = vmatpush1.msra.mxu0 %v2556
        %2676 = vmatprep.subr.mxu0 0.0
        %2677 = vmatpush1.msra.mxu0 %v2555
        %2678 = vmatprep.subr.mxu0 0.0
        %2679 = vmatpush1.msra.mxu0 %v2554
        %2680 = vmatprep.subr.mxu0 0.0
        %2681 = vmatpush1.msra.mxu0 %v2553
        %2682 = vmatprep.subr.mxu0 0.0
        %2683 = vmatpush2.msra.mxu0 0.0
        %2684 = vmatprep.subr.mxu0 0.0
        %2685 = vmatpush2.msra.mxu0 0.0
        %2686 = vmatprep.subr.mxu0 0.0
        %2687 = vmatpush2.msra.mxu0 0.0
        %2688 = vmatprep.subr.mxu0 0.0
        %2689 = vmatpush2.msra.mxu0 0.0
        %2690 = vmatprep.subr.mxu0 0.0
        %2691 = vmatpush2.msra.mxu0 0.0
        %2692 = vmatprep.subr.mxu0 0.0
        %2693 = vmatpush2.msra.mxu0 0.0
        %2694 = vmatprep.subr.mxu0 0.0
        %2695 = vmatpush2.msra.mxu0 0.0
        %2696 = vmatprep.subr.mxu0 0.0
        %2697 = vmatpush2.msra.mxu0 0.0
        %2698 = vmatprep.subr.mxu0 0.0
        %2699 = vmatpush2.msra.mxu0 0.0
        %2700 = vmatprep.subr.mxu0 0.0
        %2701 = vmatpush2.msra.mxu0 0.0
        %2702 = vmatprep.subr.mxu0 0.0
        %2703 = vmatpush2.msra.mxu0 0.0
        %2704 = vmatprep.subr.mxu0 0.0
        %2705 = vmatpush2.msra.mxu0 0.0
        %2706 = vmatprep.subr.mxu0 0.0
        %2707 = vmatpush2.msra.mxu0 0.0
        %2708 = vmatprep.subr.mxu0 0.0
        %2709 = vmatpush2.msra.mxu0 0.0
        %2710 = vmatprep.subr.mxu0 0.0
        %2711 = vmatpush2.msra.mxu0 %v2570
        %2712 = vmatprep.subr.mxu0 0.0
        %2713 = vmatpush2.msra.mxu0 %v2569
        %2714 = vmatprep.mubr.f32.mxu0 %v2578
        %2715 = vmatmul.mubr.f32.gmra.mxu0 %v2573
        %v2716 = vpop.f32.mrf.mxu0
        %v2717 = vadd.f32 %v2647, %v2716
        %v2718 = vpop.f32.mrf.mxu0
        %2719 = vdwg.mxu0
        %v2720 = vadd.f32 %v2519, %v2717
        %s2721 = scalar_lea.vmem %s5, 2000
        %v2722 = vld [vmem:[%s2721] sm:$0xff]
        %v2723 = vld [vmem:[%s2721 + $0x8] sm:$0xff]
        %v2724 = vld [vmem:[%s2721 + $0x10] sm:$0xff]
        %v2725 = vld [vmem:[%s2721 + $0x18] sm:$0xff]
        %v2726 = vld [vmem:[%s2721 + $0x20] sm:$0xff]
        %v2727 = vld [vmem:[%s2721 + $0x28] sm:$0xff]
        %v2728 = vld [vmem:[%s2721 + $0x30] sm:$0xff]
        %v2729 = vld [vmem:[%s2721 + $0x38] sm:$0xff]
        %v2730 = vld [vmem:[%s2721 + $0x40] sm:$0xff]
        %v2731 = vld [vmem:[%s2721 + $0x48] sm:$0xff]
        %v2732 = vld [vmem:[%s2721 + $0x50] sm:$0xff]
        %v2733 = vld [vmem:[%s2721 + $0x58] sm:$0xff]
        %v2734 = vld [vmem:[%s2721 + $0x60] sm:$0xff]
        %v2735 = vld [vmem:[%s2721 + $0x68] sm:$0xff]
        %v2736 = vld [vmem:[%s2721 + $0x70] sm:$0xff]
        %v2737 = vld [vmem:[%s2721 + $0x78] sm:$0xff]
        %v2738 = vld [vmem:[%s2721 + $0x80] sm:$0xff]
        %v2739 = vld [vmem:[%s2721 + $0x88] sm:$0xff]
        %v2740 = vld [vmem:[%s2721 + $0x90] sm:$0xff]
        %v2741 = vld [vmem:[%s2721 + $0x98] sm:$0xff]
        %v2742 = vld [vmem:[%s2721 + $0xa0] sm:$0xff]
        %v2743 = vld [vmem:[%s2721 + $0xa8] sm:$0xff]
        %v2744 = vld [vmem:[%s2721 + $0xb0] sm:$0xff]
        %v2745 = vld [vmem:[%s2721 + $0xb8] sm:$0xff]
        %v2746 = vld [vmem:[%s2721 + $0xc0] sm:$0xff]
        %v2747 = vld [vmem:[%s2721 + $0xc8] sm:$0xff]
        %v2748 = vld [vmem:[%s2721 + $0xd0] sm:$0xff]
        %v2749 = vld [vmem:[%s2721 + $0xd8] sm:$0xff]
        %v2750 = vld [vmem:[%s2721 + $0xe0] sm:$0xff]
        %v2751 = vld [vmem:[%s2721 + $0xe8] sm:$0xff]
        %v2752 = vld [vmem:[%s2721 + $0xf0] sm:$0xff]
        %v2753 = vld [vmem:[%s2721 + $0xf8] sm:$0xff]
        %v2754 = vld [vmem:[%s2721 + $0x100] sm:$0xff]
        %v2755 = vld [vmem:[%s2721 + $0x108] sm:$0xff]
        %v2756 = vld [vmem:[%s2721 + $0x110] sm:$0xff]
        %v2757 = vld [vmem:[%s2721 + $0x118] sm:$0xff]
        %v2758 = vld [vmem:[%s2721 + $0x120] sm:$0xff]
        %v2759 = vld [vmem:[%s2721 + $0x128] sm:$0xff]
        %v2760 = vld [vmem:[%s2721 + $0x130] sm:$0xff]
        %v2761 = vld [vmem:[%s2721 + $0x138] sm:$0xff]
        %v2762 = vld [vmem:[%s2721 + $0x140] sm:$0xff]
        %v2763 = vld [vmem:[%s2721 + $0x148] sm:$0xff]
        %v2764 = vld [vmem:[%s2721 + $0x150] sm:$0xff]
        %v2765 = vld [vmem:[%s2721 + $0x158] sm:$0xff]
        %v2766 = vld [vmem:[%s2721 + $0x160] sm:$0xff]
        %v2767 = vld [vmem:[%s2721 + $0x168] sm:$0xff]
        %v2768 = vld [vmem:[%s2721 + $0x170] sm:$0xff]
        %v2769 = vld [vmem:[%s2721 + $0x178] sm:$0xff]
        %v2770 = vld [vmem:[%s2721 + $0x180] sm:$0xff]
        %v2771 = vld [vmem:[%s2721 + $0x188] sm:$0xff]
        %v2772 = vrot.slane %v1714, 5
        %v2773 = vrot.slane %v1715, 5
        %v2774 = vrot.slane %v1716, 5
        %v2775 = vrot.slane %v1717, 5
        %v2779 = vsel %vm1769, %v2775, 0
        %2781 = vmatprep.subr.mxu0 0.0
        %2782 = vmatpush1.msra.mxu0 %v2737
        %2783 = vmatprep.subr.mxu0 0.0
        %2784 = vmatpush1.msra.mxu0 %v2736
        %2785 = vmatprep.subr.mxu0 0.0
        %2786 = vmatpush1.msra.mxu0 %v2735
        %2787 = vmatprep.subr.mxu0 0.0
        %2788 = vmatpush1.msra.mxu0 %v2734
        %2789 = vmatprep.subr.mxu0 0.0
        %2790 = vmatpush1.msra.mxu0 %v2733
        %2791 = vmatprep.subr.mxu0 0.0
        %2792 = vmatpush1.msra.mxu0 %v2732
        %2793 = vmatprep.subr.mxu0 0.0
        %2794 = vmatpush1.msra.mxu0 %v2731
        %2795 = vmatprep.subr.mxu0 0.0
        %2796 = vmatpush1.msra.mxu0 %v2730
        %2797 = vmatprep.subr.mxu0 0.0
        %2798 = vmatpush1.msra.mxu0 %v2729
        %2799 = vmatprep.subr.mxu0 0.0
        %2800 = vmatpush1.msra.mxu0 %v2728
        %2801 = vmatprep.subr.mxu0 0.0
        %2802 = vmatpush1.msra.mxu0 %v2727
        %2803 = vmatprep.subr.mxu0 0.0
        %2804 = vmatpush1.msra.mxu0 %v2726
        %2805 = vmatprep.subr.mxu0 0.0
        %2806 = vmatpush1.msra.mxu0 %v2725
        %2807 = vmatprep.subr.mxu0 0.0
        %2808 = vmatpush1.msra.mxu0 %v2724
        %2809 = vmatprep.subr.mxu0 0.0
        %2810 = vmatpush1.msra.mxu0 %v2723
        %2811 = vmatprep.subr.mxu0 0.0
        %2812 = vmatpush1.msra.mxu0 %v2722
        %2813 = vmatprep.subr.mxu0 0.0
        %2814 = vmatpush2.msra.mxu0 %v2753
        %2815 = vmatprep.subr.mxu0 0.0
        %2816 = vmatpush2.msra.mxu0 %v2752
        %2817 = vmatprep.subr.mxu0 0.0
        %2818 = vmatpush2.msra.mxu0 %v2751
        %2819 = vmatprep.subr.mxu0 0.0
        %2820 = vmatpush2.msra.mxu0 %v2750
        %2821 = vmatprep.subr.mxu0 0.0
        %2822 = vmatpush2.msra.mxu0 %v2749
        %2823 = vmatprep.subr.mxu0 0.0
        %2824 = vmatpush2.msra.mxu0 %v2748
        %2825 = vmatprep.subr.mxu0 0.0
        %2826 = vmatpush2.msra.mxu0 %v2747
        %2827 = vmatprep.subr.mxu0 0.0
        %2828 = vmatpush2.msra.mxu0 %v2746
        %2829 = vmatprep.subr.mxu0 0.0
        %2830 = vmatpush2.msra.mxu0 %v2745
        %2831 = vmatprep.subr.mxu0 0.0
        %2832 = vmatpush2.msra.mxu0 %v2744
        %2833 = vmatprep.subr.mxu0 0.0
        %2834 = vmatpush2.msra.mxu0 %v2743
        %2835 = vmatprep.subr.mxu0 0.0
        %2836 = vmatpush2.msra.mxu0 %v2742
        %2837 = vmatprep.subr.mxu0 0.0
        %2838 = vmatpush2.msra.mxu0 %v2741
        %2839 = vmatprep.subr.mxu0 0.0
        %2840 = vmatpush2.msra.mxu0 %v2740
        %2841 = vmatprep.subr.mxu0 0.0
        %2842 = vmatpush2.msra.mxu0 %v2739
        %2843 = vmatprep.subr.mxu0 0.0
        %2844 = vmatpush2.msra.mxu0 %v2738
        %2845 = vmatprep.mubr.f32.mxu0 %v2773
        %2846 = vmatmul.mubr.f32.gmra.mxu0 %v2772
        %v2847 = vpop.f32.mrf.mxu0
        %v2848 = vadd.f32 0.0, %v2847
        %v2849 = vpop.f32.mrf.mxu0
        %2850 = vdwg.mxu0
        %2851 = vmatprep.subr.mxu0 0.0
        %2852 = vmatpush1.msra.mxu0 %v2769
        %2853 = vmatprep.subr.mxu0 0.0
        %2854 = vmatpush1.msra.mxu0 %v2768
        %2855 = vmatprep.subr.mxu0 0.0
        %2856 = vmatpush1.msra.mxu0 %v2767
        %2857 = vmatprep.subr.mxu0 0.0
        %2858 = vmatpush1.msra.mxu0 %v2766
        %2859 = vmatprep.subr.mxu0 0.0
        %2860 = vmatpush1.msra.mxu0 %v2765
        %2861 = vmatprep.subr.mxu0 0.0
        %2862 = vmatpush1.msra.mxu0 %v2764
        %2863 = vmatprep.subr.mxu0 0.0
        %2864 = vmatpush1.msra.mxu0 %v2763
        %2865 = vmatprep.subr.mxu0 0.0
        %2866 = vmatpush1.msra.mxu0 %v2762
        %2867 = vmatprep.subr.mxu0 0.0
        %2868 = vmatpush1.msra.mxu0 %v2761
        %2869 = vmatprep.subr.mxu0 0.0
        %2870 = vmatpush1.msra.mxu0 %v2760
        %2871 = vmatprep.subr.mxu0 0.0
        %2872 = vmatpush1.msra.mxu0 %v2759
        %2873 = vmatprep.subr.mxu0 0.0
        %2874 = vmatpush1.msra.mxu0 %v2758
        %2875 = vmatprep.subr.mxu0 0.0
        %2876 = vmatpush1.msra.mxu0 %v2757
        %2877 = vmatprep.subr.mxu0 0.0
        %2878 = vmatpush1.msra.mxu0 %v2756
        %2879 = vmatprep.subr.mxu0 0.0
        %2880 = vmatpush1.msra.mxu0 %v2755
        %2881 = vmatprep.subr.mxu0 0.0
        %2882 = vmatpush1.msra.mxu0 %v2754
        %2883 = vmatprep.subr.mxu0 0.0
        %2884 = vmatpush2.msra.mxu0 0.0
        %2885 = vmatprep.subr.mxu0 0.0
        %2886 = vmatpush2.msra.mxu0 0.0
        %2887 = vmatprep.subr.mxu0 0.0
        %2888 = vmatpush2.msra.mxu0 0.0
        %2889 = vmatprep.subr.mxu0 0.0
        %2890 = vmatpush2.msra.mxu0 0.0
        %2891 = vmatprep.subr.mxu0 0.0
        %2892 = vmatpush2.msra.mxu0 0.0
        %2893 = vmatprep.subr.mxu0 0.0
        %2894 = vmatpush2.msra.mxu0 0.0
        %2895 = vmatprep.subr.mxu0 0.0
        %2896 = vmatpush2.msra.mxu0 0.0
        %2897 = vmatprep.subr.mxu0 0.0
        %2898 = vmatpush2.msra.mxu0 0.0
        %2899 = vmatprep.subr.mxu0 0.0
        %2900 = vmatpush2.msra.mxu0 0.0
        %2901 = vmatprep.subr.mxu0 0.0
        %2902 = vmatpush2.msra.mxu0 0.0
        %2903 = vmatprep.subr.mxu0 0.0
        %2904 = vmatpush2.msra.mxu0 0.0
        %2905 = vmatprep.subr.mxu0 0.0
        %2906 = vmatpush2.msra.mxu0 0.0
        %2907 = vmatprep.subr.mxu0 0.0
        %2908 = vmatpush2.msra.mxu0 0.0
        %2909 = vmatprep.subr.mxu0 0.0
        %2910 = vmatpush2.msra.mxu0 0.0
        %2911 = vmatprep.subr.mxu0 0.0
        %2912 = vmatpush2.msra.mxu0 %v2771
        %2913 = vmatprep.subr.mxu0 0.0
        %2914 = vmatpush2.msra.mxu0 %v2770
        %2915 = vmatprep.mubr.f32.mxu0 %v2779
        %2916 = vmatmul.mubr.f32.gmra.mxu0 %v2774
        %v2917 = vpop.f32.mrf.mxu0
        %v2918 = vadd.f32 %v2848, %v2917
        %v2919 = vpop.f32.mrf.mxu0
        %2920 = vdwg.mxu0
        %v2921 = vadd.f32 %v2720, %v2918
        %vm2922 = vcmask 24576
        %2923 = vst.msk [vmem:[%s270] sm:$0x1] %vm2922, %v2921
        %s2924 = sand.u32 %s181, 1
        %s2925 = scalar_lea.sflag [#allocation3], %s2924
        %s2926 = sand.u32 %s181, 1
        %s2927 = scalar_lea.vmem [#allocation2], %s2926
        // Predicated region
        $region49: #{qnetwork_forward.1} parent=47 // pred_check
          %p2928 = pneg %p191
        $region50: #{qnetwork_forward.1} parent=47 // pred_check_branch
          %2930 = sbr.rel (%p2928) target = $region52
        $region51: #{qnetwork_forward.1} parent=47 // pred_region
          %s2932 = ssub.s32 16, 16
          %2933 = vsyncadd %s2925, %s2932
          %s2934 = smul.addr %s21, 16
          %s2935 = scalar_lea.hbm %s7, %s2934
          %s2937 = sshll.u32 %s2927, 4
          %s2938 = int_to_ptr.vmem [resolvable:$true] %s2937
          %2940 = dma.vmem_to_hbm [thread:$0]  %s2938, 16, %s2935, %s2925
        $region52: #{qnetwork_forward.1} parent=47 // pred_fallthru
          _
      $region48: #{qnetwork_forward.1} parent=5 // pred_fallthru
        _
      %p2941 = scmp.le.s32.totalorder 2, %s16
      // Predicated region
      $region53: #{qnetwork_forward.1} parent=5 // pred_check
        %p2942 = pneg %p2941
      $region54: #{qnetwork_forward.1} parent=5 // pred_check_branch
        %2944 = sbr.rel (%p2942) target = $region56
      $region55: #{qnetwork_forward.1} parent=5 // pred_region
        %s2945 = ssub.s32 %s16, 2
        // Predicated region
        $region57: #{qnetwork_forward.1} parent=55 // pred_check
          %p2946 = pneg %p197
        $region58: #{qnetwork_forward.1} parent=55 // pred_check_branch
          %2948 = sbr.rel (%p2946) target = $region60
        $region59: #{qnetwork_forward.1} parent=55 // pred_region
          %s2949 = sand.u32 %s182, 1
          %s2950 = scalar_lea.sflag [#allocation3], %s2949
          %s2951 = sand.u32 %s182, 1
          %s2952 = scalar_lea.vmem [#allocation2], %s2951
          %2953 = dma.done %s2950, 16
        $region60: #{qnetwork_forward.1} parent=55 // pred_fallthru
          _
      $region56: #{qnetwork_forward.1} parent=5 // pred_fallthru
        _
    $region6: #{qnetwork_forward.1} parent=1 // loop_footer
      %s20 = sadd.s32 1, %s16
    $region7: #{qnetwork_forward.1} parent=1 // loop_footer_branch
      %15 = sbr.rel target = $region3
    $region8: #{qnetwork_forward.1} parent=1 // loop_exit
      _
    %2954 = vsyncpa [#allocation3], 1
    %s2955 = scalar_lea.sflag [#allocation3], 1
    %2956 = vsyncpa %s2955, 1

</llo_original>
